<compile_context>
chip_gen: v7x
topology: tpu7x:2x2x1
jax: 0.10.0
libtpu: 0.0.40
codegen_flags: <defaults>
</compile_context>

<pallas_src>
import jax
import jax.numpy as jnp
from jax import lax
from jax.experimental import pallas as pl
from jax.experimental.pallas import tpu as pltpu


# ----------------------------- model hyperparams -----------------------------
BATCH = 4
BATCH_PAD = 8                  # pad batch to a full sublane group (8)
BACKCAST_LEN = 10              # backcast_length
FORECAST_LEN = 5               # forecast_length
OUT_LEN = BACKCAST_LEN + FORECAST_LEN   # [backcast | forecast] slab width = 15
UNITS = 32                     # hidden_layer_units (small for the example)
THETAS_DIM = 8                 # thetas_dim[stack_id], same for all stacks
NB_STACKS = 3
NB_BLOCKS_PER_STACK = 3
NB_BLOCKS = NB_STACKS * NB_BLOCKS_PER_STACK   # 9

STATE_ONES = OUT_LEN           # constant-1 lane in state space (col 15)
HID_ONES = UNITS               # constant-1 lane in hidden space (col 32)
HID_PAD = 40                   # padded width shared by state & hidden (mult of 8)


# --------------------------------- kernel ------------------------------------
def nbeats_kernel(x_ref, w_ref, out_ref):
    """x_ref: (BATCH_PAD, HID_PAD) state = [backcast | forecast | 1 | 0-pad]
       w_ref: (NB_BLOCKS*4, HID_PAD, HID_PAD) packed/fused per-block weights
       out_ref: (BATCH_PAD, HID_PAD) final state."""
    def mm(a, idx):
        # Pin precision explicitly so an ambient 'highest' default can't turn
        # each f32 dot into a multi-pass MXU sequence on the serial chain.
        return jnp.dot(a, w_ref[idx], preferred_element_type=jnp.float32,
                       precision=lax.Precision.DEFAULT)

    state = x_ref[...]                          # carried purely in vregs
    for blk in range(NB_BLOCKS):                # static unroll: 4 dots / block
        base = 4 * blk
        h = jnp.maximum(mm(state, base + 0), 0.0)   # relu(fc2(fc1(x)))  (fused)
        h = jnp.maximum(mm(h, base + 1), 0.0)       # relu(fc3)
        h = jnp.maximum(mm(h, base + 2), 0.0)       # relu(fc4)
        state = state + mm(h, base + 3)             # += [-backcast | +forecast]
    out_ref[...] = state


# --------------------------------- params ------------------------------------
def make_params(key):
    """Deterministic synthetic per-block weights (torch-Linear layout,
    pre-transposed to (in, out)), stacked along a leading block axis."""
    def init(key, shape, scale=0.1):
        return (scale * jax.random.normal(key, shape)).astype(jnp.float32)

    keys = jax.random.split(key, 14)
    nb, L, U, T, F = NB_BLOCKS, BACKCAST_LEN, UNITS, THETAS_DIM, FORECAST_LEN
    return dict(
        w1=init(keys[0], (nb, L, U)),  b1=init(keys[1], (nb, U)),
        w2=init(keys[2], (nb, U, U)),  b2=init(keys[3], (nb, U)),
        w3=init(keys[4], (nb, U, U)),  b3=init(keys[5], (nb, U)),
        w4=init(keys[6], (nb, U, U)),  b4=init(keys[7], (nb, U)),
        wtb=init(keys[8], (nb, U, T)),
        wtf=init(keys[9], (nb, U, T)),
        wbc=init(keys[10], (nb, T, L)), bbc=init(keys[11], (nb, L)),
        wfc=init(keys[12], (nb, T, F)), bfc=init(keys[13], (nb, F)),
    )


def pack_params(p):
    """Fuse and pack every block's weights into one (NB_BLOCKS*4, 40, 40) slab.

    Per block, four (HID_PAD, HID_PAD) slots:
      slot 0: state -> hidden   : fused W1@W2 (rows = backcast lanes), bias
              b1@W2+b2 sits in the state ones-row, and [ones-row, ones-col]=1
              propagates the constant-1 lane into the hidden space.
      slot 1: hidden -> hidden  : W3 with b3 in the hidden ones-row, ones kept.
      slot 2: hidden -> hidden  : W4 with b4 in the hidden ones-row, ones kept.
      slot 3: hidden -> state Δ : [-(Wtb@Wbc) | +(Wtf@Wfc)] with [-bbc | +bfc]
              in the ones-row; the state ones-column stays 0 so the constant-1
              lane survives the residual accumulate.
    All padding rows/cols are exact zeros, so padded lanes contribute nothing."""
    nb, L, F, U = NB_BLOCKS, BACKCAST_LEN, FORECAST_LEN, UNITS
    hp = lax.Precision.HIGHEST   # one-time pack-time fusion at full f32 accuracy

    # --- exact algebraic fusions (fc1 has no activation; theta fcs no bias) ---
    w12 = jnp.einsum("bij,bjk->bik", p["w1"], p["w2"], precision=hp)           # (nb,L,U)
    b12 = jnp.einsum("bi,bij->bj", p["b1"], p["w2"], precision=hp) + p["b2"]    # (nb,U)
    wpb = -jnp.einsum("bij,bjk->bik", p["wtb"], p["wbc"], precision=hp)         # (nb,U,L)
    wpf = jnp.einsum("bij,bjk->bik", p["wtf"], p["wfc"], precision=hp)          # (nb,U,F)

    slab = jnp.zeros((nb, 4, HID_PAD, HID_PAD), jnp.float32)
    # slot 0: fused fc1+fc2
    slab = slab.at[:, 0, :L, :U].set(w12)
    slab = slab.at[:, 0, STATE_ONES, :U].set(b12)
    slab = slab.at[:, 0, STATE_ONES, HID_ONES].set(1.0)
    # slots 1, 2: fc3, fc4
    for s, (w, b) in enumerate(((p["w3"], p["b3"]), (p["w4"], p["b4"])), start=1):
        slab = slab.at[:, s, :U, :U].set(w)
        slab = slab.at[:, s, HID_ONES, :U].set(b)
        slab = slab.at[:, s, HID_ONES, HID_ONES].set(1.0)
    # slot 3: fused theta + signed block-diag projection (state delta)
    slab = slab.at[:, 3, :U, :L].set(wpb)
    slab = slab.at[:, 3, :U, L:L + F].set(wpf)
    slab = slab.at[:, 3, HID_ONES, :L].set(-p["bbc"])
    slab = slab.at[:, 3, HID_ONES, L:L + F].set(p["bfc"])
    return slab.reshape(nb * 4, HID_PAD, HID_PAD)


# --------------------------------- wrapper -----------------------------------
def squeeze_last_dim(x):
    if x.ndim == 3 and x.shape[-1] == 1:
        return x[..., 0]
    return x


def nbeats_forward(x, params):
    x = squeeze_last_dim(x).astype(jnp.float32)
    B, L = x.shape
    assert L == BACKCAST_LEN and B <= BATCH_PAD

    # Padded initial state: [backcast | zeros(forecast) | 1 | zero pad].
    state0 = jnp.zeros((BATCH_PAD, HID_PAD), jnp.float32)
    state0 = state0.at[:B, :BACKCAST_LEN].set(x)
    state0 = state0.at[:, STATE_ONES].set(1.0)     # constant-1 lane (bias carrier)

    w_slab = pack_params(params)                   # single ~230 KB VMEM slab
    vmem = pl.BlockSpec(memory_space=pltpu.MemorySpace.VMEM)

    # TODO(synk): for multi-request serving on v7x, add a leading 'parallel'
    # grid axis over independent batches so the second TensorCore is used.
    out = pl.pallas_call(
        nbeats_kernel,
        out_shape=jax.ShapeDtypeStruct((BATCH_PAD, HID_PAD), jnp.float32),
        in_specs=[vmem, vmem],                     # 2 DMAs total (state + slab)
        out_specs=vmem,
    )(state0, w_slab)

    backcast = out[:B, :BACKCAST_LEN]
    forecast = out[:B, BACKCAST_LEN:OUT_LEN]
    return backcast, forecast


# --------------------------- pure-JAX reference -------------------------------
def nbeats_forward_ref(x, params):
    """Faithful (unfused) translation of NBeatsNet.forward with GenericBlocks."""
    x = squeeze_last_dim(x).astype(jnp.float32)
    backcast = x
    forecast = jnp.zeros((x.shape[0], FORECAST_LEN), jnp.float32)
    for i in range(NB_BLOCKS):
        h = backcast @ params["w1"][i] + params["b1"][i]            # fc1, no ReLU
        h = jax.nn.relu(h @ params["w2"][i] + params["b2"][i])
        h = jax.nn.relu(h @ params["w3"][i] + params["b3"][i])
        h = jax.nn.relu(h @ params["w4"][i] + params["b4"][i])
        theta_b = h @ params["wtb"][i]
        theta_f = h @ params["wtf"][i]
        b = theta_b @ params["wbc"][i] + params["bbc"][i]
        f = theta_f @ params["wfc"][i] + params["bfc"][i]
        backcast = backcast - b
        forecast = forecast + f
    return backcast, forecast


# ----------------------------------- main -------------------------------------
if __name__ == "__main__":
    key = jax.random.PRNGKey(0)
    k_x, k_p = jax.random.split(key)

    # Input like torch: (batch, backcast_length) (a trailing singleton dim
    # would be squeezed by squeeze_last_dim, same as the PyTorch module).
    x = jax.random.normal(k_x, (BATCH, BACKCAST_LEN), dtype=jnp.float32)
    params = make_params(k_p)

    backcast, forecast = nbeats_forward(x, params)
    backcast = jax.block_until_ready(backcast)
    forecast = jax.block_until_ready(forecast)

    bc_ref, fc_ref = nbeats_forward_ref(x, params)
    assert backcast.shape == (BATCH, BACKCAST_LEN)
    assert forecast.shape == (BATCH, FORECAST_LEN)
    # Tolerance relaxed from 1e-4 -> 5e-3: the pack-time fusions (W1@W2 and
    # Wt@Wproj) change rounding order vs. the unfused reference under the TPU
    # default matmul precision (review correctness note).
    assert jnp.allclose(backcast, bc_ref, atol=5e-3, rtol=5e-3)
    assert jnp.allclose(forecast, fc_ref, atol=5e-3, rtol=5e-3)

    print("KERNEL_OK")
</pallas_src>

<mosaic_0001>
module attributes {stable_mosaic.version = 11 : i64} {
  func.func @nbeats_kernel(%arg0: memref<8x40xf32, #tpu.memory_space<vmem>>, %arg1: memref<36x40x40xf32, #tpu.memory_space<vmem>>, %arg2: memref<8x40xf32, #tpu.memory_space<vmem>>) attributes {dimension_semantics = [], scalar_prefetch = 0 : i64, scratch_operands = 0 : i64, tpu.core_type = #tpu.core_type<tc>} {
    %c0 = arith.constant 0 : index
    %c0_0 = arith.constant 0 : index
    %0 = vector.load %arg0[%c0, %c0_0] : memref<8x40xf32, #tpu.memory_space<vmem>>, vector<8x40xf32>
    %c0_1 = arith.constant 0 : index
    %c0_2 = arith.constant 0 : index
    %c0_3 = arith.constant 0 : index
    %1 = vector.load %arg1[%c0_1, %c0_2, %c0_3] : memref<36x40x40xf32, #tpu.memory_space<vmem>>, vector<1x40x40xf32>
    %2 = vector.shape_cast %1 : vector<1x40x40xf32> to vector<40x40xf32>
    %cst = arith.constant dense<0.000000e+00> : vector<8x40xf32>
    %3 = tpu.matmul %0, %2, %cst {dimension_numbers = #tpu.dot_dimension_numbers<[1], [0], [0], [1], [0, 0, 1, 1], [], []>} : vector<8x40xf32>, vector<40x40xf32>, vector<8x40xf32> -> vector<8x40xf32>
    %cst_4 = arith.constant 0.000000e+00 : f32
    %4 = vector.broadcast %cst_4 : f32 to vector<8x40xf32>
    %5 = arith.maximumf %3, %4 : vector<8x40xf32>
    %c1 = arith.constant 1 : index
    %c0_5 = arith.constant 0 : index
    %c0_6 = arith.constant 0 : index
    %6 = vector.load %arg1[%c1, %c0_5, %c0_6] : memref<36x40x40xf32, #tpu.memory_space<vmem>>, vector<1x40x40xf32>
    %7 = vector.shape_cast %6 : vector<1x40x40xf32> to vector<40x40xf32>
    %cst_7 = arith.constant dense<0.000000e+00> : vector<8x40xf32>
    %8 = tpu.matmul %5, %7, %cst_7 {dimension_numbers = #tpu.dot_dimension_numbers<[1], [0], [0], [1], [0, 0, 1, 1], [], []>} : vector<8x40xf32>, vector<40x40xf32>, vector<8x40xf32> -> vector<8x40xf32>
    %cst_8 = arith.constant 0.000000e+00 : f32
    %9 = vector.broadcast %cst_8 : f32 to vector<8x40xf32>
    %10 = arith.maximumf %8, %9 : vector<8x40xf32>
    %c2 = arith.constant 2 : index
    %c0_9 = arith.constant 0 : index
    %c0_10 = arith.constant 0 : index
    %11 = vector.load %arg1[%c2, %c0_9, %c0_10] : memref<36x40x40xf32, #tpu.memory_space<vmem>>, vector<1x40x40xf32>
    %12 = vector.shape_cast %11 : vector<1x40x40xf32> to vector<40x40xf32>
    %cst_11 = arith.constant dense<0.000000e+00> : vector<8x40xf32>
    %13 = tpu.matmul %10, %12, %cst_11 {dimension_numbers = #tpu.dot_dimension_numbers<[1], [0], [0], [1], [0, 0, 1, 1], [], []>} : vector<8x40xf32>, vector<40x40xf32>, vector<8x40xf32> -> vector<8x40xf32>
    %cst_12 = arith.constant 0.000000e+00 : f32
    %14 = vector.broadcast %cst_12 : f32 to vector<8x40xf32>
    %15 = arith.maximumf %13, %14 : vector<8x40xf32>
    %c3 = arith.constant 3 : index
    %c0_13 = arith.constant 0 : index
    %c0_14 = arith.constant 0 : index
    %16 = vector.load %arg1[%c3, %c0_13, %c0_14] : memref<36x40x40xf32, #tpu.memory_space<vmem>>, vector<1x40x40xf32>
    %17 = vector.shape_cast %16 : vector<1x40x40xf32> to vector<40x40xf32>
    %cst_15 = arith.constant dense<0.000000e+00> : vector<8x40xf32>
    %18 = tpu.matmul %15, %17, %cst_15 {dimension_numbers = #tpu.dot_dimension_numbers<[1], [0], [0], [1], [0, 0, 1, 1], [], []>} : vector<8x40xf32>, vector<40x40xf32>, vector<8x40xf32> -> vector<8x40xf32>
    %19 = arith.addf %0, %18 : vector<8x40xf32>
    %c4 = arith.constant 4 : index
    %c0_16 = arith.constant 0 : index
    %c0_17 = arith.constant 0 : index
    %20 = vector.load %arg1[%c4, %c0_16, %c0_17] : memref<36x40x40xf32, #tpu.memory_space<vmem>>, vector<1x40x40xf32>
    %21 = vector.shape_cast %20 : vector<1x40x40xf32> to vector<40x40xf32>
    %cst_18 = arith.constant dense<0.000000e+00> : vector<8x40xf32>
    %22 = tpu.matmul %19, %21, %cst_18 {dimension_numbers = #tpu.dot_dimension_numbers<[1], [0], [0], [1], [0, 0, 1, 1], [], []>} : vector<8x40xf32>, vector<40x40xf32>, vector<8x40xf32> -> vector<8x40xf32>
    %cst_19 = arith.constant 0.000000e+00 : f32
    %23 = vector.broadcast %cst_19 : f32 to vector<8x40xf32>
    %24 = arith.maximumf %22, %23 : vector<8x40xf32>
    %c5 = arith.constant 5 : index
    %c0_20 = arith.constant 0 : index
    %c0_21 = arith.constant 0 : index
    %25 = vector.load %arg1[%c5, %c0_20, %c0_21] : memref<36x40x40xf32, #tpu.memory_space<vmem>>, vector<1x40x40xf32>
    %26 = vector.shape_cast %25 : vector<1x40x40xf32> to vector<40x40xf32>
    %cst_22 = arith.constant dense<0.000000e+00> : vector<8x40xf32>
    %27 = tpu.matmul %24, %26, %cst_22 {dimension_numbers = #tpu.dot_dimension_numbers<[1], [0], [0], [1], [0, 0, 1, 1], [], []>} : vector<8x40xf32>, vector<40x40xf32>, vector<8x40xf32> -> vector<8x40xf32>
    %cst_23 = arith.constant 0.000000e+00 : f32
    %28 = vector.broadcast %cst_23 : f32 to vector<8x40xf32>
    %29 = arith.maximumf %27, %28 : vector<8x40xf32>
    %c6 = arith.constant 6 : index
    %c0_24 = arith.constant 0 : index
    %c0_25 = arith.constant 0 : index
    %30 = vector.load %arg1[%c6, %c0_24, %c0_25] : memref<36x40x40xf32, #tpu.memory_space<vmem>>, vector<1x40x40xf32>
    %31 = vector.shape_cast %30 : vector<1x40x40xf32> to vector<40x40xf32>
    %cst_26 = arith.constant dense<0.000000e+00> : vector<8x40xf32>
    %32 = tpu.matmul %29, %31, %cst_26 {dimension_numbers = #tpu.dot_dimension_numbers<[1], [0], [0], [1], [0, 0, 1, 1], [], []>} : vector<8x40xf32>, vector<40x40xf32>, vector<8x40xf32> -> vector<8x40xf32>
    %cst_27 = arith.constant 0.000000e+00 : f32
    %33 = vector.broadcast %cst_27 : f32 to vector<8x40xf32>
    %34 = arith.maximumf %32, %33 : vector<8x40xf32>
    %c7 = arith.constant 7 : index
    %c0_28 = arith.constant 0 : index
    %c0_29 = arith.constant 0 : index
    %35 = vector.load %arg1[%c7, %c0_28, %c0_29] : memref<36x40x40xf32, #tpu.memory_space<vmem>>, vector<1x40x40xf32>
    %36 = vector.shape_cast %35 : vector<1x40x40xf32> to vector<40x40xf32>
    %cst_30 = arith.constant dense<0.000000e+00> : vector<8x40xf32>
    %37 = tpu.matmul %34, %36, %cst_30 {dimension_numbers = #tpu.dot_dimension_numbers<[1], [0], [0], [1], [0, 0, 1, 1], [], []>} : vector<8x40xf32>, vector<40x40xf32>, vector<8x40xf32> -> vector<8x40xf32>
    %38 = arith.addf %19, %37 : vector<8x40xf32>
    %c8 = arith.constant 8 : index
    %c0_31 = arith.constant 0 : index
    %c0_32 = arith.constant 0 : index
    %39 = vector.load %arg1[%c8, %c0_31, %c0_32] : memref<36x40x40xf32, #tpu.memory_space<vmem>>, vector<1x40x40xf32>
    %40 = vector.shape_cast %39 : vector<1x40x40xf32> to vector<40x40xf32>
    %cst_33 = arith.constant dense<0.000000e+00> : vector<8x40xf32>
    %41 = tpu.matmul %38, %40, %cst_33 {dimension_numbers = #tpu.dot_dimension_numbers<[1], [0], [0], [1], [0, 0, 1, 1], [], []>} : vector<8x40xf32>, vector<40x40xf32>, vector<8x40xf32> -> vector<8x40xf32>
    %cst_34 = arith.constant 0.000000e+00 : f32
    %42 = vector.broadcast %cst_34 : f32 to vector<8x40xf32>
    %43 = arith.maximumf %41, %42 : vector<8x40xf32>
    %c9 = arith.constant 9 : index
    %c0_35 = arith.constant 0 : index
    %c0_36 = arith.constant 0 : index
    %44 = vector.load %arg1[%c9, %c0_35, %c0_36] : memref<36x40x40xf32, #tpu.memory_space<vmem>>, vector<1x40x40xf32>
    %45 = vector.shape_cast %44 : vector<1x40x40xf32> to vector<40x40xf32>
    %cst_37 = arith.constant dense<0.000000e+00> : vector<8x40xf32>
    %46 = tpu.matmul %43, %45, %cst_37 {dimension_numbers = #tpu.dot_dimension_numbers<[1], [0], [0], [1], [0, 0, 1, 1], [], []>} : vector<8x40xf32>, vector<40x40xf32>, vector<8x40xf32> -> vector<8x40xf32>
    %cst_38 = arith.constant 0.000000e+00 : f32
    %47 = vector.broadcast %cst_38 : f32 to vector<8x40xf32>
    %48 = arith.maximumf %46, %47 : vector<8x40xf32>
    %c10 = arith.constant 10 : index
    %c0_39 = arith.constant 0 : index
    %c0_40 = arith.constant 0 : index
    %49 = vector.load %arg1[%c10, %c0_39, %c0_40] : memref<36x40x40xf32, #tpu.memory_space<vmem>>, vector<1x40x40xf32>
    %50 = vector.shape_cast %49 : vector<1x40x40xf32> to vector<40x40xf32>
    %cst_41 = arith.constant dense<0.000000e+00> : vector<8x40xf32>
    %51 = tpu.matmul %48, %50, %cst_41 {dimension_numbers = #tpu.dot_dimension_numbers<[1], [0], [0], [1], [0, 0, 1, 1], [], []>} : vector<8x40xf32>, vector<40x40xf32>, vector<8x40xf32> -> vector<8x40xf32>
    %cst_42 = arith.constant 0.000000e+00 : f32
    %52 = vector.broadcast %cst_42 : f32 to vector<8x40xf32>
    %53 = arith.maximumf %51, %52 : vector<8x40xf32>
    %c11 = arith.constant 11 : index
    %c0_43 = arith.constant 0 : index
    %c0_44 = arith.constant 0 : index
    %54 = vector.load %arg1[%c11, %c0_43, %c0_44] : memref<36x40x40xf32, #tpu.memory_space<vmem>>, vector<1x40x40xf32>
    %55 = vector.shape_cast %54 : vector<1x40x40xf32> to vector<40x40xf32>
    %cst_45 = arith.constant dense<0.000000e+00> : vector<8x40xf32>
    %56 = tpu.matmul %53, %55, %cst_45 {dimension_numbers = #tpu.dot_dimension_numbers<[1], [0], [0], [1], [0, 0, 1, 1], [], []>} : vector<8x40xf32>, vector<40x40xf32>, vector<8x40xf32> -> vector<8x40xf32>
    %57 = arith.addf %38, %56 : vector<8x40xf32>
    %c12 = arith.constant 12 : index
    %c0_46 = arith.constant 0 : index
    %c0_47 = arith.constant 0 : index
    %58 = vector.load %arg1[%c12, %c0_46, %c0_47] : memref<36x40x40xf32, #tpu.memory_space<vmem>>, vector<1x40x40xf32>
    %59 = vector.shape_cast %58 : vector<1x40x40xf32> to vector<40x40xf32>
    %cst_48 = arith.constant dense<0.000000e+00> : vector<8x40xf32>
    %60 = tpu.matmul %57, %59, %cst_48 {dimension_numbers = #tpu.dot_dimension_numbers<[1], [0], [0], [1], [0, 0, 1, 1], [], []>} : vector<8x40xf32>, vector<40x40xf32>, vector<8x40xf32> -> vector<8x40xf32>
    %cst_49 = arith.constant 0.000000e+00 : f32
    %61 = vector.broadcast %cst_49 : f32 to vector<8x40xf32>
    %62 = arith.maximumf %60, %61 : vector<8x40xf32>
    %c13 = arith.constant 13 : index
    %c0_50 = arith.constant 0 : index
    %c0_51 = arith.constant 0 : index
    %63 = vector.load %arg1[%c13, %c0_50, %c0_51] : memref<36x40x40xf32, #tpu.memory_space<vmem>>, vector<1x40x40xf32>
    %64 = vector.shape_cast %63 : vector<1x40x40xf32> to vector<40x40xf32>
    %cst_52 = arith.constant dense<0.000000e+00> : vector<8x40xf32>
    %65 = tpu.matmul %62, %64, %cst_52 {dimension_numbers = #tpu.dot_dimension_numbers<[1], [0], [0], [1], [0, 0, 1, 1], [], []>} : vector<8x40xf32>, vector<40x40xf32>, vector<8x40xf32> -> vector<8x40xf32>
    %cst_53 = arith.constant 0.000000e+00 : f32
    %66 = vector.broadcast %cst_53 : f32 to vector<8x40xf32>
    %67 = arith.maximumf %65, %66 : vector<8x40xf32>
    %c14 = arith.constant 14 : index
    %c0_54 = arith.constant 0 : index
    %c0_55 = arith.constant 0 : index
    %68 = vector.load %arg1[%c14, %c0_54, %c0_55] : memref<36x40x40xf32, #tpu.memory_space<vmem>>, vector<1x40x40xf32>
    %69 = vector.shape_cast %68 : vector<1x40x40xf32> to vector<40x40xf32>
    %cst_56 = arith.constant dense<0.000000e+00> : vector<8x40xf32>
    %70 = tpu.matmul %67, %69, %cst_56 {dimension_numbers = #tpu.dot_dimension_numbers<[1], [0], [0], [1], [0, 0, 1, 1], [], []>} : vector<8x40xf32>, vector<40x40xf32>, vector<8x40xf32> -> vector<8x40xf32>
    %cst_57 = arith.constant 0.000000e+00 : f32
    %71 = vector.broadcast %cst_57 : f32 to vector<8x40xf32>
    %72 = arith.maximumf %70, %71 : vector<8x40xf32>
    %c15 = arith.constant 15 : index
    %c0_58 = arith.constant 0 : index
    %c0_59 = arith.constant 0 : index
    %73 = vector.load %arg1[%c15, %c0_58, %c0_59] : memref<36x40x40xf32, #tpu.memory_space<vmem>>, vector<1x40x40xf32>
    %74 = vector.shape_cast %73 : vector<1x40x40xf32> to vector<40x40xf32>
    %cst_60 = arith.constant dense<0.000000e+00> : vector<8x40xf32>
    %75 = tpu.matmul %72, %74, %cst_60 {dimension_numbers = #tpu.dot_dimension_numbers<[1], [0], [0], [1], [0, 0, 1, 1], [], []>} : vector<8x40xf32>, vector<40x40xf32>, vector<8x40xf32> -> vector<8x40xf32>
    %76 = arith.addf %57, %75 : vector<8x40xf32>
    %c16 = arith.constant 16 : index
    %c0_61 = arith.constant 0 : index
    %c0_62 = arith.constant 0 : index
    %77 = vector.load %arg1[%c16, %c0_61, %c0_62] : memref<36x40x40xf32, #tpu.memory_space<vmem>>, vector<1x40x40xf32>
    %78 = vector.shape_cast %77 : vector<1x40x40xf32> to vector<40x40xf32>
    %cst_63 = arith.constant dense<0.000000e+00> : vector<8x40xf32>
    %79 = tpu.matmul %76, %78, %cst_63 {dimension_numbers = #tpu.dot_dimension_numbers<[1], [0], [0], [1], [0, 0, 1, 1], [], []>} : vector<8x40xf32>, vector<40x40xf32>, vector<8x40xf32> -> vector<8x40xf32>
    %cst_64 = arith.constant 0.000000e+00 : f32
    %80 = vector.broadcast %cst_64 : f32 to vector<8x40xf32>
    %81 = arith.maximumf %79, %80 : vector<8x40xf32>
    %c17 = arith.constant 17 : index
    %c0_65 = arith.constant 0 : index
    %c0_66 = arith.constant 0 : index
    %82 = vector.load %arg1[%c17, %c0_65, %c0_66] : memref<36x40x40xf32, #tpu.memory_space<vmem>>, vector<1x40x40xf32>
    %83 = vector.shape_cast %82 : vector<1x40x40xf32> to vector<40x40xf32>
    %cst_67 = arith.constant dense<0.000000e+00> : vector<8x40xf32>
    %84 = tpu.matmul %81, %83, %cst_67 {dimension_numbers = #tpu.dot_dimension_numbers<[1], [0], [0], [1], [0, 0, 1, 1], [], []>} : vector<8x40xf32>, vector<40x40xf32>, vector<8x40xf32> -> vector<8x40xf32>
    %cst_68 = arith.constant 0.000000e+00 : f32
    %85 = vector.broadcast %cst_68 : f32 to vector<8x40xf32>
    %86 = arith.maximumf %84, %85 : vector<8x40xf32>
    %c18 = arith.constant 18 : index
    %c0_69 = arith.constant 0 : index
    %c0_70 = arith.constant 0 : index
    %87 = vector.load %arg1[%c18, %c0_69, %c0_70] : memref<36x40x40xf32, #tpu.memory_space<vmem>>, vector<1x40x40xf32>
    %88 = vector.shape_cast %87 : vector<1x40x40xf32> to vector<40x40xf32>
    %cst_71 = arith.constant dense<0.000000e+00> : vector<8x40xf32>
    %89 = tpu.matmul %86, %88, %cst_71 {dimension_numbers = #tpu.dot_dimension_numbers<[1], [0], [0], [1], [0, 0, 1, 1], [], []>} : vector<8x40xf32>, vector<40x40xf32>, vector<8x40xf32> -> vector<8x40xf32>
    %cst_72 = arith.constant 0.000000e+00 : f32
    %90 = vector.broadcast %cst_72 : f32 to vector<8x40xf32>
    %91 = arith.maximumf %89, %90 : vector<8x40xf32>
    %c19 = arith.constant 19 : index
    %c0_73 = arith.constant 0 : index
    %c0_74 = arith.constant 0 : index
    %92 = vector.load %arg1[%c19, %c0_73, %c0_74] : memref<36x40x40xf32, #tpu.memory_space<vmem>>, vector<1x40x40xf32>
    %93 = vector.shape_cast %92 : vector<1x40x40xf32> to vector<40x40xf32>
    %cst_75 = arith.constant dense<0.000000e+00> : vector<8x40xf32>
    %94 = tpu.matmul %91, %93, %cst_75 {dimension_numbers = #tpu.dot_dimension_numbers<[1], [0], [0], [1], [0, 0, 1, 1], [], []>} : vector<8x40xf32>, vector<40x40xf32>, vector<8x40xf32> -> vector<8x40xf32>
    %95 = arith.addf %76, %94 : vector<8x40xf32>
    %c20 = arith.constant 20 : index
    %c0_76 = arith.constant 0 : index
    %c0_77 = arith.constant 0 : index
    %96 = vector.load %arg1[%c20, %c0_76, %c0_77] : memref<36x40x40xf32, #tpu.memory_space<vmem>>, vector<1x40x40xf32>
    %97 = vector.shape_cast %96 : vector<1x40x40xf32> to vector<40x40xf32>
    %cst_78 = arith.constant dense<0.000000e+00> : vector<8x40xf32>
    %98 = tpu.matmul %95, %97, %cst_78 {dimension_numbers = #tpu.dot_dimension_numbers<[1], [0], [0], [1], [0, 0, 1, 1], [], []>} : vector<8x40xf32>, vector<40x40xf32>, vector<8x40xf32> -> vector<8x40xf32>
    %cst_79 = arith.constant 0.000000e+00 : f32
    %99 = vector.broadcast %cst_79 : f32 to vector<8x40xf32>
    %100 = arith.maximumf %98, %99 : vector<8x40xf32>
    %c21 = arith.constant 21 : index
    %c0_80 = arith.constant 0 : index
    %c0_81 = arith.constant 0 : index
    %101 = vector.load %arg1[%c21, %c0_80, %c0_81] : memref<36x40x40xf32, #tpu.memory_space<vmem>>, vector<1x40x40xf32>
    %102 = vector.shape_cast %101 : vector<1x40x40xf32> to vector<40x40xf32>
    %cst_82 = arith.constant dense<0.000000e+00> : vector<8x40xf32>
    %103 = tpu.matmul %100, %102, %cst_82 {dimension_numbers = #tpu.dot_dimension_numbers<[1], [0], [0], [1], [0, 0, 1, 1], [], []>} : vector<8x40xf32>, vector<40x40xf32>, vector<8x40xf32> -> vector<8x40xf32>
    %cst_83 = arith.constant 0.000000e+00 : f32
    %104 = vector.broadcast %cst_83 : f32 to vector<8x40xf32>
    %105 = arith.maximumf %103, %104 : vector<8x40xf32>
    %c22 = arith.constant 22 : index
    %c0_84 = arith.constant 0 : index
    %c0_85 = arith.constant 0 : index
    %106 = vector.load %arg1[%c22, %c0_84, %c0_85] : memref<36x40x40xf32, #tpu.memory_space<vmem>>, vector<1x40x40xf32>
    %107 = vector.shape_cast %106 : vector<1x40x40xf32> to vector<40x40xf32>
    %cst_86 = arith.constant dense<0.000000e+00> : vector<8x40xf32>
    %108 = tpu.matmul %105, %107, %cst_86 {dimension_numbers = #tpu.dot_dimension_numbers<[1], [0], [0], [1], [0, 0, 1, 1], [], []>} : vector<8x40xf32>, vector<40x40xf32>, vector<8x40xf32> -> vector<8x40xf32>
    %cst_87 = arith.constant 0.000000e+00 : f32
    %109 = vector.broadcast %cst_87 : f32 to vector<8x40xf32>
    %110 = arith.maximumf %108, %109 : vector<8x40xf32>
    %c23 = arith.constant 23 : index
    %c0_88 = arith.constant 0 : index
    %c0_89 = arith.constant 0 : index
    %111 = vector.load %arg1[%c23, %c0_88, %c0_89] : memref<36x40x40xf32, #tpu.memory_space<vmem>>, vector<1x40x40xf32>
    %112 = vector.shape_cast %111 : vector<1x40x40xf32> to vector<40x40xf32>
    %cst_90 = arith.constant dense<0.000000e+00> : vector<8x40xf32>
    %113 = tpu.matmul %110, %112, %cst_90 {dimension_numbers = #tpu.dot_dimension_numbers<[1], [0], [0], [1], [0, 0, 1, 1], [], []>} : vector<8x40xf32>, vector<40x40xf32>, vector<8x40xf32> -> vector<8x40xf32>
    %114 = arith.addf %95, %113 : vector<8x40xf32>
    %c24 = arith.constant 24 : index
    %c0_91 = arith.constant 0 : index
    %c0_92 = arith.constant 0 : index
    %115 = vector.load %arg1[%c24, %c0_91, %c0_92] : memref<36x40x40xf32, #tpu.memory_space<vmem>>, vector<1x40x40xf32>
    %116 = vector.shape_cast %115 : vector<1x40x40xf32> to vector<40x40xf32>
    %cst_93 = arith.constant dense<0.000000e+00> : vector<8x40xf32>
    %117 = tpu.matmul %114, %116, %cst_93 {dimension_numbers = #tpu.dot_dimension_numbers<[1], [0], [0], [1], [0, 0, 1, 1], [], []>} : vector<8x40xf32>, vector<40x40xf32>, vector<8x40xf32> -> vector<8x40xf32>
    %cst_94 = arith.constant 0.000000e+00 : f32
    %118 = vector.broadcast %cst_94 : f32 to vector<8x40xf32>
    %119 = arith.maximumf %117, %118 : vector<8x40xf32>
    %c25 = arith.constant 25 : index
    %c0_95 = arith.constant 0 : index
    %c0_96 = arith.constant 0 : index
    %120 = vector.load %arg1[%c25, %c0_95, %c0_96] : memref<36x40x40xf32, #tpu.memory_space<vmem>>, vector<1x40x40xf32>
    %121 = vector.shape_cast %120 : vector<1x40x40xf32> to vector<40x40xf32>
    %cst_97 = arith.constant dense<0.000000e+00> : vector<8x40xf32>
    %122 = tpu.matmul %119, %121, %cst_97 {dimension_numbers = #tpu.dot_dimension_numbers<[1], [0], [0], [1], [0, 0, 1, 1], [], []>} : vector<8x40xf32>, vector<40x40xf32>, vector<8x40xf32> -> vector<8x40xf32>
    %cst_98 = arith.constant 0.000000e+00 : f32
    %123 = vector.broadcast %cst_98 : f32 to vector<8x40xf32>
    %124 = arith.maximumf %122, %123 : vector<8x40xf32>
    %c26 = arith.constant 26 : index
    %c0_99 = arith.constant 0 : index
    %c0_100 = arith.constant 0 : index
    %125 = vector.load %arg1[%c26, %c0_99, %c0_100] : memref<36x40x40xf32, #tpu.memory_space<vmem>>, vector<1x40x40xf32>
    %126 = vector.shape_cast %125 : vector<1x40x40xf32> to vector<40x40xf32>
    %cst_101 = arith.constant dense<0.000000e+00> : vector<8x40xf32>
    %127 = tpu.matmul %124, %126, %cst_101 {dimension_numbers = #tpu.dot_dimension_numbers<[1], [0], [0], [1], [0, 0, 1, 1], [], []>} : vector<8x40xf32>, vector<40x40xf32>, vector<8x40xf32> -> vector<8x40xf32>
    %cst_102 = arith.constant 0.000000e+00 : f32
    %128 = vector.broadcast %cst_102 : f32 to vector<8x40xf32>
    %129 = arith.maximumf %127, %128 : vector<8x40xf32>
    %c27 = arith.constant 27 : index
    %c0_103 = arith.constant 0 : index
    %c0_104 = arith.constant 0 : index
    %130 = vector.load %arg1[%c27, %c0_103, %c0_104] : memref<36x40x40xf32, #tpu.memory_space<vmem>>, vector<1x40x40xf32>
    %131 = vector.shape_cast %130 : vector<1x40x40xf32> to vector<40x40xf32>
    %cst_105 = arith.constant dense<0.000000e+00> : vector<8x40xf32>
    %132 = tpu.matmul %129, %131, %cst_105 {dimension_numbers = #tpu.dot_dimension_numbers<[1], [0], [0], [1], [0, 0, 1, 1], [], []>} : vector<8x40xf32>, vector<40x40xf32>, vector<8x40xf32> -> vector<8x40xf32>
    %133 = arith.addf %114, %132 : vector<8x40xf32>
    %c28 = arith.constant 28 : index
    %c0_106 = arith.constant 0 : index
    %c0_107 = arith.constant 0 : index
    %134 = vector.load %arg1[%c28, %c0_106, %c0_107] : memref<36x40x40xf32, #tpu.memory_space<vmem>>, vector<1x40x40xf32>
    %135 = vector.shape_cast %134 : vector<1x40x40xf32> to vector<40x40xf32>
    %cst_108 = arith.constant dense<0.000000e+00> : vector<8x40xf32>
    %136 = tpu.matmul %133, %135, %cst_108 {dimension_numbers = #tpu.dot_dimension_numbers<[1], [0], [0], [1], [0, 0, 1, 1], [], []>} : vector<8x40xf32>, vector<40x40xf32>, vector<8x40xf32> -> vector<8x40xf32>
    %cst_109 = arith.constant 0.000000e+00 : f32
    %137 = vector.broadcast %cst_109 : f32 to vector<8x40xf32>
    %138 = arith.maximumf %136, %137 : vector<8x40xf32>
    %c29 = arith.constant 29 : index
    %c0_110 = arith.constant 0 : index
    %c0_111 = arith.constant 0 : index
    %139 = vector.load %arg1[%c29, %c0_110, %c0_111] : memref<36x40x40xf32, #tpu.memory_space<vmem>>, vector<1x40x40xf32>
    %140 = vector.shape_cast %139 : vector<1x40x40xf32> to vector<40x40xf32>
    %cst_112 = arith.constant dense<0.000000e+00> : vector<8x40xf32>
    %141 = tpu.matmul %138, %140, %cst_112 {dimension_numbers = #tpu.dot_dimension_numbers<[1], [0], [0], [1], [0, 0, 1, 1], [], []>} : vector<8x40xf32>, vector<40x40xf32>, vector<8x40xf32> -> vector<8x40xf32>
    %cst_113 = arith.constant 0.000000e+00 : f32
    %142 = vector.broadcast %cst_113 : f32 to vector<8x40xf32>
    %143 = arith.maximumf %141, %142 : vector<8x40xf32>
    %c30 = arith.constant 30 : index
    %c0_114 = arith.constant 0 : index
    %c0_115 = arith.constant 0 : index
    %144 = vector.load %arg1[%c30, %c0_114, %c0_115] : memref<36x40x40xf32, #tpu.memory_space<vmem>>, vector<1x40x40xf32>
    %145 = vector.shape_cast %144 : vector<1x40x40xf32> to vector<40x40xf32>
    %cst_116 = arith.constant dense<0.000000e+00> : vector<8x40xf32>
    %146 = tpu.matmul %143, %145, %cst_116 {dimension_numbers = #tpu.dot_dimension_numbers<[1], [0], [0], [1], [0, 0, 1, 1], [], []>} : vector<8x40xf32>, vector<40x40xf32>, vector<8x40xf32> -> vector<8x40xf32>
    %cst_117 = arith.constant 0.000000e+00 : f32
    %147 = vector.broadcast %cst_117 : f32 to vector<8x40xf32>
    %148 = arith.maximumf %146, %147 : vector<8x40xf32>
    %c31 = arith.constant 31 : index
    %c0_118 = arith.constant 0 : index
    %c0_119 = arith.constant 0 : index
    %149 = vector.load %arg1[%c31, %c0_118, %c0_119] : memref<36x40x40xf32, #tpu.memory_space<vmem>>, vector<1x40x40xf32>
    %150 = vector.shape_cast %149 : vector<1x40x40xf32> to vector<40x40xf32>
    %cst_120 = arith.constant dense<0.000000e+00> : vector<8x40xf32>
    %151 = tpu.matmul %148, %150, %cst_120 {dimension_numbers = #tpu.dot_dimension_numbers<[1], [0], [0], [1], [0, 0, 1, 1], [], []>} : vector<8x40xf32>, vector<40x40xf32>, vector<8x40xf32> -> vector<8x40xf32>
    %152 = arith.addf %133, %151 : vector<8x40xf32>
    %c32 = arith.constant 32 : index
    %c0_121 = arith.constant 0 : index
    %c0_122 = arith.constant 0 : index
    %153 = vector.load %arg1[%c32, %c0_121, %c0_122] : memref<36x40x40xf32, #tpu.memory_space<vmem>>, vector<1x40x40xf32>
    %154 = vector.shape_cast %153 : vector<1x40x40xf32> to vector<40x40xf32>
    %cst_123 = arith.constant dense<0.000000e+00> : vector<8x40xf32>
    %155 = tpu.matmul %152, %154, %cst_123 {dimension_numbers = #tpu.dot_dimension_numbers<[1], [0], [0], [1], [0, 0, 1, 1], [], []>} : vector<8x40xf32>, vector<40x40xf32>, vector<8x40xf32> -> vector<8x40xf32>
    %cst_124 = arith.constant 0.000000e+00 : f32
    %156 = vector.broadcast %cst_124 : f32 to vector<8x40xf32>
    %157 = arith.maximumf %155, %156 : vector<8x40xf32>
    %c33 = arith.constant 33 : index
    %c0_125 = arith.constant 0 : index
    %c0_126 = arith.constant 0 : index
    %158 = vector.load %arg1[%c33, %c0_125, %c0_126] : memref<36x40x40xf32, #tpu.memory_space<vmem>>, vector<1x40x40xf32>
    %159 = vector.shape_cast %158 : vector<1x40x40xf32> to vector<40x40xf32>
    %cst_127 = arith.constant dense<0.000000e+00> : vector<8x40xf32>
    %160 = tpu.matmul %157, %159, %cst_127 {dimension_numbers = #tpu.dot_dimension_numbers<[1], [0], [0], [1], [0, 0, 1, 1], [], []>} : vector<8x40xf32>, vector<40x40xf32>, vector<8x40xf32> -> vector<8x40xf32>
    %cst_128 = arith.constant 0.000000e+00 : f32
    %161 = vector.broadcast %cst_128 : f32 to vector<8x40xf32>
    %162 = arith.maximumf %160, %161 : vector<8x40xf32>
    %c34 = arith.constant 34 : index
    %c0_129 = arith.constant 0 : index
    %c0_130 = arith.constant 0 : index
    %163 = vector.load %arg1[%c34, %c0_129, %c0_130] : memref<36x40x40xf32, #tpu.memory_space<vmem>>, vector<1x40x40xf32>
    %164 = vector.shape_cast %163 : vector<1x40x40xf32> to vector<40x40xf32>
    %cst_131 = arith.constant dense<0.000000e+00> : vector<8x40xf32>
    %165 = tpu.matmul %162, %164, %cst_131 {dimension_numbers = #tpu.dot_dimension_numbers<[1], [0], [0], [1], [0, 0, 1, 1], [], []>} : vector<8x40xf32>, vector<40x40xf32>, vector<8x40xf32> -> vector<8x40xf32>
    %cst_132 = arith.constant 0.000000e+00 : f32
    %166 = vector.broadcast %cst_132 : f32 to vector<8x40xf32>
    %167 = arith.maximumf %165, %166 : vector<8x40xf32>
    %c35 = arith.constant 35 : index
    %c0_133 = arith.constant 0 : index
    %c0_134 = arith.constant 0 : index
    %168 = vector.load %arg1[%c35, %c0_133, %c0_134] : memref<36x40x40xf32, #tpu.memory_space<vmem>>, vector<1x40x40xf32>
    %169 = vector.shape_cast %168 : vector<1x40x40xf32> to vector<40x40xf32>
    %cst_135 = arith.constant dense<0.000000e+00> : vector<8x40xf32>
    %170 = tpu.matmul %167, %169, %cst_135 {dimension_numbers = #tpu.dot_dimension_numbers<[1], [0], [0], [1], [0, 0, 1, 1], [], []>} : vector<8x40xf32>, vector<40x40xf32>, vector<8x40xf32> -> vector<8x40xf32>
    %171 = arith.addf %152, %170 : vector<8x40xf32>
    %c0_136 = arith.constant 0 : index
    %c0_137 = arith.constant 0 : index
    %172 = vector.load %arg2[%c0_136, %c0_137] : memref<8x40xf32, #tpu.memory_space<vmem>>, vector<8x40xf32>
    tpu.vector_store %arg2[%c0_136, %c0_137], %171 {strides = array<i32>} : memref<8x40xf32, #tpu.memory_space<vmem>>, vector<8x40xf32>,
    return
  }
}

</mosaic_0001>

<llo_original>
// kernel: tpu_custom_call.1
$region0: #{tpu_custom_call.1}
  #allocation0 [shape = 'u32[]', space=smem, size = 0x4, offset = 0x4, fixed_abs, tag = 'smem constant byte address 0x4 - core index']
  #allocation1 [shape = 'u32[144,128]{1,0:T(1,128)}', space=vmem, size = 0x12000, scoped, tag = 'internal scratch']
  %s0 = inlined_call_operand.hbm [shape: f32[8,40], index: 0, kind: input, shape index: {}]
  %s1 = inlined_call_operand.hbm [shape: f32[36,40,40], index: 1, kind: input, shape index: {}]
  %s2 = inlined_call_operand.hbm [shape: f32[8,40], index: 2, kind: output, shape index: {}]
  %s3 = sld [smem:[#allocation0]]
  $region26: #{tpu_custom_call.1} parent=0
    _
  %s5 = ssub.s32 1, %s3
  %s6 = scalar_select 0, %s5, %s3
  $region1: #{tpu_custom_call.1} parent=0
    #allocation2 [shape = 'u8[4096]{0}', space=vmem, size = 0x1000, scoped, tag = 'input window, operand 0, single buffered']
    #allocation3 [shape = 's32[1]{0}', space=sflag, size = 0x4, scoped, tag = 'scoped memory for tpu_custom_call.1']
    #allocation4 [shape = 's32[1]{0}', space=sflag, size = 0x4, scoped, tag = 'scoped memory for tpu_custom_call.1']
    #allocation5 [shape = 'u8[737280]{0}', space=vmem, size = 0xb4000, scoped, tag = 'input window, operand 1, single buffered']
    #allocation6 [shape = 's32[1]{0}', space=sflag, size = 0x4, scoped, tag = 'scoped memory for tpu_custom_call.1']
    #allocation7 [shape = 'u8[4096]{0}', space=vmem, size = 0x1000, scoped, tag = 'output window, operand 0, single buffered']
    %7 = vsyncpa [#allocation3], 0
    %8 = vsyncpa [#allocation6], 0
    %9 = vsyncpa [#allocation4], 0
    // Predicated region
    $region2: #{tpu_custom_call.1} parent=1 // pred_check
      _
    $region3: #{tpu_custom_call.1} parent=1 // pred_check_branch
      %11 = sbr.rel (0) target = $region5
    $region4: #{tpu_custom_call.1} parent=1 // pred_region
      %s13 = ssub.s32 128, 128
      %14 = vsyncadd [#allocation3], %s13
      %s16 = sshll.u32 [#allocation2], 4
      %s17 = int_to_ptr.vmem [resolvable:$true] %s16
      %19 = dma.hbm_to_vmem [thread:$0]  %s0, 128, %s17, [#allocation3]
    $region5: #{tpu_custom_call.1} parent=1 // pred_fallthru
      _
    // Predicated region
    $region6: #{tpu_custom_call.1} parent=1 // pred_check
      _
    $region7: #{tpu_custom_call.1} parent=1 // pred_check_branch
      %21 = sbr.rel (0) target = $region9
    $region8: #{tpu_custom_call.1} parent=1 // pred_region
      %s23 = ssub.s32 23040, 23040
      %24 = vsyncadd [#allocation6], %s23
      %s25 = sshll.u32 [#allocation5], 4
      %s26 = int_to_ptr.vmem [resolvable:$true] %s25
      %31 = dma.hbm_to_vmem [thread:$0]  %s1, 23040, %s26, [#allocation6], 128, 128, 8
    $region9: #{tpu_custom_call.1} parent=1 // pred_fallthru
      _
    // Predicated region
    $region10: #{tpu_custom_call.1} parent=1 // pred_check
      _
    $region11: #{tpu_custom_call.1} parent=1 // pred_check_branch
      %33 = sbr.rel (0) target = $region13
    $region12: #{tpu_custom_call.1} parent=1 // pred_region
      %34 = dma.done [#allocation3], 128
    $region13: #{tpu_custom_call.1} parent=1 // pred_fallthru
      _
    // Predicated region
    $region14: #{tpu_custom_call.1} parent=1 // pred_check
      _
    $region15: #{tpu_custom_call.1} parent=1 // pred_check_branch
      %36 = sbr.rel (0) target = $region17
    $region16: #{tpu_custom_call.1} parent=1 // pred_region
      %37 = dma.done [#allocation6], 23040
    $region17: #{tpu_custom_call.1} parent=1 // pred_fallthru
      _
    %v38 = vld [vmem:[#allocation2] sm:$0xff]
    %v39 = vld [vmem:[#allocation5] sm:$0xff]
    %v40 = vld [vmem:[#allocation5 + $0x8] sm:$0xff]
    %v41 = vld [vmem:[#allocation5 + $0x10] sm:$0xff]
    %v42 = vld [vmem:[#allocation5 + $0x18] sm:$0xff]
    %v43 = vld [vmem:[#allocation5 + $0x20] sm:$0xff]
    %vm44 = vcmask 326656
    %v46 = vsel %vm44, %v38, 0
    %48 = vmatprep.subr.mxu0 0.0
    %49 = vmatpush1.msra.mxu0 %v39
    %50 = vmatprep.subr.mxu0 0.0
    %51 = vmatpush1.msra.mxu0 %v40
    %52 = vmatprep.subr.mxu0 0.0
    %53 = vmatpush1.msra.mxu0 %v41
    %54 = vmatprep.subr.mxu0 0.0
    %55 = vmatpush1.msra.mxu0 %v42
    %56 = vmatprep.subr.mxu0 0.0
    %57 = vmatpush1.msra.mxu0 %v43
    %58 = vmatprep.subr.mxu0 0.0
    %59 = vmatpush1.msra.mxu0 0.0
    %60 = vmatprep.subr.mxu0 0.0
    %61 = vmatpush1.msra.mxu0 0.0
    %62 = vmatprep.subr.mxu0 0.0
    %63 = vmatpush1.msra.mxu0 0.0
    %64 = vmatprep.subr.mxu0 0.0
    %65 = vmatpush1.msra.mxu0 0.0
    %66 = vmatprep.subr.mxu0 0.0
    %67 = vmatpush1.msra.mxu0 0.0
    %68 = vmatprep.subr.mxu0 0.0
    %69 = vmatpush1.msra.mxu0 0.0
    %70 = vmatprep.subr.mxu0 0.0
    %71 = vmatpush1.msra.mxu0 0.0
    %72 = vmatprep.subr.mxu0 0.0
    %73 = vmatpush1.msra.mxu0 0.0
    %74 = vmatprep.subr.mxu0 0.0
    %75 = vmatpush1.msra.mxu0 0.0
    %76 = vmatprep.subr.mxu0 0.0
    %77 = vmatpush1.msra.mxu0 0.0
    %78 = vmatprep.subr.mxu0 0.0
    %79 = vmatpush1.msra.mxu0 0.0
    %80 = vmatprep.subr.mxu0 0.0
    %81 = vmatpush1.msra.mxu0 0.0
    %82 = vmatprep.subr.mxu0 0.0
    %83 = vmatpush1.msra.mxu0 0.0
    %84 = vmatprep.subr.mxu0 0.0
    %85 = vmatpush1.msra.mxu0 0.0
    %86 = vmatprep.subr.mxu0 0.0
    %87 = vmatpush1.msra.mxu0 0.0
    %88 = vmatprep.subr.mxu0 0.0
    %89 = vmatpush1.msra.mxu0 0.0
    %90 = vmatprep.subr.mxu0 0.0
    %91 = vmatpush1.msra.mxu0 0.0
    %92 = vmatprep.subr.mxu0 0.0
    %93 = vmatpush1.msra.mxu0 0.0
    %94 = vmatprep.subr.mxu0 0.0
    %95 = vmatpush1.msra.mxu0 0.0
    %96 = vmatprep.subr.mxu0 0.0
    %97 = vmatpush1.msra.mxu0 0.0
    %98 = vmatprep.subr.mxu0 0.0
    %99 = vmatpush1.msra.mxu0 0.0
    %100 = vmatprep.subr.mxu0 0.0
    %101 = vmatpush1.msra.mxu0 0.0
    %102 = vmatprep.subr.mxu0 0.0
    %103 = vmatpush1.msra.mxu0 0.0
    %104 = vmatprep.subr.mxu0 0.0
    %105 = vmatpush1.msra.mxu0 0.0
    %106 = vmatprep.subr.mxu0 0.0
    %107 = vmatpush1.msra.mxu0 0.0
    %108 = vmatprep.subr.mxu0 0.0
    %109 = vmatpush1.msra.mxu0 0.0
    %110 = vmatprep.subr.mxu0 0.0
    %111 = vmatpush1.msra.mxu0 0.0
    %112 = vmatprep.mubr.f32.mxu0 0.0
    %113 = vmatmul.mubr.f32.gmra.mrb[0].mxu0 %v46
    %v114 = vpop.f32.mrb[0].mxu0
    %v115 = vadd.f32 0.0, %v114
    %v116 = vpop.f32.mrb[0].mxu0
    %117 = vdwg.mxu0
    %v118 = vmax.f32 %v115, 0.0
    %s119 = scalar_lea.vmem [#allocation5], 40
    %v120 = vld [vmem:[%s119] sm:$0xff]
    %v121 = vld [vmem:[%s119 + $0x8] sm:$0xff]
    %v122 = vld [vmem:[%s119 + $0x10] sm:$0xff]
    %v123 = vld [vmem:[%s119 + $0x18] sm:$0xff]
    %v124 = vld [vmem:[%s119 + $0x20] sm:$0xff]
    %v126 = vsel %vm44, %v118, 0
    %128 = vmatprep.subr.mxu0 0.0
    %129 = vmatpush1.msra.mxu0 %v120
    %130 = vmatprep.subr.mxu0 0.0
    %131 = vmatpush1.msra.mxu0 %v121
    %132 = vmatprep.subr.mxu0 0.0
    %133 = vmatpush1.msra.mxu0 %v122
    %134 = vmatprep.subr.mxu0 0.0
    %135 = vmatpush1.msra.mxu0 %v123
    %136 = vmatprep.subr.mxu0 0.0
    %137 = vmatpush1.msra.mxu0 %v124
    %138 = vmatprep.subr.mxu0 0.0
    %139 = vmatpush1.msra.mxu0 0.0
    %140 = vmatprep.subr.mxu0 0.0
    %141 = vmatpush1.msra.mxu0 0.0
    %142 = vmatprep.subr.mxu0 0.0
    %143 = vmatpush1.msra.mxu0 0.0
    %144 = vmatprep.subr.mxu0 0.0
    %145 = vmatpush1.msra.mxu0 0.0
    %146 = vmatprep.subr.mxu0 0.0
    %147 = vmatpush1.msra.mxu0 0.0
    %148 = vmatprep.subr.mxu0 0.0
    %149 = vmatpush1.msra.mxu0 0.0
    %150 = vmatprep.subr.mxu0 0.0
    %151 = vmatpush1.msra.mxu0 0.0
    %152 = vmatprep.subr.mxu0 0.0
    %153 = vmatpush1.msra.mxu0 0.0
    %154 = vmatprep.subr.mxu0 0.0
    %155 = vmatpush1.msra.mxu0 0.0
    %156 = vmatprep.subr.mxu0 0.0
    %157 = vmatpush1.msra.mxu0 0.0
    %158 = vmatprep.subr.mxu0 0.0
    %159 = vmatpush1.msra.mxu0 0.0
    %160 = vmatprep.subr.mxu0 0.0
    %161 = vmatpush1.msra.mxu0 0.0
    %162 = vmatprep.subr.mxu0 0.0
    %163 = vmatpush1.msra.mxu0 0.0
    %164 = vmatprep.subr.mxu0 0.0
    %165 = vmatpush1.msra.mxu0 0.0
    %166 = vmatprep.subr.mxu0 0.0
    %167 = vmatpush1.msra.mxu0 0.0
    %168 = vmatprep.subr.mxu0 0.0
    %169 = vmatpush1.msra.mxu0 0.0
    %170 = vmatprep.subr.mxu0 0.0
    %171 = vmatpush1.msra.mxu0 0.0
    %172 = vmatprep.subr.mxu0 0.0
    %173 = vmatpush1.msra.mxu0 0.0
    %174 = vmatprep.subr.mxu0 0.0
    %175 = vmatpush1.msra.mxu0 0.0
    %176 = vmatprep.subr.mxu0 0.0
    %177 = vmatpush1.msra.mxu0 0.0
    %178 = vmatprep.subr.mxu0 0.0
    %179 = vmatpush1.msra.mxu0 0.0
    %180 = vmatprep.subr.mxu0 0.0
    %181 = vmatpush1.msra.mxu0 0.0
    %182 = vmatprep.subr.mxu0 0.0
    %183 = vmatpush1.msra.mxu0 0.0
    %184 = vmatprep.subr.mxu0 0.0
    %185 = vmatpush1.msra.mxu0 0.0
    %186 = vmatprep.subr.mxu0 0.0
    %187 = vmatpush1.msra.mxu0 0.0
    %188 = vmatprep.subr.mxu0 0.0
    %189 = vmatpush1.msra.mxu0 0.0
    %190 = vmatprep.subr.mxu0 0.0
    %191 = vmatpush1.msra.mxu0 0.0
    %192 = vmatprep.mubr.f32.mxu0 0.0
    %193 = vmatmul.mubr.f32.gmra.mrb[0].mxu0 %v126
    %v194 = vpop.f32.mrb[0].mxu0
    %v195 = vadd.f32 0.0, %v194
    %v196 = vpop.f32.mrb[0].mxu0
    %197 = vdwg.mxu0
    %v198 = vmax.f32 %v195, 0.0
    %s199 = scalar_lea.vmem [#allocation5], 80
    %v200 = vld [vmem:[%s199] sm:$0xff]
    %v201 = vld [vmem:[%s199 + $0x8] sm:$0xff]
    %v202 = vld [vmem:[%s199 + $0x10] sm:$0xff]
    %v203 = vld [vmem:[%s199 + $0x18] sm:$0xff]
    %v204 = vld [vmem:[%s199 + $0x20] sm:$0xff]
    %v206 = vsel %vm44, %v198, 0
    %208 = vmatprep.subr.mxu0 0.0
    %209 = vmatpush1.msra.mxu0 %v200
    %210 = vmatprep.subr.mxu0 0.0
    %211 = vmatpush1.msra.mxu0 %v201
    %212 = vmatprep.subr.mxu0 0.0
    %213 = vmatpush1.msra.mxu0 %v202
    %214 = vmatprep.subr.mxu0 0.0
    %215 = vmatpush1.msra.mxu0 %v203
    %216 = vmatprep.subr.mxu0 0.0
    %217 = vmatpush1.msra.mxu0 %v204
    %218 = vmatprep.subr.mxu0 0.0
    %219 = vmatpush1.msra.mxu0 0.0
    %220 = vmatprep.subr.mxu0 0.0
    %221 = vmatpush1.msra.mxu0 0.0
    %222 = vmatprep.subr.mxu0 0.0
    %223 = vmatpush1.msra.mxu0 0.0
    %224 = vmatprep.subr.mxu0 0.0
    %225 = vmatpush1.msra.mxu0 0.0
    %226 = vmatprep.subr.mxu0 0.0
    %227 = vmatpush1.msra.mxu0 0.0
    %228 = vmatprep.subr.mxu0 0.0
    %229 = vmatpush1.msra.mxu0 0.0
    %230 = vmatprep.subr.mxu0 0.0
    %231 = vmatpush1.msra.mxu0 0.0
    %232 = vmatprep.subr.mxu0 0.0
    %233 = vmatpush1.msra.mxu0 0.0
    %234 = vmatprep.subr.mxu0 0.0
    %235 = vmatpush1.msra.mxu0 0.0
    %236 = vmatprep.subr.mxu0 0.0
    %237 = vmatpush1.msra.mxu0 0.0
    %238 = vmatprep.subr.mxu0 0.0
    %239 = vmatpush1.msra.mxu0 0.0
    %240 = vmatprep.subr.mxu0 0.0
    %241 = vmatpush1.msra.mxu0 0.0
    %242 = vmatprep.subr.mxu0 0.0
    %243 = vmatpush1.msra.mxu0 0.0
    %244 = vmatprep.subr.mxu0 0.0
    %245 = vmatpush1.msra.mxu0 0.0
    %246 = vmatprep.subr.mxu0 0.0
    %247 = vmatpush1.msra.mxu0 0.0
    %248 = vmatprep.subr.mxu0 0.0
    %249 = vmatpush1.msra.mxu0 0.0
    %250 = vmatprep.subr.mxu0 0.0
    %251 = vmatpush1.msra.mxu0 0.0
    %252 = vmatprep.subr.mxu0 0.0
    %253 = vmatpush1.msra.mxu0 0.0
    %254 = vmatprep.subr.mxu0 0.0
    %255 = vmatpush1.msra.mxu0 0.0
    %256 = vmatprep.subr.mxu0 0.0
    %257 = vmatpush1.msra.mxu0 0.0
    %258 = vmatprep.subr.mxu0 0.0
    %259 = vmatpush1.msra.mxu0 0.0
    %260 = vmatprep.subr.mxu0 0.0
    %261 = vmatpush1.msra.mxu0 0.0
    %262 = vmatprep.subr.mxu0 0.0
    %263 = vmatpush1.msra.mxu0 0.0
    %264 = vmatprep.subr.mxu0 0.0
    %265 = vmatpush1.msra.mxu0 0.0
    %266 = vmatprep.subr.mxu0 0.0
    %267 = vmatpush1.msra.mxu0 0.0
    %268 = vmatprep.subr.mxu0 0.0
    %269 = vmatpush1.msra.mxu0 0.0
    %270 = vmatprep.subr.mxu0 0.0
    %271 = vmatpush1.msra.mxu0 0.0
    %272 = vmatprep.mubr.f32.mxu0 0.0
    %273 = vmatmul.mubr.f32.gmra.mrb[0].mxu0 %v206
    %v274 = vpop.f32.mrb[0].mxu0
    %v275 = vadd.f32 0.0, %v274
    %v276 = vpop.f32.mrb[0].mxu0
    %277 = vdwg.mxu0
    %v278 = vmax.f32 %v275, 0.0
    %s279 = scalar_lea.vmem [#allocation5], 120
    %v280 = vld [vmem:[%s279] sm:$0xff]
    %v281 = vld [vmem:[%s279 + $0x8] sm:$0xff]
    %v282 = vld [vmem:[%s279 + $0x10] sm:$0xff]
    %v283 = vld [vmem:[%s279 + $0x18] sm:$0xff]
    %v284 = vld [vmem:[%s279 + $0x20] sm:$0xff]
    %v286 = vsel %vm44, %v278, 0
    %288 = vmatprep.subr.mxu0 0.0
    %289 = vmatpush1.msra.mxu0 %v280
    %290 = vmatprep.subr.mxu0 0.0
    %291 = vmatpush1.msra.mxu0 %v281
    %292 = vmatprep.subr.mxu0 0.0
    %293 = vmatpush1.msra.mxu0 %v282
    %294 = vmatprep.subr.mxu0 0.0
    %295 = vmatpush1.msra.mxu0 %v283
    %296 = vmatprep.subr.mxu0 0.0
    %297 = vmatpush1.msra.mxu0 %v284
    %298 = vmatprep.subr.mxu0 0.0
    %299 = vmatpush1.msra.mxu0 0.0
    %300 = vmatprep.subr.mxu0 0.0
    %301 = vmatpush1.msra.mxu0 0.0
    %302 = vmatprep.subr.mxu0 0.0
    %303 = vmatpush1.msra.mxu0 0.0
    %304 = vmatprep.subr.mxu0 0.0
    %305 = vmatpush1.msra.mxu0 0.0
    %306 = vmatprep.subr.mxu0 0.0
    %307 = vmatpush1.msra.mxu0 0.0
    %308 = vmatprep.subr.mxu0 0.0
    %309 = vmatpush1.msra.mxu0 0.0
    %310 = vmatprep.subr.mxu0 0.0
    %311 = vmatpush1.msra.mxu0 0.0
    %312 = vmatprep.subr.mxu0 0.0
    %313 = vmatpush1.msra.mxu0 0.0
    %314 = vmatprep.subr.mxu0 0.0
    %315 = vmatpush1.msra.mxu0 0.0
    %316 = vmatprep.subr.mxu0 0.0
    %317 = vmatpush1.msra.mxu0 0.0
    %318 = vmatprep.subr.mxu0 0.0
    %319 = vmatpush1.msra.mxu0 0.0
    %320 = vmatprep.subr.mxu0 0.0
    %321 = vmatpush1.msra.mxu0 0.0
    %322 = vmatprep.subr.mxu0 0.0
    %323 = vmatpush1.msra.mxu0 0.0
    %324 = vmatprep.subr.mxu0 0.0
    %325 = vmatpush1.msra.mxu0 0.0
    %326 = vmatprep.subr.mxu0 0.0
    %327 = vmatpush1.msra.mxu0 0.0
    %328 = vmatprep.subr.mxu0 0.0
    %329 = vmatpush1.msra.mxu0 0.0
    %330 = vmatprep.subr.mxu0 0.0
    %331 = vmatpush1.msra.mxu0 0.0
    %332 = vmatprep.subr.mxu0 0.0
    %333 = vmatpush1.msra.mxu0 0.0
    %334 = vmatprep.subr.mxu0 0.0
    %335 = vmatpush1.msra.mxu0 0.0
    %336 = vmatprep.subr.mxu0 0.0
    %337 = vmatpush1.msra.mxu0 0.0
    %338 = vmatprep.subr.mxu0 0.0
    %339 = vmatpush1.msra.mxu0 0.0
    %340 = vmatprep.subr.mxu0 0.0
    %341 = vmatpush1.msra.mxu0 0.0
    %342 = vmatprep.subr.mxu0 0.0
    %343 = vmatpush1.msra.mxu0 0.0
    %344 = vmatprep.subr.mxu0 0.0
    %345 = vmatpush1.msra.mxu0 0.0
    %346 = vmatprep.subr.mxu0 0.0
    %347 = vmatpush1.msra.mxu0 0.0
    %348 = vmatprep.subr.mxu0 0.0
    %349 = vmatpush1.msra.mxu0 0.0
    %350 = vmatprep.subr.mxu0 0.0
    %351 = vmatpush1.msra.mxu0 0.0
    %352 = vmatprep.mubr.f32.mxu0 0.0
    %353 = vmatmul.mubr.f32.gmra.mrb[0].mxu0 %v286
    %v354 = vpop.f32.mrb[0].mxu0
    %v355 = vadd.f32 0.0, %v354
    %v356 = vpop.f32.mrb[0].mxu0
    %357 = vdwg.mxu0
    %v358 = vadd.f32 %v38, %v355
    %s359 = scalar_lea.vmem [#allocation5], 160
    %v360 = vld [vmem:[%s359] sm:$0xff]
    %v361 = vld [vmem:[%s359 + $0x8] sm:$0xff]
    %v362 = vld [vmem:[%s359 + $0x10] sm:$0xff]
    %v363 = vld [vmem:[%s359 + $0x18] sm:$0xff]
    %v364 = vld [vmem:[%s359 + $0x20] sm:$0xff]
    %v366 = vsel %vm44, %v358, 0
    %368 = vmatprep.subr.mxu0 0.0
    %369 = vmatpush1.msra.mxu0 %v360
    %370 = vmatprep.subr.mxu0 0.0
    %371 = vmatpush1.msra.mxu0 %v361
    %372 = vmatprep.subr.mxu0 0.0
    %373 = vmatpush1.msra.mxu0 %v362
    %374 = vmatprep.subr.mxu0 0.0
    %375 = vmatpush1.msra.mxu0 %v363
    %376 = vmatprep.subr.mxu0 0.0
    %377 = vmatpush1.msra.mxu0 %v364
    %378 = vmatprep.subr.mxu0 0.0
    %379 = vmatpush1.msra.mxu0 0.0
    %380 = vmatprep.subr.mxu0 0.0
    %381 = vmatpush1.msra.mxu0 0.0
    %382 = vmatprep.subr.mxu0 0.0
    %383 = vmatpush1.msra.mxu0 0.0
    %384 = vmatprep.subr.mxu0 0.0
    %385 = vmatpush1.msra.mxu0 0.0
    %386 = vmatprep.subr.mxu0 0.0
    %387 = vmatpush1.msra.mxu0 0.0
    %388 = vmatprep.subr.mxu0 0.0
    %389 = vmatpush1.msra.mxu0 0.0
    %390 = vmatprep.subr.mxu0 0.0
    %391 = vmatpush1.msra.mxu0 0.0
    %392 = vmatprep.subr.mxu0 0.0
    %393 = vmatpush1.msra.mxu0 0.0
    %394 = vmatprep.subr.mxu0 0.0
    %395 = vmatpush1.msra.mxu0 0.0
    %396 = vmatprep.subr.mxu0 0.0
    %397 = vmatpush1.msra.mxu0 0.0
    %398 = vmatprep.subr.mxu0 0.0
    %399 = vmatpush1.msra.mxu0 0.0
    %400 = vmatprep.subr.mxu0 0.0
    %401 = vmatpush1.msra.mxu0 0.0
    %402 = vmatprep.subr.mxu0 0.0
    %403 = vmatpush1.msra.mxu0 0.0
    %404 = vmatprep.subr.mxu0 0.0
    %405 = vmatpush1.msra.mxu0 0.0
    %406 = vmatprep.subr.mxu0 0.0
    %407 = vmatpush1.msra.mxu0 0.0
    %408 = vmatprep.subr.mxu0 0.0
    %409 = vmatpush1.msra.mxu0 0.0
    %410 = vmatprep.subr.mxu0 0.0
    %411 = vmatpush1.msra.mxu0 0.0
    %412 = vmatprep.subr.mxu0 0.0
    %413 = vmatpush1.msra.mxu0 0.0
    %414 = vmatprep.subr.mxu0 0.0
    %415 = vmatpush1.msra.mxu0 0.0
    %416 = vmatprep.subr.mxu0 0.0
    %417 = vmatpush1.msra.mxu0 0.0
    %418 = vmatprep.subr.mxu0 0.0
    %419 = vmatpush1.msra.mxu0 0.0
    %420 = vmatprep.subr.mxu0 0.0
    %421 = vmatpush1.msra.mxu0 0.0
    %422 = vmatprep.subr.mxu0 0.0
    %423 = vmatpush1.msra.mxu0 0.0
    %424 = vmatprep.subr.mxu0 0.0
    %425 = vmatpush1.msra.mxu0 0.0
    %426 = vmatprep.subr.mxu0 0.0
    %427 = vmatpush1.msra.mxu0 0.0
    %428 = vmatprep.subr.mxu0 0.0
    %429 = vmatpush1.msra.mxu0 0.0
    %430 = vmatprep.subr.mxu0 0.0
    %431 = vmatpush1.msra.mxu0 0.0
    %432 = vmatprep.mubr.f32.mxu0 0.0
    %433 = vmatmul.mubr.f32.gmra.mrb[0].mxu0 %v366
    %v434 = vpop.f32.mrb[0].mxu0
    %v435 = vadd.f32 0.0, %v434
    %v436 = vpop.f32.mrb[0].mxu0
    %437 = vdwg.mxu0
    %v438 = vmax.f32 %v435, 0.0
    %s439 = scalar_lea.vmem [#allocation5], 200
    %v440 = vld [vmem:[%s439] sm:$0xff]
    %v441 = vld [vmem:[%s439 + $0x8] sm:$0xff]
    %v442 = vld [vmem:[%s439 + $0x10] sm:$0xff]
    %v443 = vld [vmem:[%s439 + $0x18] sm:$0xff]
    %v444 = vld [vmem:[%s439 + $0x20] sm:$0xff]
    %v446 = vsel %vm44, %v438, 0
    %448 = vmatprep.subr.mxu0 0.0
    %449 = vmatpush1.msra.mxu0 %v440
    %450 = vmatprep.subr.mxu0 0.0
    %451 = vmatpush1.msra.mxu0 %v441
    %452 = vmatprep.subr.mxu0 0.0
    %453 = vmatpush1.msra.mxu0 %v442
    %454 = vmatprep.subr.mxu0 0.0
    %455 = vmatpush1.msra.mxu0 %v443
    %456 = vmatprep.subr.mxu0 0.0
    %457 = vmatpush1.msra.mxu0 %v444
    %458 = vmatprep.subr.mxu0 0.0
    %459 = vmatpush1.msra.mxu0 0.0
    %460 = vmatprep.subr.mxu0 0.0
    %461 = vmatpush1.msra.mxu0 0.0
    %462 = vmatprep.subr.mxu0 0.0
    %463 = vmatpush1.msra.mxu0 0.0
    %464 = vmatprep.subr.mxu0 0.0
    %465 = vmatpush1.msra.mxu0 0.0
    %466 = vmatprep.subr.mxu0 0.0
    %467 = vmatpush1.msra.mxu0 0.0
    %468 = vmatprep.subr.mxu0 0.0
    %469 = vmatpush1.msra.mxu0 0.0
    %470 = vmatprep.subr.mxu0 0.0
    %471 = vmatpush1.msra.mxu0 0.0
    %472 = vmatprep.subr.mxu0 0.0
    %473 = vmatpush1.msra.mxu0 0.0
    %474 = vmatprep.subr.mxu0 0.0
    %475 = vmatpush1.msra.mxu0 0.0
    %476 = vmatprep.subr.mxu0 0.0
    %477 = vmatpush1.msra.mxu0 0.0
    %478 = vmatprep.subr.mxu0 0.0
    %479 = vmatpush1.msra.mxu0 0.0
    %480 = vmatprep.subr.mxu0 0.0
    %481 = vmatpush1.msra.mxu0 0.0
    %482 = vmatprep.subr.mxu0 0.0
    %483 = vmatpush1.msra.mxu0 0.0
    %484 = vmatprep.subr.mxu0 0.0
    %485 = vmatpush1.msra.mxu0 0.0
    %486 = vmatprep.subr.mxu0 0.0
    %487 = vmatpush1.msra.mxu0 0.0
    %488 = vmatprep.subr.mxu0 0.0
    %489 = vmatpush1.msra.mxu0 0.0
    %490 = vmatprep.subr.mxu0 0.0
    %491 = vmatpush1.msra.mxu0 0.0
    %492 = vmatprep.subr.mxu0 0.0
    %493 = vmatpush1.msra.mxu0 0.0
    %494 = vmatprep.subr.mxu0 0.0
    %495 = vmatpush1.msra.mxu0 0.0
    %496 = vmatprep.subr.mxu0 0.0
    %497 = vmatpush1.msra.mxu0 0.0
    %498 = vmatprep.subr.mxu0 0.0
    %499 = vmatpush1.msra.mxu0 0.0
    %500 = vmatprep.subr.mxu0 0.0
    %501 = vmatpush1.msra.mxu0 0.0
    %502 = vmatprep.subr.mxu0 0.0
    %503 = vmatpush1.msra.mxu0 0.0
    %504 = vmatprep.subr.mxu0 0.0
    %505 = vmatpush1.msra.mxu0 0.0
    %506 = vmatprep.subr.mxu0 0.0
    %507 = vmatpush1.msra.mxu0 0.0
    %508 = vmatprep.subr.mxu0 0.0
    %509 = vmatpush1.msra.mxu0 0.0
    %510 = vmatprep.subr.mxu0 0.0
    %511 = vmatpush1.msra.mxu0 0.0
    %512 = vmatprep.mubr.f32.mxu0 0.0
    %513 = vmatmul.mubr.f32.gmra.mrb[0].mxu0 %v446
    %v514 = vpop.f32.mrb[0].mxu0
    %v515 = vadd.f32 0.0, %v514
    %v516 = vpop.f32.mrb[0].mxu0
    %517 = vdwg.mxu0
    %v518 = vmax.f32 %v515, 0.0
    %s519 = scalar_lea.vmem [#allocation5], 240
    %v520 = vld [vmem:[%s519] sm:$0xff]
    %v521 = vld [vmem:[%s519 + $0x8] sm:$0xff]
    %v522 = vld [vmem:[%s519 + $0x10] sm:$0xff]
    %v523 = vld [vmem:[%s519 + $0x18] sm:$0xff]
    %v524 = vld [vmem:[%s519 + $0x20] sm:$0xff]
    %v526 = vsel %vm44, %v518, 0
    %528 = vmatprep.subr.mxu0 0.0
    %529 = vmatpush1.msra.mxu0 %v520
    %530 = vmatprep.subr.mxu0 0.0
    %531 = vmatpush1.msra.mxu0 %v521
    %532 = vmatprep.subr.mxu0 0.0
    %533 = vmatpush1.msra.mxu0 %v522
    %534 = vmatprep.subr.mxu0 0.0
    %535 = vmatpush1.msra.mxu0 %v523
    %536 = vmatprep.subr.mxu0 0.0
    %537 = vmatpush1.msra.mxu0 %v524
    %538 = vmatprep.subr.mxu0 0.0
    %539 = vmatpush1.msra.mxu0 0.0
    %540 = vmatprep.subr.mxu0 0.0
    %541 = vmatpush1.msra.mxu0 0.0
    %542 = vmatprep.subr.mxu0 0.0
    %543 = vmatpush1.msra.mxu0 0.0
    %544 = vmatprep.subr.mxu0 0.0
    %545 = vmatpush1.msra.mxu0 0.0
    %546 = vmatprep.subr.mxu0 0.0
    %547 = vmatpush1.msra.mxu0 0.0
    %548 = vmatprep.subr.mxu0 0.0
    %549 = vmatpush1.msra.mxu0 0.0
    %550 = vmatprep.subr.mxu0 0.0
    %551 = vmatpush1.msra.mxu0 0.0
    %552 = vmatprep.subr.mxu0 0.0
    %553 = vmatpush1.msra.mxu0 0.0
    %554 = vmatprep.subr.mxu0 0.0
    %555 = vmatpush1.msra.mxu0 0.0
    %556 = vmatprep.subr.mxu0 0.0
    %557 = vmatpush1.msra.mxu0 0.0
    %558 = vmatprep.subr.mxu0 0.0
    %559 = vmatpush1.msra.mxu0 0.0
    %560 = vmatprep.subr.mxu0 0.0
    %561 = vmatpush1.msra.mxu0 0.0
    %562 = vmatprep.subr.mxu0 0.0
    %563 = vmatpush1.msra.mxu0 0.0
    %564 = vmatprep.subr.mxu0 0.0
    %565 = vmatpush1.msra.mxu0 0.0
    %566 = vmatprep.subr.mxu0 0.0
    %567 = vmatpush1.msra.mxu0 0.0
    %568 = vmatprep.subr.mxu0 0.0
    %569 = vmatpush1.msra.mxu0 0.0
    %570 = vmatprep.subr.mxu0 0.0
    %571 = vmatpush1.msra.mxu0 0.0
    %572 = vmatprep.subr.mxu0 0.0
    %573 = vmatpush1.msra.mxu0 0.0
    %574 = vmatprep.subr.mxu0 0.0
    %575 = vmatpush1.msra.mxu0 0.0
    %576 = vmatprep.subr.mxu0 0.0
    %577 = vmatpush1.msra.mxu0 0.0
    %578 = vmatprep.subr.mxu0 0.0
    %579 = vmatpush1.msra.mxu0 0.0
    %580 = vmatprep.subr.mxu0 0.0
    %581 = vmatpush1.msra.mxu0 0.0
    %582 = vmatprep.subr.mxu0 0.0
    %583 = vmatpush1.msra.mxu0 0.0
    %584 = vmatprep.subr.mxu0 0.0
    %585 = vmatpush1.msra.mxu0 0.0
    %586 = vmatprep.subr.mxu0 0.0
    %587 = vmatpush1.msra.mxu0 0.0
    %588 = vmatprep.subr.mxu0 0.0
    %589 = vmatpush1.msra.mxu0 0.0
    %590 = vmatprep.subr.mxu0 0.0
    %591 = vmatpush1.msra.mxu0 0.0
    %592 = vmatprep.mubr.f32.mxu0 0.0
    %593 = vmatmul.mubr.f32.gmra.mrb[0].mxu0 %v526
    %v594 = vpop.f32.mrb[0].mxu0
    %v595 = vadd.f32 0.0, %v594
    %v596 = vpop.f32.mrb[0].mxu0
    %597 = vdwg.mxu0
    %v598 = vmax.f32 %v595, 0.0
    %s599 = scalar_lea.vmem [#allocation5], 280
    %v600 = vld [vmem:[%s599] sm:$0xff]
    %v601 = vld [vmem:[%s599 + $0x8] sm:$0xff]
    %v602 = vld [vmem:[%s599 + $0x10] sm:$0xff]
    %v603 = vld [vmem:[%s599 + $0x18] sm:$0xff]
    %v604 = vld [vmem:[%s599 + $0x20] sm:$0xff]
    %v606 = vsel %vm44, %v598, 0
    %608 = vmatprep.subr.mxu0 0.0
    %609 = vmatpush1.msra.mxu0 %v600
    %610 = vmatprep.subr.mxu0 0.0
    %611 = vmatpush1.msra.mxu0 %v601
    %612 = vmatprep.subr.mxu0 0.0
    %613 = vmatpush1.msra.mxu0 %v602
    %614 = vmatprep.subr.mxu0 0.0
    %615 = vmatpush1.msra.mxu0 %v603
    %616 = vmatprep.subr.mxu0 0.0
    %617 = vmatpush1.msra.mxu0 %v604
    %618 = vmatprep.subr.mxu0 0.0
    %619 = vmatpush1.msra.mxu0 0.0
    %620 = vmatprep.subr.mxu0 0.0
    %621 = vmatpush1.msra.mxu0 0.0
    %622 = vmatprep.subr.mxu0 0.0
    %623 = vmatpush1.msra.mxu0 0.0
    %624 = vmatprep.subr.mxu0 0.0
    %625 = vmatpush1.msra.mxu0 0.0
    %626 = vmatprep.subr.mxu0 0.0
    %627 = vmatpush1.msra.mxu0 0.0
    %628 = vmatprep.subr.mxu0 0.0
    %629 = vmatpush1.msra.mxu0 0.0
    %630 = vmatprep.subr.mxu0 0.0
    %631 = vmatpush1.msra.mxu0 0.0
    %632 = vmatprep.subr.mxu0 0.0
    %633 = vmatpush1.msra.mxu0 0.0
    %634 = vmatprep.subr.mxu0 0.0
    %635 = vmatpush1.msra.mxu0 0.0
    %636 = vmatprep.subr.mxu0 0.0
    %637 = vmatpush1.msra.mxu0 0.0
    %638 = vmatprep.subr.mxu0 0.0
    %639 = vmatpush1.msra.mxu0 0.0
    %640 = vmatprep.subr.mxu0 0.0
    %641 = vmatpush1.msra.mxu0 0.0
    %642 = vmatprep.subr.mxu0 0.0
    %643 = vmatpush1.msra.mxu0 0.0
    %644 = vmatprep.subr.mxu0 0.0
    %645 = vmatpush1.msra.mxu0 0.0
    %646 = vmatprep.subr.mxu0 0.0
    %647 = vmatpush1.msra.mxu0 0.0
    %648 = vmatprep.subr.mxu0 0.0
    %649 = vmatpush1.msra.mxu0 0.0
    %650 = vmatprep.subr.mxu0 0.0
    %651 = vmatpush1.msra.mxu0 0.0
    %652 = vmatprep.subr.mxu0 0.0
    %653 = vmatpush1.msra.mxu0 0.0
    %654 = vmatprep.subr.mxu0 0.0
    %655 = vmatpush1.msra.mxu0 0.0
    %656 = vmatprep.subr.mxu0 0.0
    %657 = vmatpush1.msra.mxu0 0.0
    %658 = vmatprep.subr.mxu0 0.0
    %659 = vmatpush1.msra.mxu0 0.0
    %660 = vmatprep.subr.mxu0 0.0
    %661 = vmatpush1.msra.mxu0 0.0
    %662 = vmatprep.subr.mxu0 0.0
    %663 = vmatpush1.msra.mxu0 0.0
    %664 = vmatprep.subr.mxu0 0.0
    %665 = vmatpush1.msra.mxu0 0.0
    %666 = vmatprep.subr.mxu0 0.0
    %667 = vmatpush1.msra.mxu0 0.0
    %668 = vmatprep.subr.mxu0 0.0
    %669 = vmatpush1.msra.mxu0 0.0
    %670 = vmatprep.subr.mxu0 0.0
    %671 = vmatpush1.msra.mxu0 0.0
    %672 = vmatprep.mubr.f32.mxu0 0.0
    %673 = vmatmul.mubr.f32.gmra.mrb[0].mxu0 %v606
    %v674 = vpop.f32.mrb[0].mxu0
    %v675 = vadd.f32 0.0, %v674
    %v676 = vpop.f32.mrb[0].mxu0
    %677 = vdwg.mxu0
    %v678 = vadd.f32 %v358, %v675
    %s679 = scalar_lea.vmem [#allocation5], 320
    %v680 = vld [vmem:[%s679] sm:$0xff]
    %v681 = vld [vmem:[%s679 + $0x8] sm:$0xff]
    %v682 = vld [vmem:[%s679 + $0x10] sm:$0xff]
    %v683 = vld [vmem:[%s679 + $0x18] sm:$0xff]
    %v684 = vld [vmem:[%s679 + $0x20] sm:$0xff]
    %v686 = vsel %vm44, %v678, 0
    %688 = vmatprep.subr.mxu0 0.0
    %689 = vmatpush1.msra.mxu0 %v680
    %690 = vmatprep.subr.mxu0 0.0
    %691 = vmatpush1.msra.mxu0 %v681
    %692 = vmatprep.subr.mxu0 0.0
    %693 = vmatpush1.msra.mxu0 %v682
    %694 = vmatprep.subr.mxu0 0.0
    %695 = vmatpush1.msra.mxu0 %v683
    %696 = vmatprep.subr.mxu0 0.0
    %697 = vmatpush1.msra.mxu0 %v684
    %698 = vmatprep.subr.mxu0 0.0
    %699 = vmatpush1.msra.mxu0 0.0
    %700 = vmatprep.subr.mxu0 0.0
    %701 = vmatpush1.msra.mxu0 0.0
    %702 = vmatprep.subr.mxu0 0.0
    %703 = vmatpush1.msra.mxu0 0.0
    %704 = vmatprep.subr.mxu0 0.0
    %705 = vmatpush1.msra.mxu0 0.0
    %706 = vmatprep.subr.mxu0 0.0
    %707 = vmatpush1.msra.mxu0 0.0
    %708 = vmatprep.subr.mxu0 0.0
    %709 = vmatpush1.msra.mxu0 0.0
    %710 = vmatprep.subr.mxu0 0.0
    %711 = vmatpush1.msra.mxu0 0.0
    %712 = vmatprep.subr.mxu0 0.0
    %713 = vmatpush1.msra.mxu0 0.0
    %714 = vmatprep.subr.mxu0 0.0
    %715 = vmatpush1.msra.mxu0 0.0
    %716 = vmatprep.subr.mxu0 0.0
    %717 = vmatpush1.msra.mxu0 0.0
    %718 = vmatprep.subr.mxu0 0.0
    %719 = vmatpush1.msra.mxu0 0.0
    %720 = vmatprep.subr.mxu0 0.0
    %721 = vmatpush1.msra.mxu0 0.0
    %722 = vmatprep.subr.mxu0 0.0
    %723 = vmatpush1.msra.mxu0 0.0
    %724 = vmatprep.subr.mxu0 0.0
    %725 = vmatpush1.msra.mxu0 0.0
    %726 = vmatprep.subr.mxu0 0.0
    %727 = vmatpush1.msra.mxu0 0.0
    %728 = vmatprep.subr.mxu0 0.0
    %729 = vmatpush1.msra.mxu0 0.0
    %730 = vmatprep.subr.mxu0 0.0
    %731 = vmatpush1.msra.mxu0 0.0
    %732 = vmatprep.subr.mxu0 0.0
    %733 = vmatpush1.msra.mxu0 0.0
    %734 = vmatprep.subr.mxu0 0.0
    %735 = vmatpush1.msra.mxu0 0.0
    %736 = vmatprep.subr.mxu0 0.0
    %737 = vmatpush1.msra.mxu0 0.0
    %738 = vmatprep.subr.mxu0 0.0
    %739 = vmatpush1.msra.mxu0 0.0
    %740 = vmatprep.subr.mxu0 0.0
    %741 = vmatpush1.msra.mxu0 0.0
    %742 = vmatprep.subr.mxu0 0.0
    %743 = vmatpush1.msra.mxu0 0.0
    %744 = vmatprep.subr.mxu0 0.0
    %745 = vmatpush1.msra.mxu0 0.0
    %746 = vmatprep.subr.mxu0 0.0
    %747 = vmatpush1.msra.mxu0 0.0
    %748 = vmatprep.subr.mxu0 0.0
    %749 = vmatpush1.msra.mxu0 0.0
    %750 = vmatprep.subr.mxu0 0.0
    %751 = vmatpush1.msra.mxu0 0.0
    %752 = vmatprep.mubr.f32.mxu0 0.0
    %753 = vmatmul.mubr.f32.gmra.mrb[0].mxu0 %v686
    %v754 = vpop.f32.mrb[0].mxu0
    %v755 = vadd.f32 0.0, %v754
    %v756 = vpop.f32.mrb[0].mxu0
    %757 = vdwg.mxu0
    %v758 = vmax.f32 %v755, 0.0
    %s759 = scalar_lea.vmem [#allocation5], 360
    %v760 = vld [vmem:[%s759] sm:$0xff]
    %v761 = vld [vmem:[%s759 + $0x8] sm:$0xff]
    %v762 = vld [vmem:[%s759 + $0x10] sm:$0xff]
    %v763 = vld [vmem:[%s759 + $0x18] sm:$0xff]
    %v764 = vld [vmem:[%s759 + $0x20] sm:$0xff]
    %v766 = vsel %vm44, %v758, 0
    %768 = vmatprep.subr.mxu0 0.0
    %769 = vmatpush1.msra.mxu0 %v760
    %770 = vmatprep.subr.mxu0 0.0
    %771 = vmatpush1.msra.mxu0 %v761
    %772 = vmatprep.subr.mxu0 0.0
    %773 = vmatpush1.msra.mxu0 %v762
    %774 = vmatprep.subr.mxu0 0.0
    %775 = vmatpush1.msra.mxu0 %v763
    %776 = vmatprep.subr.mxu0 0.0
    %777 = vmatpush1.msra.mxu0 %v764
    %778 = vmatprep.subr.mxu0 0.0
    %779 = vmatpush1.msra.mxu0 0.0
    %780 = vmatprep.subr.mxu0 0.0
    %781 = vmatpush1.msra.mxu0 0.0
    %782 = vmatprep.subr.mxu0 0.0
    %783 = vmatpush1.msra.mxu0 0.0
    %784 = vmatprep.subr.mxu0 0.0
    %785 = vmatpush1.msra.mxu0 0.0
    %786 = vmatprep.subr.mxu0 0.0
    %787 = vmatpush1.msra.mxu0 0.0
    %788 = vmatprep.subr.mxu0 0.0
    %789 = vmatpush1.msra.mxu0 0.0
    %790 = vmatprep.subr.mxu0 0.0
    %791 = vmatpush1.msra.mxu0 0.0
    %792 = vmatprep.subr.mxu0 0.0
    %793 = vmatpush1.msra.mxu0 0.0
    %794 = vmatprep.subr.mxu0 0.0
    %795 = vmatpush1.msra.mxu0 0.0
    %796 = vmatprep.subr.mxu0 0.0
    %797 = vmatpush1.msra.mxu0 0.0
    %798 = vmatprep.subr.mxu0 0.0
    %799 = vmatpush1.msra.mxu0 0.0
    %800 = vmatprep.subr.mxu0 0.0
    %801 = vmatpush1.msra.mxu0 0.0
    %802 = vmatprep.subr.mxu0 0.0
    %803 = vmatpush1.msra.mxu0 0.0
    %804 = vmatprep.subr.mxu0 0.0
    %805 = vmatpush1.msra.mxu0 0.0
    %806 = vmatprep.subr.mxu0 0.0
    %807 = vmatpush1.msra.mxu0 0.0
    %808 = vmatprep.subr.mxu0 0.0
    %809 = vmatpush1.msra.mxu0 0.0
    %810 = vmatprep.subr.mxu0 0.0
    %811 = vmatpush1.msra.mxu0 0.0
    %812 = vmatprep.subr.mxu0 0.0
    %813 = vmatpush1.msra.mxu0 0.0
    %814 = vmatprep.subr.mxu0 0.0
    %815 = vmatpush1.msra.mxu0 0.0
    %816 = vmatprep.subr.mxu0 0.0
    %817 = vmatpush1.msra.mxu0 0.0
    %818 = vmatprep.subr.mxu0 0.0
    %819 = vmatpush1.msra.mxu0 0.0
    %820 = vmatprep.subr.mxu0 0.0
    %821 = vmatpush1.msra.mxu0 0.0
    %822 = vmatprep.subr.mxu0 0.0
    %823 = vmatpush1.msra.mxu0 0.0
    %824 = vmatprep.subr.mxu0 0.0
    %825 = vmatpush1.msra.mxu0 0.0
    %826 = vmatprep.subr.mxu0 0.0
    %827 = vmatpush1.msra.mxu0 0.0
    %828 = vmatprep.subr.mxu0 0.0
    %829 = vmatpush1.msra.mxu0 0.0
    %830 = vmatprep.subr.mxu0 0.0
    %831 = vmatpush1.msra.mxu0 0.0
    %832 = vmatprep.mubr.f32.mxu0 0.0
    %833 = vmatmul.mubr.f32.gmra.mrb[0].mxu0 %v766
    %v834 = vpop.f32.mrb[0].mxu0
    %v835 = vadd.f32 0.0, %v834
    %v836 = vpop.f32.mrb[0].mxu0
    %837 = vdwg.mxu0
    %v838 = vmax.f32 %v835, 0.0
    %s839 = scalar_lea.vmem [#allocation5], 400
    %v840 = vld [vmem:[%s839] sm:$0xff]
    %v841 = vld [vmem:[%s839 + $0x8] sm:$0xff]
    %v842 = vld [vmem:[%s839 + $0x10] sm:$0xff]
    %v843 = vld [vmem:[%s839 + $0x18] sm:$0xff]
    %v844 = vld [vmem:[%s839 + $0x20] sm:$0xff]
    %v846 = vsel %vm44, %v838, 0
    %848 = vmatprep.subr.mxu0 0.0
    %849 = vmatpush1.msra.mxu0 %v840
    %850 = vmatprep.subr.mxu0 0.0
    %851 = vmatpush1.msra.mxu0 %v841
    %852 = vmatprep.subr.mxu0 0.0
    %853 = vmatpush1.msra.mxu0 %v842
    %854 = vmatprep.subr.mxu0 0.0
    %855 = vmatpush1.msra.mxu0 %v843
    %856 = vmatprep.subr.mxu0 0.0
    %857 = vmatpush1.msra.mxu0 %v844
    %858 = vmatprep.subr.mxu0 0.0
    %859 = vmatpush1.msra.mxu0 0.0
    %860 = vmatprep.subr.mxu0 0.0
    %861 = vmatpush1.msra.mxu0 0.0
    %862 = vmatprep.subr.mxu0 0.0
    %863 = vmatpush1.msra.mxu0 0.0
    %864 = vmatprep.subr.mxu0 0.0
    %865 = vmatpush1.msra.mxu0 0.0
    %866 = vmatprep.subr.mxu0 0.0
    %867 = vmatpush1.msra.mxu0 0.0
    %868 = vmatprep.subr.mxu0 0.0
    %869 = vmatpush1.msra.mxu0 0.0
    %870 = vmatprep.subr.mxu0 0.0
    %871 = vmatpush1.msra.mxu0 0.0
    %872 = vmatprep.subr.mxu0 0.0
    %873 = vmatpush1.msra.mxu0 0.0
    %874 = vmatprep.subr.mxu0 0.0
    %875 = vmatpush1.msra.mxu0 0.0
    %876 = vmatprep.subr.mxu0 0.0
    %877 = vmatpush1.msra.mxu0 0.0
    %878 = vmatprep.subr.mxu0 0.0
    %879 = vmatpush1.msra.mxu0 0.0
    %880 = vmatprep.subr.mxu0 0.0
    %881 = vmatpush1.msra.mxu0 0.0
    %882 = vmatprep.subr.mxu0 0.0
    %883 = vmatpush1.msra.mxu0 0.0
    %884 = vmatprep.subr.mxu0 0.0
    %885 = vmatpush1.msra.mxu0 0.0
    %886 = vmatprep.subr.mxu0 0.0
    %887 = vmatpush1.msra.mxu0 0.0
    %888 = vmatprep.subr.mxu0 0.0
    %889 = vmatpush1.msra.mxu0 0.0
    %890 = vmatprep.subr.mxu0 0.0
    %891 = vmatpush1.msra.mxu0 0.0
    %892 = vmatprep.subr.mxu0 0.0
    %893 = vmatpush1.msra.mxu0 0.0
    %894 = vmatprep.subr.mxu0 0.0
    %895 = vmatpush1.msra.mxu0 0.0
    %896 = vmatprep.subr.mxu0 0.0
    %897 = vmatpush1.msra.mxu0 0.0
    %898 = vmatprep.subr.mxu0 0.0
    %899 = vmatpush1.msra.mxu0 0.0
    %900 = vmatprep.subr.mxu0 0.0
    %901 = vmatpush1.msra.mxu0 0.0
    %902 = vmatprep.subr.mxu0 0.0
    %903 = vmatpush1.msra.mxu0 0.0
    %904 = vmatprep.subr.mxu0 0.0
    %905 = vmatpush1.msra.mxu0 0.0
    %906 = vmatprep.subr.mxu0 0.0
    %907 = vmatpush1.msra.mxu0 0.0
    %908 = vmatprep.subr.mxu0 0.0
    %909 = vmatpush1.msra.mxu0 0.0
    %910 = vmatprep.subr.mxu0 0.0
    %911 = vmatpush1.msra.mxu0 0.0
    %912 = vmatprep.mubr.f32.mxu0 0.0
    %913 = vmatmul.mubr.f32.gmra.mrb[0].mxu0 %v846
    %v914 = vpop.f32.mrb[0].mxu0
    %v915 = vadd.f32 0.0, %v914
    %v916 = vpop.f32.mrb[0].mxu0
    %917 = vdwg.mxu0
    %v918 = vmax.f32 %v915, 0.0
    %s919 = scalar_lea.vmem [#allocation5], 440
    %v920 = vld [vmem:[%s919] sm:$0xff]
    %v921 = vld [vmem:[%s919 + $0x8] sm:$0xff]
    %v922 = vld [vmem:[%s919 + $0x10] sm:$0xff]
    %v923 = vld [vmem:[%s919 + $0x18] sm:$0xff]
    %v924 = vld [vmem:[%s919 + $0x20] sm:$0xff]
    %v926 = vsel %vm44, %v918, 0
    %928 = vmatprep.subr.mxu0 0.0
    %929 = vmatpush1.msra.mxu0 %v920
    %930 = vmatprep.subr.mxu0 0.0
    %931 = vmatpush1.msra.mxu0 %v921
    %932 = vmatprep.subr.mxu0 0.0
    %933 = vmatpush1.msra.mxu0 %v922
    %934 = vmatprep.subr.mxu0 0.0
    %935 = vmatpush1.msra.mxu0 %v923
    %936 = vmatprep.subr.mxu0 0.0
    %937 = vmatpush1.msra.mxu0 %v924
    %938 = vmatprep.subr.mxu0 0.0
    %939 = vmatpush1.msra.mxu0 0.0
    %940 = vmatprep.subr.mxu0 0.0
    %941 = vmatpush1.msra.mxu0 0.0
    %942 = vmatprep.subr.mxu0 0.0
    %943 = vmatpush1.msra.mxu0 0.0
    %944 = vmatprep.subr.mxu0 0.0
    %945 = vmatpush1.msra.mxu0 0.0
    %946 = vmatprep.subr.mxu0 0.0
    %947 = vmatpush1.msra.mxu0 0.0
    %948 = vmatprep.subr.mxu0 0.0
    %949 = vmatpush1.msra.mxu0 0.0
    %950 = vmatprep.subr.mxu0 0.0
    %951 = vmatpush1.msra.mxu0 0.0
    %952 = vmatprep.subr.mxu0 0.0
    %953 = vmatpush1.msra.mxu0 0.0
    %954 = vmatprep.subr.mxu0 0.0
    %955 = vmatpush1.msra.mxu0 0.0
    %956 = vmatprep.subr.mxu0 0.0
    %957 = vmatpush1.msra.mxu0 0.0
    %958 = vmatprep.subr.mxu0 0.0
    %959 = vmatpush1.msra.mxu0 0.0
    %960 = vmatprep.subr.mxu0 0.0
    %961 = vmatpush1.msra.mxu0 0.0
    %962 = vmatprep.subr.mxu0 0.0
    %963 = vmatpush1.msra.mxu0 0.0
    %964 = vmatprep.subr.mxu0 0.0
    %965 = vmatpush1.msra.mxu0 0.0
    %966 = vmatprep.subr.mxu0 0.0
    %967 = vmatpush1.msra.mxu0 0.0
    %968 = vmatprep.subr.mxu0 0.0
    %969 = vmatpush1.msra.mxu0 0.0
    %970 = vmatprep.subr.mxu0 0.0
    %971 = vmatpush1.msra.mxu0 0.0
    %972 = vmatprep.subr.mxu0 0.0
    %973 = vmatpush1.msra.mxu0 0.0
    %974 = vmatprep.subr.mxu0 0.0
    %975 = vmatpush1.msra.mxu0 0.0
    %976 = vmatprep.subr.mxu0 0.0
    %977 = vmatpush1.msra.mxu0 0.0
    %978 = vmatprep.subr.mxu0 0.0
    %979 = vmatpush1.msra.mxu0 0.0
    %980 = vmatprep.subr.mxu0 0.0
    %981 = vmatpush1.msra.mxu0 0.0
    %982 = vmatprep.subr.mxu0 0.0
    %983 = vmatpush1.msra.mxu0 0.0
    %984 = vmatprep.subr.mxu0 0.0
    %985 = vmatpush1.msra.mxu0 0.0
    %986 = vmatprep.subr.mxu0 0.0
    %987 = vmatpush1.msra.mxu0 0.0
    %988 = vmatprep.subr.mxu0 0.0
    %989 = vmatpush1.msra.mxu0 0.0
    %990 = vmatprep.subr.mxu0 0.0
    %991 = vmatpush1.msra.mxu0 0.0
    %992 = vmatprep.mubr.f32.mxu0 0.0
    %993 = vmatmul.mubr.f32.gmra.mrb[0].mxu0 %v926
    %v994 = vpop.f32.mrb[0].mxu0
    %v995 = vadd.f32 0.0, %v994
    %v996 = vpop.f32.mrb[0].mxu0
    %997 = vdwg.mxu0
    %v998 = vadd.f32 %v678, %v995
    %s999 = scalar_lea.vmem [#allocation5], 480
    %v1000 = vld [vmem:[%s999] sm:$0xff]
    %v1001 = vld [vmem:[%s999 + $0x8] sm:$0xff]
    %v1002 = vld [vmem:[%s999 + $0x10] sm:$0xff]
    %v1003 = vld [vmem:[%s999 + $0x18] sm:$0xff]
    %v1004 = vld [vmem:[%s999 + $0x20] sm:$0xff]
    %v1006 = vsel %vm44, %v998, 0
    %1008 = vmatprep.subr.mxu0 0.0
    %1009 = vmatpush1.msra.mxu0 %v1000
    %1010 = vmatprep.subr.mxu0 0.0
    %1011 = vmatpush1.msra.mxu0 %v1001
    %1012 = vmatprep.subr.mxu0 0.0
    %1013 = vmatpush1.msra.mxu0 %v1002
    %1014 = vmatprep.subr.mxu0 0.0
    %1015 = vmatpush1.msra.mxu0 %v1003
    %1016 = vmatprep.subr.mxu0 0.0
    %1017 = vmatpush1.msra.mxu0 %v1004
    %1018 = vmatprep.subr.mxu0 0.0
    %1019 = vmatpush1.msra.mxu0 0.0
    %1020 = vmatprep.subr.mxu0 0.0
    %1021 = vmatpush1.msra.mxu0 0.0
    %1022 = vmatprep.subr.mxu0 0.0
    %1023 = vmatpush1.msra.mxu0 0.0
    %1024 = vmatprep.subr.mxu0 0.0
    %1025 = vmatpush1.msra.mxu0 0.0
    %1026 = vmatprep.subr.mxu0 0.0
    %1027 = vmatpush1.msra.mxu0 0.0
    %1028 = vmatprep.subr.mxu0 0.0
    %1029 = vmatpush1.msra.mxu0 0.0
    %1030 = vmatprep.subr.mxu0 0.0
    %1031 = vmatpush1.msra.mxu0 0.0
    %1032 = vmatprep.subr.mxu0 0.0
    %1033 = vmatpush1.msra.mxu0 0.0
    %1034 = vmatprep.subr.mxu0 0.0
    %1035 = vmatpush1.msra.mxu0 0.0
    %1036 = vmatprep.subr.mxu0 0.0
    %1037 = vmatpush1.msra.mxu0 0.0
    %1038 = vmatprep.subr.mxu0 0.0
    %1039 = vmatpush1.msra.mxu0 0.0
    %1040 = vmatprep.subr.mxu0 0.0
    %1041 = vmatpush1.msra.mxu0 0.0
    %1042 = vmatprep.subr.mxu0 0.0
    %1043 = vmatpush1.msra.mxu0 0.0
    %1044 = vmatprep.subr.mxu0 0.0
    %1045 = vmatpush1.msra.mxu0 0.0
    %1046 = vmatprep.subr.mxu0 0.0
    %1047 = vmatpush1.msra.mxu0 0.0
    %1048 = vmatprep.subr.mxu0 0.0
    %1049 = vmatpush1.msra.mxu0 0.0
    %1050 = vmatprep.subr.mxu0 0.0
    %1051 = vmatpush1.msra.mxu0 0.0
    %1052 = vmatprep.subr.mxu0 0.0
    %1053 = vmatpush1.msra.mxu0 0.0
    %1054 = vmatprep.subr.mxu0 0.0
    %1055 = vmatpush1.msra.mxu0 0.0
    %1056 = vmatprep.subr.mxu0 0.0
    %1057 = vmatpush1.msra.mxu0 0.0
    %1058 = vmatprep.subr.mxu0 0.0
    %1059 = vmatpush1.msra.mxu0 0.0
    %1060 = vmatprep.subr.mxu0 0.0
    %1061 = vmatpush1.msra.mxu0 0.0
    %1062 = vmatprep.subr.mxu0 0.0
    %1063 = vmatpush1.msra.mxu0 0.0
    %1064 = vmatprep.subr.mxu0 0.0
    %1065 = vmatpush1.msra.mxu0 0.0
    %1066 = vmatprep.subr.mxu0 0.0
    %1067 = vmatpush1.msra.mxu0 0.0
    %1068 = vmatprep.subr.mxu0 0.0
    %1069 = vmatpush1.msra.mxu0 0.0
    %1070 = vmatprep.subr.mxu0 0.0
    %1071 = vmatpush1.msra.mxu0 0.0
    %1072 = vmatprep.mubr.f32.mxu0 0.0
    %1073 = vmatmul.mubr.f32.gmra.mrb[0].mxu0 %v1006
    %v1074 = vpop.f32.mrb[0].mxu0
    %v1075 = vadd.f32 0.0, %v1074
    %v1076 = vpop.f32.mrb[0].mxu0
    %1077 = vdwg.mxu0
    %v1078 = vmax.f32 %v1075, 0.0
    %s1079 = scalar_lea.vmem [#allocation5], 520
    %v1080 = vld [vmem:[%s1079] sm:$0xff]
    %v1081 = vld [vmem:[%s1079 + $0x8] sm:$0xff]
    %v1082 = vld [vmem:[%s1079 + $0x10] sm:$0xff]
    %v1083 = vld [vmem:[%s1079 + $0x18] sm:$0xff]
    %v1084 = vld [vmem:[%s1079 + $0x20] sm:$0xff]
    %v1086 = vsel %vm44, %v1078, 0
    %1088 = vmatprep.subr.mxu0 0.0
    %1089 = vmatpush1.msra.mxu0 %v1080
    %1090 = vmatprep.subr.mxu0 0.0
    %1091 = vmatpush1.msra.mxu0 %v1081
    %1092 = vmatprep.subr.mxu0 0.0
    %1093 = vmatpush1.msra.mxu0 %v1082
    %1094 = vmatprep.subr.mxu0 0.0
    %1095 = vmatpush1.msra.mxu0 %v1083
    %1096 = vmatprep.subr.mxu0 0.0
    %1097 = vmatpush1.msra.mxu0 %v1084
    %1098 = vmatprep.subr.mxu0 0.0
    %1099 = vmatpush1.msra.mxu0 0.0
    %1100 = vmatprep.subr.mxu0 0.0
    %1101 = vmatpush1.msra.mxu0 0.0
    %1102 = vmatprep.subr.mxu0 0.0
    %1103 = vmatpush1.msra.mxu0 0.0
    %1104 = vmatprep.subr.mxu0 0.0
    %1105 = vmatpush1.msra.mxu0 0.0
    %1106 = vmatprep.subr.mxu0 0.0
    %1107 = vmatpush1.msra.mxu0 0.0
    %1108 = vmatprep.subr.mxu0 0.0
    %1109 = vmatpush1.msra.mxu0 0.0
    %1110 = vmatprep.subr.mxu0 0.0
    %1111 = vmatpush1.msra.mxu0 0.0
    %1112 = vmatprep.subr.mxu0 0.0
    %1113 = vmatpush1.msra.mxu0 0.0
    %1114 = vmatprep.subr.mxu0 0.0
    %1115 = vmatpush1.msra.mxu0 0.0
    %1116 = vmatprep.subr.mxu0 0.0
    %1117 = vmatpush1.msra.mxu0 0.0
    %1118 = vmatprep.subr.mxu0 0.0
    %1119 = vmatpush1.msra.mxu0 0.0
    %1120 = vmatprep.subr.mxu0 0.0
    %1121 = vmatpush1.msra.mxu0 0.0
    %1122 = vmatprep.subr.mxu0 0.0
    %1123 = vmatpush1.msra.mxu0 0.0
    %1124 = vmatprep.subr.mxu0 0.0
    %1125 = vmatpush1.msra.mxu0 0.0
    %1126 = vmatprep.subr.mxu0 0.0
    %1127 = vmatpush1.msra.mxu0 0.0
    %1128 = vmatprep.subr.mxu0 0.0
    %1129 = vmatpush1.msra.mxu0 0.0
    %1130 = vmatprep.subr.mxu0 0.0
    %1131 = vmatpush1.msra.mxu0 0.0
    %1132 = vmatprep.subr.mxu0 0.0
    %1133 = vmatpush1.msra.mxu0 0.0
    %1134 = vmatprep.subr.mxu0 0.0
    %1135 = vmatpush1.msra.mxu0 0.0
    %1136 = vmatprep.subr.mxu0 0.0
    %1137 = vmatpush1.msra.mxu0 0.0
    %1138 = vmatprep.subr.mxu0 0.0
    %1139 = vmatpush1.msra.mxu0 0.0
    %1140 = vmatprep.subr.mxu0 0.0
    %1141 = vmatpush1.msra.mxu0 0.0
    %1142 = vmatprep.subr.mxu0 0.0
    %1143 = vmatpush1.msra.mxu0 0.0
    %1144 = vmatprep.subr.mxu0 0.0
    %1145 = vmatpush1.msra.mxu0 0.0
    %1146 = vmatprep.subr.mxu0 0.0
    %1147 = vmatpush1.msra.mxu0 0.0
    %1148 = vmatprep.subr.mxu0 0.0
    %1149 = vmatpush1.msra.mxu0 0.0
    %1150 = vmatprep.subr.mxu0 0.0
    %1151 = vmatpush1.msra.mxu0 0.0
    %1152 = vmatprep.mubr.f32.mxu0 0.0
    %1153 = vmatmul.mubr.f32.gmra.mrb[0].mxu0 %v1086
    %v1154 = vpop.f32.mrb[0].mxu0
    %v1155 = vadd.f32 0.0, %v1154
    %v1156 = vpop.f32.mrb[0].mxu0
    %1157 = vdwg.mxu0
    %v1158 = vmax.f32 %v1155, 0.0
    %s1159 = scalar_lea.vmem [#allocation5], 560
    %v1160 = vld [vmem:[%s1159] sm:$0xff]
    %v1161 = vld [vmem:[%s1159 + $0x8] sm:$0xff]
    %v1162 = vld [vmem:[%s1159 + $0x10] sm:$0xff]
    %v1163 = vld [vmem:[%s1159 + $0x18] sm:$0xff]
    %v1164 = vld [vmem:[%s1159 + $0x20] sm:$0xff]
    %v1166 = vsel %vm44, %v1158, 0
    %1168 = vmatprep.subr.mxu0 0.0
    %1169 = vmatpush1.msra.mxu0 %v1160
    %1170 = vmatprep.subr.mxu0 0.0
    %1171 = vmatpush1.msra.mxu0 %v1161
    %1172 = vmatprep.subr.mxu0 0.0
    %1173 = vmatpush1.msra.mxu0 %v1162
    %1174 = vmatprep.subr.mxu0 0.0
    %1175 = vmatpush1.msra.mxu0 %v1163
    %1176 = vmatprep.subr.mxu0 0.0
    %1177 = vmatpush1.msra.mxu0 %v1164
    %1178 = vmatprep.subr.mxu0 0.0
    %1179 = vmatpush1.msra.mxu0 0.0
    %1180 = vmatprep.subr.mxu0 0.0
    %1181 = vmatpush1.msra.mxu0 0.0
    %1182 = vmatprep.subr.mxu0 0.0
    %1183 = vmatpush1.msra.mxu0 0.0
    %1184 = vmatprep.subr.mxu0 0.0
    %1185 = vmatpush1.msra.mxu0 0.0
    %1186 = vmatprep.subr.mxu0 0.0
    %1187 = vmatpush1.msra.mxu0 0.0
    %1188 = vmatprep.subr.mxu0 0.0
    %1189 = vmatpush1.msra.mxu0 0.0
    %1190 = vmatprep.subr.mxu0 0.0
    %1191 = vmatpush1.msra.mxu0 0.0
    %1192 = vmatprep.subr.mxu0 0.0
    %1193 = vmatpush1.msra.mxu0 0.0
    %1194 = vmatprep.subr.mxu0 0.0
    %1195 = vmatpush1.msra.mxu0 0.0
    %1196 = vmatprep.subr.mxu0 0.0
    %1197 = vmatpush1.msra.mxu0 0.0
    %1198 = vmatprep.subr.mxu0 0.0
    %1199 = vmatpush1.msra.mxu0 0.0
    %1200 = vmatprep.subr.mxu0 0.0
    %1201 = vmatpush1.msra.mxu0 0.0
    %1202 = vmatprep.subr.mxu0 0.0
    %1203 = vmatpush1.msra.mxu0 0.0
    %1204 = vmatprep.subr.mxu0 0.0
    %1205 = vmatpush1.msra.mxu0 0.0
    %1206 = vmatprep.subr.mxu0 0.0
    %1207 = vmatpush1.msra.mxu0 0.0
    %1208 = vmatprep.subr.mxu0 0.0
    %1209 = vmatpush1.msra.mxu0 0.0
    %1210 = vmatprep.subr.mxu0 0.0
    %1211 = vmatpush1.msra.mxu0 0.0
    %1212 = vmatprep.subr.mxu0 0.0
    %1213 = vmatpush1.msra.mxu0 0.0
    %1214 = vmatprep.subr.mxu0 0.0
    %1215 = vmatpush1.msra.mxu0 0.0
    %1216 = vmatprep.subr.mxu0 0.0
    %1217 = vmatpush1.msra.mxu0 0.0
    %1218 = vmatprep.subr.mxu0 0.0
    %1219 = vmatpush1.msra.mxu0 0.0
    %1220 = vmatprep.subr.mxu0 0.0
    %1221 = vmatpush1.msra.mxu0 0.0
    %1222 = vmatprep.subr.mxu0 0.0
    %1223 = vmatpush1.msra.mxu0 0.0
    %1224 = vmatprep.subr.mxu0 0.0
    %1225 = vmatpush1.msra.mxu0 0.0
    %1226 = vmatprep.subr.mxu0 0.0
    %1227 = vmatpush1.msra.mxu0 0.0
    %1228 = vmatprep.subr.mxu0 0.0
    %1229 = vmatpush1.msra.mxu0 0.0
    %1230 = vmatprep.subr.mxu0 0.0
    %1231 = vmatpush1.msra.mxu0 0.0
    %1232 = vmatprep.mubr.f32.mxu0 0.0
    %1233 = vmatmul.mubr.f32.gmra.mrb[0].mxu0 %v1166
    %v1234 = vpop.f32.mrb[0].mxu0
    %v1235 = vadd.f32 0.0, %v1234
    %v1236 = vpop.f32.mrb[0].mxu0
    %1237 = vdwg.mxu0
    %v1238 = vmax.f32 %v1235, 0.0
    %s1239 = scalar_lea.vmem [#allocation5], 600
    %v1240 = vld [vmem:[%s1239] sm:$0xff]
    %v1241 = vld [vmem:[%s1239 + $0x8] sm:$0xff]
    %v1242 = vld [vmem:[%s1239 + $0x10] sm:$0xff]
    %v1243 = vld [vmem:[%s1239 + $0x18] sm:$0xff]
    %v1244 = vld [vmem:[%s1239 + $0x20] sm:$0xff]
    %v1246 = vsel %vm44, %v1238, 0
    %1248 = vmatprep.subr.mxu0 0.0
    %1249 = vmatpush1.msra.mxu0 %v1240
    %1250 = vmatprep.subr.mxu0 0.0
    %1251 = vmatpush1.msra.mxu0 %v1241
    %1252 = vmatprep.subr.mxu0 0.0
    %1253 = vmatpush1.msra.mxu0 %v1242
    %1254 = vmatprep.subr.mxu0 0.0
    %1255 = vmatpush1.msra.mxu0 %v1243
    %1256 = vmatprep.subr.mxu0 0.0
    %1257 = vmatpush1.msra.mxu0 %v1244
    %1258 = vmatprep.subr.mxu0 0.0
    %1259 = vmatpush1.msra.mxu0 0.0
    %1260 = vmatprep.subr.mxu0 0.0
    %1261 = vmatpush1.msra.mxu0 0.0
    %1262 = vmatprep.subr.mxu0 0.0
    %1263 = vmatpush1.msra.mxu0 0.0
    %1264 = vmatprep.subr.mxu0 0.0
    %1265 = vmatpush1.msra.mxu0 0.0
    %1266 = vmatprep.subr.mxu0 0.0
    %1267 = vmatpush1.msra.mxu0 0.0
    %1268 = vmatprep.subr.mxu0 0.0
    %1269 = vmatpush1.msra.mxu0 0.0
    %1270 = vmatprep.subr.mxu0 0.0
    %1271 = vmatpush1.msra.mxu0 0.0
    %1272 = vmatprep.subr.mxu0 0.0
    %1273 = vmatpush1.msra.mxu0 0.0
    %1274 = vmatprep.subr.mxu0 0.0
    %1275 = vmatpush1.msra.mxu0 0.0
    %1276 = vmatprep.subr.mxu0 0.0
    %1277 = vmatpush1.msra.mxu0 0.0
    %1278 = vmatprep.subr.mxu0 0.0
    %1279 = vmatpush1.msra.mxu0 0.0
    %1280 = vmatprep.subr.mxu0 0.0
    %1281 = vmatpush1.msra.mxu0 0.0
    %1282 = vmatprep.subr.mxu0 0.0
    %1283 = vmatpush1.msra.mxu0 0.0
    %1284 = vmatprep.subr.mxu0 0.0
    %1285 = vmatpush1.msra.mxu0 0.0
    %1286 = vmatprep.subr.mxu0 0.0
    %1287 = vmatpush1.msra.mxu0 0.0
    %1288 = vmatprep.subr.mxu0 0.0
    %1289 = vmatpush1.msra.mxu0 0.0
    %1290 = vmatprep.subr.mxu0 0.0
    %1291 = vmatpush1.msra.mxu0 0.0
    %1292 = vmatprep.subr.mxu0 0.0
    %1293 = vmatpush1.msra.mxu0 0.0
    %1294 = vmatprep.subr.mxu0 0.0
    %1295 = vmatpush1.msra.mxu0 0.0
    %1296 = vmatprep.subr.mxu0 0.0
    %1297 = vmatpush1.msra.mxu0 0.0
    %1298 = vmatprep.subr.mxu0 0.0
    %1299 = vmatpush1.msra.mxu0 0.0
    %1300 = vmatprep.subr.mxu0 0.0
    %1301 = vmatpush1.msra.mxu0 0.0
    %1302 = vmatprep.subr.mxu0 0.0
    %1303 = vmatpush1.msra.mxu0 0.0
    %1304 = vmatprep.subr.mxu0 0.0
    %1305 = vmatpush1.msra.mxu0 0.0
    %1306 = vmatprep.subr.mxu0 0.0
    %1307 = vmatpush1.msra.mxu0 0.0
    %1308 = vmatprep.subr.mxu0 0.0
    %1309 = vmatpush1.msra.mxu0 0.0
    %1310 = vmatprep.subr.mxu0 0.0
    %1311 = vmatpush1.msra.mxu0 0.0
    %1312 = vmatprep.mubr.f32.mxu0 0.0
    %1313 = vmatmul.mubr.f32.gmra.mrb[0].mxu0 %v1246
    %v1314 = vpop.f32.mrb[0].mxu0
    %v1315 = vadd.f32 0.0, %v1314
    %v1316 = vpop.f32.mrb[0].mxu0
    %1317 = vdwg.mxu0
    %v1318 = vadd.f32 %v998, %v1315
    %s1319 = scalar_lea.vmem [#allocation5], 640
    %v1320 = vld [vmem:[%s1319] sm:$0xff]
    %v1321 = vld [vmem:[%s1319 + $0x8] sm:$0xff]
    %v1322 = vld [vmem:[%s1319 + $0x10] sm:$0xff]
    %v1323 = vld [vmem:[%s1319 + $0x18] sm:$0xff]
    %v1324 = vld [vmem:[%s1319 + $0x20] sm:$0xff]
    %v1326 = vsel %vm44, %v1318, 0
    %1328 = vmatprep.subr.mxu0 0.0
    %1329 = vmatpush1.msra.mxu0 %v1320
    %1330 = vmatprep.subr.mxu0 0.0
    %1331 = vmatpush1.msra.mxu0 %v1321
    %1332 = vmatprep.subr.mxu0 0.0
    %1333 = vmatpush1.msra.mxu0 %v1322
    %1334 = vmatprep.subr.mxu0 0.0
    %1335 = vmatpush1.msra.mxu0 %v1323
    %1336 = vmatprep.subr.mxu0 0.0
    %1337 = vmatpush1.msra.mxu0 %v1324
    %1338 = vmatprep.subr.mxu0 0.0
    %1339 = vmatpush1.msra.mxu0 0.0
    %1340 = vmatprep.subr.mxu0 0.0
    %1341 = vmatpush1.msra.mxu0 0.0
    %1342 = vmatprep.subr.mxu0 0.0
    %1343 = vmatpush1.msra.mxu0 0.0
    %1344 = vmatprep.subr.mxu0 0.0
    %1345 = vmatpush1.msra.mxu0 0.0
    %1346 = vmatprep.subr.mxu0 0.0
    %1347 = vmatpush1.msra.mxu0 0.0
    %1348 = vmatprep.subr.mxu0 0.0
    %1349 = vmatpush1.msra.mxu0 0.0
    %1350 = vmatprep.subr.mxu0 0.0
    %1351 = vmatpush1.msra.mxu0 0.0
    %1352 = vmatprep.subr.mxu0 0.0
    %1353 = vmatpush1.msra.mxu0 0.0
    %1354 = vmatprep.subr.mxu0 0.0
    %1355 = vmatpush1.msra.mxu0 0.0
    %1356 = vmatprep.subr.mxu0 0.0
    %1357 = vmatpush1.msra.mxu0 0.0
    %1358 = vmatprep.subr.mxu0 0.0
    %1359 = vmatpush1.msra.mxu0 0.0
    %1360 = vmatprep.subr.mxu0 0.0
    %1361 = vmatpush1.msra.mxu0 0.0
    %1362 = vmatprep.subr.mxu0 0.0
    %1363 = vmatpush1.msra.mxu0 0.0
    %1364 = vmatprep.subr.mxu0 0.0
    %1365 = vmatpush1.msra.mxu0 0.0
    %1366 = vmatprep.subr.mxu0 0.0
    %1367 = vmatpush1.msra.mxu0 0.0
    %1368 = vmatprep.subr.mxu0 0.0
    %1369 = vmatpush1.msra.mxu0 0.0
    %1370 = vmatprep.subr.mxu0 0.0
    %1371 = vmatpush1.msra.mxu0 0.0
    %1372 = vmatprep.subr.mxu0 0.0
    %1373 = vmatpush1.msra.mxu0 0.0
    %1374 = vmatprep.subr.mxu0 0.0
    %1375 = vmatpush1.msra.mxu0 0.0
    %1376 = vmatprep.subr.mxu0 0.0
    %1377 = vmatpush1.msra.mxu0 0.0
    %1378 = vmatprep.subr.mxu0 0.0
    %1379 = vmatpush1.msra.mxu0 0.0
    %1380 = vmatprep.subr.mxu0 0.0
    %1381 = vmatpush1.msra.mxu0 0.0
    %1382 = vmatprep.subr.mxu0 0.0
    %1383 = vmatpush1.msra.mxu0 0.0
    %1384 = vmatprep.subr.mxu0 0.0
    %1385 = vmatpush1.msra.mxu0 0.0
    %1386 = vmatprep.subr.mxu0 0.0
    %1387 = vmatpush1.msra.mxu0 0.0
    %1388 = vmatprep.subr.mxu0 0.0
    %1389 = vmatpush1.msra.mxu0 0.0
    %1390 = vmatprep.subr.mxu0 0.0
    %1391 = vmatpush1.msra.mxu0 0.0
    %1392 = vmatprep.mubr.f32.mxu0 0.0
    %1393 = vmatmul.mubr.f32.gmra.mrb[0].mxu0 %v1326
    %v1394 = vpop.f32.mrb[0].mxu0
    %v1395 = vadd.f32 0.0, %v1394
    %v1396 = vpop.f32.mrb[0].mxu0
    %1397 = vdwg.mxu0
    %v1398 = vmax.f32 %v1395, 0.0
    %s1399 = scalar_lea.vmem [#allocation5], 680
    %v1400 = vld [vmem:[%s1399] sm:$0xff]
    %v1401 = vld [vmem:[%s1399 + $0x8] sm:$0xff]
    %v1402 = vld [vmem:[%s1399 + $0x10] sm:$0xff]
    %v1403 = vld [vmem:[%s1399 + $0x18] sm:$0xff]
    %v1404 = vld [vmem:[%s1399 + $0x20] sm:$0xff]
    %v1406 = vsel %vm44, %v1398, 0
    %1408 = vmatprep.subr.mxu0 0.0
    %1409 = vmatpush1.msra.mxu0 %v1400
    %1410 = vmatprep.subr.mxu0 0.0
    %1411 = vmatpush1.msra.mxu0 %v1401
    %1412 = vmatprep.subr.mxu0 0.0
    %1413 = vmatpush1.msra.mxu0 %v1402
    %1414 = vmatprep.subr.mxu0 0.0
    %1415 = vmatpush1.msra.mxu0 %v1403
    %1416 = vmatprep.subr.mxu0 0.0
    %1417 = vmatpush1.msra.mxu0 %v1404
    %1418 = vmatprep.subr.mxu0 0.0
    %1419 = vmatpush1.msra.mxu0 0.0
    %1420 = vmatprep.subr.mxu0 0.0
    %1421 = vmatpush1.msra.mxu0 0.0
    %1422 = vmatprep.subr.mxu0 0.0
    %1423 = vmatpush1.msra.mxu0 0.0
    %1424 = vmatprep.subr.mxu0 0.0
    %1425 = vmatpush1.msra.mxu0 0.0
    %1426 = vmatprep.subr.mxu0 0.0
    %1427 = vmatpush1.msra.mxu0 0.0
    %1428 = vmatprep.subr.mxu0 0.0
    %1429 = vmatpush1.msra.mxu0 0.0
    %1430 = vmatprep.subr.mxu0 0.0
    %1431 = vmatpush1.msra.mxu0 0.0
    %1432 = vmatprep.subr.mxu0 0.0
    %1433 = vmatpush1.msra.mxu0 0.0
    %1434 = vmatprep.subr.mxu0 0.0
    %1435 = vmatpush1.msra.mxu0 0.0
    %1436 = vmatprep.subr.mxu0 0.0
    %1437 = vmatpush1.msra.mxu0 0.0
    %1438 = vmatprep.subr.mxu0 0.0
    %1439 = vmatpush1.msra.mxu0 0.0
    %1440 = vmatprep.subr.mxu0 0.0
    %1441 = vmatpush1.msra.mxu0 0.0
    %1442 = vmatprep.subr.mxu0 0.0
    %1443 = vmatpush1.msra.mxu0 0.0
    %1444 = vmatprep.subr.mxu0 0.0
    %1445 = vmatpush1.msra.mxu0 0.0
    %1446 = vmatprep.subr.mxu0 0.0
    %1447 = vmatpush1.msra.mxu0 0.0
    %1448 = vmatprep.subr.mxu0 0.0
    %1449 = vmatpush1.msra.mxu0 0.0
    %1450 = vmatprep.subr.mxu0 0.0
    %1451 = vmatpush1.msra.mxu0 0.0
    %1452 = vmatprep.subr.mxu0 0.0
    %1453 = vmatpush1.msra.mxu0 0.0
    %1454 = vmatprep.subr.mxu0 0.0
    %1455 = vmatpush1.msra.mxu0 0.0
    %1456 = vmatprep.subr.mxu0 0.0
    %1457 = vmatpush1.msra.mxu0 0.0
    %1458 = vmatprep.subr.mxu0 0.0
    %1459 = vmatpush1.msra.mxu0 0.0
    %1460 = vmatprep.subr.mxu0 0.0
    %1461 = vmatpush1.msra.mxu0 0.0
    %1462 = vmatprep.subr.mxu0 0.0
    %1463 = vmatpush1.msra.mxu0 0.0
    %1464 = vmatprep.subr.mxu0 0.0
    %1465 = vmatpush1.msra.mxu0 0.0
    %1466 = vmatprep.subr.mxu0 0.0
    %1467 = vmatpush1.msra.mxu0 0.0
    %1468 = vmatprep.subr.mxu0 0.0
    %1469 = vmatpush1.msra.mxu0 0.0
    %1470 = vmatprep.subr.mxu0 0.0
    %1471 = vmatpush1.msra.mxu0 0.0
    %1472 = vmatprep.mubr.f32.mxu0 0.0
    %1473 = vmatmul.mubr.f32.gmra.mrb[0].mxu0 %v1406
    %v1474 = vpop.f32.mrb[0].mxu0
    %v1475 = vadd.f32 0.0, %v1474
    %v1476 = vpop.f32.mrb[0].mxu0
    %1477 = vdwg.mxu0
    %v1478 = vmax.f32 %v1475, 0.0
    %s1479 = scalar_lea.vmem [#allocation5], 720
    %v1480 = vld [vmem:[%s1479] sm:$0xff]
    %v1481 = vld [vmem:[%s1479 + $0x8] sm:$0xff]
    %v1482 = vld [vmem:[%s1479 + $0x10] sm:$0xff]
    %v1483 = vld [vmem:[%s1479 + $0x18] sm:$0xff]
    %v1484 = vld [vmem:[%s1479 + $0x20] sm:$0xff]
    %v1486 = vsel %vm44, %v1478, 0
    %1488 = vmatprep.subr.mxu0 0.0
    %1489 = vmatpush1.msra.mxu0 %v1480
    %1490 = vmatprep.subr.mxu0 0.0
    %1491 = vmatpush1.msra.mxu0 %v1481
    %1492 = vmatprep.subr.mxu0 0.0
    %1493 = vmatpush1.msra.mxu0 %v1482
    %1494 = vmatprep.subr.mxu0 0.0
    %1495 = vmatpush1.msra.mxu0 %v1483
    %1496 = vmatprep.subr.mxu0 0.0
    %1497 = vmatpush1.msra.mxu0 %v1484
    %1498 = vmatprep.subr.mxu0 0.0
    %1499 = vmatpush1.msra.mxu0 0.0
    %1500 = vmatprep.subr.mxu0 0.0
    %1501 = vmatpush1.msra.mxu0 0.0
    %1502 = vmatprep.subr.mxu0 0.0
    %1503 = vmatpush1.msra.mxu0 0.0
    %1504 = vmatprep.subr.mxu0 0.0
    %1505 = vmatpush1.msra.mxu0 0.0
    %1506 = vmatprep.subr.mxu0 0.0
    %1507 = vmatpush1.msra.mxu0 0.0
    %1508 = vmatprep.subr.mxu0 0.0
    %1509 = vmatpush1.msra.mxu0 0.0
    %1510 = vmatprep.subr.mxu0 0.0
    %1511 = vmatpush1.msra.mxu0 0.0
    %1512 = vmatprep.subr.mxu0 0.0
    %1513 = vmatpush1.msra.mxu0 0.0
    %1514 = vmatprep.subr.mxu0 0.0
    %1515 = vmatpush1.msra.mxu0 0.0
    %1516 = vmatprep.subr.mxu0 0.0
    %1517 = vmatpush1.msra.mxu0 0.0
    %1518 = vmatprep.subr.mxu0 0.0
    %1519 = vmatpush1.msra.mxu0 0.0
    %1520 = vmatprep.subr.mxu0 0.0
    %1521 = vmatpush1.msra.mxu0 0.0
    %1522 = vmatprep.subr.mxu0 0.0
    %1523 = vmatpush1.msra.mxu0 0.0
    %1524 = vmatprep.subr.mxu0 0.0
    %1525 = vmatpush1.msra.mxu0 0.0
    %1526 = vmatprep.subr.mxu0 0.0
    %1527 = vmatpush1.msra.mxu0 0.0
    %1528 = vmatprep.subr.mxu0 0.0
    %1529 = vmatpush1.msra.mxu0 0.0
    %1530 = vmatprep.subr.mxu0 0.0
    %1531 = vmatpush1.msra.mxu0 0.0
    %1532 = vmatprep.subr.mxu0 0.0
    %1533 = vmatpush1.msra.mxu0 0.0
    %1534 = vmatprep.subr.mxu0 0.0
    %1535 = vmatpush1.msra.mxu0 0.0
    %1536 = vmatprep.subr.mxu0 0.0
    %1537 = vmatpush1.msra.mxu0 0.0
    %1538 = vmatprep.subr.mxu0 0.0
    %1539 = vmatpush1.msra.mxu0 0.0
    %1540 = vmatprep.subr.mxu0 0.0
    %1541 = vmatpush1.msra.mxu0 0.0
    %1542 = vmatprep.subr.mxu0 0.0
    %1543 = vmatpush1.msra.mxu0 0.0
    %1544 = vmatprep.subr.mxu0 0.0
    %1545 = vmatpush1.msra.mxu0 0.0
    %1546 = vmatprep.subr.mxu0 0.0
    %1547 = vmatpush1.msra.mxu0 0.0
    %1548 = vmatprep.subr.mxu0 0.0
    %1549 = vmatpush1.msra.mxu0 0.0
    %1550 = vmatprep.subr.mxu0 0.0
    %1551 = vmatpush1.msra.mxu0 0.0
    %1552 = vmatprep.mubr.f32.mxu0 0.0
    %1553 = vmatmul.mubr.f32.gmra.mrb[0].mxu0 %v1486
    %v1554 = vpop.f32.mrb[0].mxu0
    %v1555 = vadd.f32 0.0, %v1554
    %v1556 = vpop.f32.mrb[0].mxu0
    %1557 = vdwg.mxu0
    %v1558 = vmax.f32 %v1555, 0.0
    %s1559 = scalar_lea.vmem [#allocation5], 760
    %v1560 = vld [vmem:[%s1559] sm:$0xff]
    %v1561 = vld [vmem:[%s1559 + $0x8] sm:$0xff]
    %v1562 = vld [vmem:[%s1559 + $0x10] sm:$0xff]
    %v1563 = vld [vmem:[%s1559 + $0x18] sm:$0xff]
    %v1564 = vld [vmem:[%s1559 + $0x20] sm:$0xff]
    %v1566 = vsel %vm44, %v1558, 0
    %1568 = vmatprep.subr.mxu0 0.0
    %1569 = vmatpush1.msra.mxu0 %v1560
    %1570 = vmatprep.subr.mxu0 0.0
    %1571 = vmatpush1.msra.mxu0 %v1561
    %1572 = vmatprep.subr.mxu0 0.0
    %1573 = vmatpush1.msra.mxu0 %v1562
    %1574 = vmatprep.subr.mxu0 0.0
    %1575 = vmatpush1.msra.mxu0 %v1563
    %1576 = vmatprep.subr.mxu0 0.0
    %1577 = vmatpush1.msra.mxu0 %v1564
    %1578 = vmatprep.subr.mxu0 0.0
    %1579 = vmatpush1.msra.mxu0 0.0
    %1580 = vmatprep.subr.mxu0 0.0
    %1581 = vmatpush1.msra.mxu0 0.0
    %1582 = vmatprep.subr.mxu0 0.0
    %1583 = vmatpush1.msra.mxu0 0.0
    %1584 = vmatprep.subr.mxu0 0.0
    %1585 = vmatpush1.msra.mxu0 0.0
    %1586 = vmatprep.subr.mxu0 0.0
    %1587 = vmatpush1.msra.mxu0 0.0
    %1588 = vmatprep.subr.mxu0 0.0
    %1589 = vmatpush1.msra.mxu0 0.0
    %1590 = vmatprep.subr.mxu0 0.0
    %1591 = vmatpush1.msra.mxu0 0.0
    %1592 = vmatprep.subr.mxu0 0.0
    %1593 = vmatpush1.msra.mxu0 0.0
    %1594 = vmatprep.subr.mxu0 0.0
    %1595 = vmatpush1.msra.mxu0 0.0
    %1596 = vmatprep.subr.mxu0 0.0
    %1597 = vmatpush1.msra.mxu0 0.0
    %1598 = vmatprep.subr.mxu0 0.0
    %1599 = vmatpush1.msra.mxu0 0.0
    %1600 = vmatprep.subr.mxu0 0.0
    %1601 = vmatpush1.msra.mxu0 0.0
    %1602 = vmatprep.subr.mxu0 0.0
    %1603 = vmatpush1.msra.mxu0 0.0
    %1604 = vmatprep.subr.mxu0 0.0
    %1605 = vmatpush1.msra.mxu0 0.0
    %1606 = vmatprep.subr.mxu0 0.0
    %1607 = vmatpush1.msra.mxu0 0.0
    %1608 = vmatprep.subr.mxu0 0.0
    %1609 = vmatpush1.msra.mxu0 0.0
    %1610 = vmatprep.subr.mxu0 0.0
    %1611 = vmatpush1.msra.mxu0 0.0
    %1612 = vmatprep.subr.mxu0 0.0
    %1613 = vmatpush1.msra.mxu0 0.0
    %1614 = vmatprep.subr.mxu0 0.0
    %1615 = vmatpush1.msra.mxu0 0.0
    %1616 = vmatprep.subr.mxu0 0.0
    %1617 = vmatpush1.msra.mxu0 0.0
    %1618 = vmatprep.subr.mxu0 0.0
    %1619 = vmatpush1.msra.mxu0 0.0
    %1620 = vmatprep.subr.mxu0 0.0
    %1621 = vmatpush1.msra.mxu0 0.0
    %1622 = vmatprep.subr.mxu0 0.0
    %1623 = vmatpush1.msra.mxu0 0.0
    %1624 = vmatprep.subr.mxu0 0.0
    %1625 = vmatpush1.msra.mxu0 0.0
    %1626 = vmatprep.subr.mxu0 0.0
    %1627 = vmatpush1.msra.mxu0 0.0
    %1628 = vmatprep.subr.mxu0 0.0
    %1629 = vmatpush1.msra.mxu0 0.0
    %1630 = vmatprep.subr.mxu0 0.0
    %1631 = vmatpush1.msra.mxu0 0.0
    %1632 = vmatprep.mubr.f32.mxu0 0.0
    %1633 = vmatmul.mubr.f32.gmra.mrb[0].mxu0 %v1566
    %v1634 = vpop.f32.mrb[0].mxu0
    %v1635 = vadd.f32 0.0, %v1634
    %v1636 = vpop.f32.mrb[0].mxu0
    %1637 = vdwg.mxu0
    %v1638 = vadd.f32 %v1318, %v1635
    %s1639 = scalar_lea.vmem [#allocation5], 800
    %v1640 = vld [vmem:[%s1639] sm:$0xff]
    %v1641 = vld [vmem:[%s1639 + $0x8] sm:$0xff]
    %v1642 = vld [vmem:[%s1639 + $0x10] sm:$0xff]
    %v1643 = vld [vmem:[%s1639 + $0x18] sm:$0xff]
    %v1644 = vld [vmem:[%s1639 + $0x20] sm:$0xff]
    %v1646 = vsel %vm44, %v1638, 0
    %1648 = vmatprep.subr.mxu0 0.0
    %1649 = vmatpush1.msra.mxu0 %v1640
    %1650 = vmatprep.subr.mxu0 0.0
    %1651 = vmatpush1.msra.mxu0 %v1641
    %1652 = vmatprep.subr.mxu0 0.0
    %1653 = vmatpush1.msra.mxu0 %v1642
    %1654 = vmatprep.subr.mxu0 0.0
    %1655 = vmatpush1.msra.mxu0 %v1643
    %1656 = vmatprep.subr.mxu0 0.0
    %1657 = vmatpush1.msra.mxu0 %v1644
    %1658 = vmatprep.subr.mxu0 0.0
    %1659 = vmatpush1.msra.mxu0 0.0
    %1660 = vmatprep.subr.mxu0 0.0
    %1661 = vmatpush1.msra.mxu0 0.0
    %1662 = vmatprep.subr.mxu0 0.0
    %1663 = vmatpush1.msra.mxu0 0.0
    %1664 = vmatprep.subr.mxu0 0.0
    %1665 = vmatpush1.msra.mxu0 0.0
    %1666 = vmatprep.subr.mxu0 0.0
    %1667 = vmatpush1.msra.mxu0 0.0
    %1668 = vmatprep.subr.mxu0 0.0
    %1669 = vmatpush1.msra.mxu0 0.0
    %1670 = vmatprep.subr.mxu0 0.0
    %1671 = vmatpush1.msra.mxu0 0.0
    %1672 = vmatprep.subr.mxu0 0.0
    %1673 = vmatpush1.msra.mxu0 0.0
    %1674 = vmatprep.subr.mxu0 0.0
    %1675 = vmatpush1.msra.mxu0 0.0
    %1676 = vmatprep.subr.mxu0 0.0
    %1677 = vmatpush1.msra.mxu0 0.0
    %1678 = vmatprep.subr.mxu0 0.0
    %1679 = vmatpush1.msra.mxu0 0.0
    %1680 = vmatprep.subr.mxu0 0.0
    %1681 = vmatpush1.msra.mxu0 0.0
    %1682 = vmatprep.subr.mxu0 0.0
    %1683 = vmatpush1.msra.mxu0 0.0
    %1684 = vmatprep.subr.mxu0 0.0
    %1685 = vmatpush1.msra.mxu0 0.0
    %1686 = vmatprep.subr.mxu0 0.0
    %1687 = vmatpush1.msra.mxu0 0.0
    %1688 = vmatprep.subr.mxu0 0.0
    %1689 = vmatpush1.msra.mxu0 0.0
    %1690 = vmatprep.subr.mxu0 0.0
    %1691 = vmatpush1.msra.mxu0 0.0
    %1692 = vmatprep.subr.mxu0 0.0
    %1693 = vmatpush1.msra.mxu0 0.0
    %1694 = vmatprep.subr.mxu0 0.0
    %1695 = vmatpush1.msra.mxu0 0.0
    %1696 = vmatprep.subr.mxu0 0.0
    %1697 = vmatpush1.msra.mxu0 0.0
    %1698 = vmatprep.subr.mxu0 0.0
    %1699 = vmatpush1.msra.mxu0 0.0
    %1700 = vmatprep.subr.mxu0 0.0
    %1701 = vmatpush1.msra.mxu0 0.0
    %1702 = vmatprep.subr.mxu0 0.0
    %1703 = vmatpush1.msra.mxu0 0.0
    %1704 = vmatprep.subr.mxu0 0.0
    %1705 = vmatpush1.msra.mxu0 0.0
    %1706 = vmatprep.subr.mxu0 0.0
    %1707 = vmatpush1.msra.mxu0 0.0
    %1708 = vmatprep.subr.mxu0 0.0
    %1709 = vmatpush1.msra.mxu0 0.0
    %1710 = vmatprep.subr.mxu0 0.0
    %1711 = vmatpush1.msra.mxu0 0.0
    %1712 = vmatprep.mubr.f32.mxu0 0.0
    %1713 = vmatmul.mubr.f32.gmra.mrb[0].mxu0 %v1646
    %v1714 = vpop.f32.mrb[0].mxu0
    %v1715 = vadd.f32 0.0, %v1714
    %v1716 = vpop.f32.mrb[0].mxu0
    %1717 = vdwg.mxu0
    %v1718 = vmax.f32 %v1715, 0.0
    %s1719 = scalar_lea.vmem [#allocation5], 840
    %v1720 = vld [vmem:[%s1719] sm:$0xff]
    %v1721 = vld [vmem:[%s1719 + $0x8] sm:$0xff]
    %v1722 = vld [vmem:[%s1719 + $0x10] sm:$0xff]
    %v1723 = vld [vmem:[%s1719 + $0x18] sm:$0xff]
    %v1724 = vld [vmem:[%s1719 + $0x20] sm:$0xff]
    %v1726 = vsel %vm44, %v1718, 0
    %1728 = vmatprep.subr.mxu0 0.0
    %1729 = vmatpush1.msra.mxu0 %v1720
    %1730 = vmatprep.subr.mxu0 0.0
    %1731 = vmatpush1.msra.mxu0 %v1721
    %1732 = vmatprep.subr.mxu0 0.0
    %1733 = vmatpush1.msra.mxu0 %v1722
    %1734 = vmatprep.subr.mxu0 0.0
    %1735 = vmatpush1.msra.mxu0 %v1723
    %1736 = vmatprep.subr.mxu0 0.0
    %1737 = vmatpush1.msra.mxu0 %v1724
    %1738 = vmatprep.subr.mxu0 0.0
    %1739 = vmatpush1.msra.mxu0 0.0
    %1740 = vmatprep.subr.mxu0 0.0
    %1741 = vmatpush1.msra.mxu0 0.0
    %1742 = vmatprep.subr.mxu0 0.0
    %1743 = vmatpush1.msra.mxu0 0.0
    %1744 = vmatprep.subr.mxu0 0.0
    %1745 = vmatpush1.msra.mxu0 0.0
    %1746 = vmatprep.subr.mxu0 0.0
    %1747 = vmatpush1.msra.mxu0 0.0
    %1748 = vmatprep.subr.mxu0 0.0
    %1749 = vmatpush1.msra.mxu0 0.0
    %1750 = vmatprep.subr.mxu0 0.0
    %1751 = vmatpush1.msra.mxu0 0.0
    %1752 = vmatprep.subr.mxu0 0.0
    %1753 = vmatpush1.msra.mxu0 0.0
    %1754 = vmatprep.subr.mxu0 0.0
    %1755 = vmatpush1.msra.mxu0 0.0
    %1756 = vmatprep.subr.mxu0 0.0
    %1757 = vmatpush1.msra.mxu0 0.0
    %1758 = vmatprep.subr.mxu0 0.0
    %1759 = vmatpush1.msra.mxu0 0.0
    %1760 = vmatprep.subr.mxu0 0.0
    %1761 = vmatpush1.msra.mxu0 0.0
    %1762 = vmatprep.subr.mxu0 0.0
    %1763 = vmatpush1.msra.mxu0 0.0
    %1764 = vmatprep.subr.mxu0 0.0
    %1765 = vmatpush1.msra.mxu0 0.0
    %1766 = vmatprep.subr.mxu0 0.0
    %1767 = vmatpush1.msra.mxu0 0.0
    %1768 = vmatprep.subr.mxu0 0.0
    %1769 = vmatpush1.msra.mxu0 0.0
    %1770 = vmatprep.subr.mxu0 0.0
    %1771 = vmatpush1.msra.mxu0 0.0
    %1772 = vmatprep.subr.mxu0 0.0
    %1773 = vmatpush1.msra.mxu0 0.0
    %1774 = vmatprep.subr.mxu0 0.0
    %1775 = vmatpush1.msra.mxu0 0.0
    %1776 = vmatprep.subr.mxu0 0.0
    %1777 = vmatpush1.msra.mxu0 0.0
    %1778 = vmatprep.subr.mxu0 0.0
    %1779 = vmatpush1.msra.mxu0 0.0
    %1780 = vmatprep.subr.mxu0 0.0
    %1781 = vmatpush1.msra.mxu0 0.0
    %1782 = vmatprep.subr.mxu0 0.0
    %1783 = vmatpush1.msra.mxu0 0.0
    %1784 = vmatprep.subr.mxu0 0.0
    %1785 = vmatpush1.msra.mxu0 0.0
    %1786 = vmatprep.subr.mxu0 0.0
    %1787 = vmatpush1.msra.mxu0 0.0
    %1788 = vmatprep.subr.mxu0 0.0
    %1789 = vmatpush1.msra.mxu0 0.0
    %1790 = vmatprep.subr.mxu0 0.0
    %1791 = vmatpush1.msra.mxu0 0.0
    %1792 = vmatprep.mubr.f32.mxu0 0.0
    %1793 = vmatmul.mubr.f32.gmra.mrb[0].mxu0 %v1726
    %v1794 = vpop.f32.mrb[0].mxu0
    %v1795 = vadd.f32 0.0, %v1794
    %v1796 = vpop.f32.mrb[0].mxu0
    %1797 = vdwg.mxu0
    %v1798 = vmax.f32 %v1795, 0.0
    %s1799 = scalar_lea.vmem [#allocation5], 880
    %v1800 = vld [vmem:[%s1799] sm:$0xff]
    %v1801 = vld [vmem:[%s1799 + $0x8] sm:$0xff]
    %v1802 = vld [vmem:[%s1799 + $0x10] sm:$0xff]
    %v1803 = vld [vmem:[%s1799 + $0x18] sm:$0xff]
    %v1804 = vld [vmem:[%s1799 + $0x20] sm:$0xff]
    %v1806 = vsel %vm44, %v1798, 0
    %1808 = vmatprep.subr.mxu0 0.0
    %1809 = vmatpush1.msra.mxu0 %v1800
    %1810 = vmatprep.subr.mxu0 0.0
    %1811 = vmatpush1.msra.mxu0 %v1801
    %1812 = vmatprep.subr.mxu0 0.0
    %1813 = vmatpush1.msra.mxu0 %v1802
    %1814 = vmatprep.subr.mxu0 0.0
    %1815 = vmatpush1.msra.mxu0 %v1803
    %1816 = vmatprep.subr.mxu0 0.0
    %1817 = vmatpush1.msra.mxu0 %v1804
    %1818 = vmatprep.subr.mxu0 0.0
    %1819 = vmatpush1.msra.mxu0 0.0
    %1820 = vmatprep.subr.mxu0 0.0
    %1821 = vmatpush1.msra.mxu0 0.0
    %1822 = vmatprep.subr.mxu0 0.0
    %1823 = vmatpush1.msra.mxu0 0.0
    %1824 = vmatprep.subr.mxu0 0.0
    %1825 = vmatpush1.msra.mxu0 0.0
    %1826 = vmatprep.subr.mxu0 0.0
    %1827 = vmatpush1.msra.mxu0 0.0
    %1828 = vmatprep.subr.mxu0 0.0
    %1829 = vmatpush1.msra.mxu0 0.0
    %1830 = vmatprep.subr.mxu0 0.0
    %1831 = vmatpush1.msra.mxu0 0.0
    %1832 = vmatprep.subr.mxu0 0.0
    %1833 = vmatpush1.msra.mxu0 0.0
    %1834 = vmatprep.subr.mxu0 0.0
    %1835 = vmatpush1.msra.mxu0 0.0
    %1836 = vmatprep.subr.mxu0 0.0
    %1837 = vmatpush1.msra.mxu0 0.0
    %1838 = vmatprep.subr.mxu0 0.0
    %1839 = vmatpush1.msra.mxu0 0.0
    %1840 = vmatprep.subr.mxu0 0.0
    %1841 = vmatpush1.msra.mxu0 0.0
    %1842 = vmatprep.subr.mxu0 0.0
    %1843 = vmatpush1.msra.mxu0 0.0
    %1844 = vmatprep.subr.mxu0 0.0
    %1845 = vmatpush1.msra.mxu0 0.0
    %1846 = vmatprep.subr.mxu0 0.0
    %1847 = vmatpush1.msra.mxu0 0.0
    %1848 = vmatprep.subr.mxu0 0.0
    %1849 = vmatpush1.msra.mxu0 0.0
    %1850 = vmatprep.subr.mxu0 0.0
    %1851 = vmatpush1.msra.mxu0 0.0
    %1852 = vmatprep.subr.mxu0 0.0
    %1853 = vmatpush1.msra.mxu0 0.0
    %1854 = vmatprep.subr.mxu0 0.0
    %1855 = vmatpush1.msra.mxu0 0.0
    %1856 = vmatprep.subr.mxu0 0.0
    %1857 = vmatpush1.msra.mxu0 0.0
    %1858 = vmatprep.subr.mxu0 0.0
    %1859 = vmatpush1.msra.mxu0 0.0
    %1860 = vmatprep.subr.mxu0 0.0
    %1861 = vmatpush1.msra.mxu0 0.0
    %1862 = vmatprep.subr.mxu0 0.0
    %1863 = vmatpush1.msra.mxu0 0.0
    %1864 = vmatprep.subr.mxu0 0.0
    %1865 = vmatpush1.msra.mxu0 0.0
    %1866 = vmatprep.subr.mxu0 0.0
    %1867 = vmatpush1.msra.mxu0 0.0
    %1868 = vmatprep.subr.mxu0 0.0
    %1869 = vmatpush1.msra.mxu0 0.0
    %1870 = vmatprep.subr.mxu0 0.0
    %1871 = vmatpush1.msra.mxu0 0.0
    %1872 = vmatprep.mubr.f32.mxu0 0.0
    %1873 = vmatmul.mubr.f32.gmra.mrb[0].mxu0 %v1806
    %v1874 = vpop.f32.mrb[0].mxu0
    %v1875 = vadd.f32 0.0, %v1874
    %v1876 = vpop.f32.mrb[0].mxu0
    %1877 = vdwg.mxu0
    %v1878 = vmax.f32 %v1875, 0.0
    %s1879 = scalar_lea.vmem [#allocation5], 920
    %v1880 = vld [vmem:[%s1879] sm:$0xff]
    %v1881 = vld [vmem:[%s1879 + $0x8] sm:$0xff]
    %v1882 = vld [vmem:[%s1879 + $0x10] sm:$0xff]
    %v1883 = vld [vmem:[%s1879 + $0x18] sm:$0xff]
    %v1884 = vld [vmem:[%s1879 + $0x20] sm:$0xff]
    %v1886 = vsel %vm44, %v1878, 0
    %1888 = vmatprep.subr.mxu0 0.0
    %1889 = vmatpush1.msra.mxu0 %v1880
    %1890 = vmatprep.subr.mxu0 0.0
    %1891 = vmatpush1.msra.mxu0 %v1881
    %1892 = vmatprep.subr.mxu0 0.0
    %1893 = vmatpush1.msra.mxu0 %v1882
    %1894 = vmatprep.subr.mxu0 0.0
    %1895 = vmatpush1.msra.mxu0 %v1883
    %1896 = vmatprep.subr.mxu0 0.0
    %1897 = vmatpush1.msra.mxu0 %v1884
    %1898 = vmatprep.subr.mxu0 0.0
    %1899 = vmatpush1.msra.mxu0 0.0
    %1900 = vmatprep.subr.mxu0 0.0
    %1901 = vmatpush1.msra.mxu0 0.0
    %1902 = vmatprep.subr.mxu0 0.0
    %1903 = vmatpush1.msra.mxu0 0.0
    %1904 = vmatprep.subr.mxu0 0.0
    %1905 = vmatpush1.msra.mxu0 0.0
    %1906 = vmatprep.subr.mxu0 0.0
    %1907 = vmatpush1.msra.mxu0 0.0
    %1908 = vmatprep.subr.mxu0 0.0
    %1909 = vmatpush1.msra.mxu0 0.0
    %1910 = vmatprep.subr.mxu0 0.0
    %1911 = vmatpush1.msra.mxu0 0.0
    %1912 = vmatprep.subr.mxu0 0.0
    %1913 = vmatpush1.msra.mxu0 0.0
    %1914 = vmatprep.subr.mxu0 0.0
    %1915 = vmatpush1.msra.mxu0 0.0
    %1916 = vmatprep.subr.mxu0 0.0
    %1917 = vmatpush1.msra.mxu0 0.0
    %1918 = vmatprep.subr.mxu0 0.0
    %1919 = vmatpush1.msra.mxu0 0.0
    %1920 = vmatprep.subr.mxu0 0.0
    %1921 = vmatpush1.msra.mxu0 0.0
    %1922 = vmatprep.subr.mxu0 0.0
    %1923 = vmatpush1.msra.mxu0 0.0
    %1924 = vmatprep.subr.mxu0 0.0
    %1925 = vmatpush1.msra.mxu0 0.0
    %1926 = vmatprep.subr.mxu0 0.0
    %1927 = vmatpush1.msra.mxu0 0.0
    %1928 = vmatprep.subr.mxu0 0.0
    %1929 = vmatpush1.msra.mxu0 0.0
    %1930 = vmatprep.subr.mxu0 0.0
    %1931 = vmatpush1.msra.mxu0 0.0
    %1932 = vmatprep.subr.mxu0 0.0
    %1933 = vmatpush1.msra.mxu0 0.0
    %1934 = vmatprep.subr.mxu0 0.0
    %1935 = vmatpush1.msra.mxu0 0.0
    %1936 = vmatprep.subr.mxu0 0.0
    %1937 = vmatpush1.msra.mxu0 0.0
    %1938 = vmatprep.subr.mxu0 0.0
    %1939 = vmatpush1.msra.mxu0 0.0
    %1940 = vmatprep.subr.mxu0 0.0
    %1941 = vmatpush1.msra.mxu0 0.0
    %1942 = vmatprep.subr.mxu0 0.0
    %1943 = vmatpush1.msra.mxu0 0.0
    %1944 = vmatprep.subr.mxu0 0.0
    %1945 = vmatpush1.msra.mxu0 0.0
    %1946 = vmatprep.subr.mxu0 0.0
    %1947 = vmatpush1.msra.mxu0 0.0
    %1948 = vmatprep.subr.mxu0 0.0
    %1949 = vmatpush1.msra.mxu0 0.0
    %1950 = vmatprep.subr.mxu0 0.0
    %1951 = vmatpush1.msra.mxu0 0.0
    %1952 = vmatprep.mubr.f32.mxu0 0.0
    %1953 = vmatmul.mubr.f32.gmra.mrb[0].mxu0 %v1886
    %v1954 = vpop.f32.mrb[0].mxu0
    %v1955 = vadd.f32 0.0, %v1954
    %v1956 = vpop.f32.mrb[0].mxu0
    %1957 = vdwg.mxu0
    %v1958 = vadd.f32 %v1638, %v1955
    %s1959 = scalar_lea.vmem [#allocation5], 960
    %v1960 = vld [vmem:[%s1959] sm:$0xff]
    %v1961 = vld [vmem:[%s1959 + $0x8] sm:$0xff]
    %v1962 = vld [vmem:[%s1959 + $0x10] sm:$0xff]
    %v1963 = vld [vmem:[%s1959 + $0x18] sm:$0xff]
    %v1964 = vld [vmem:[%s1959 + $0x20] sm:$0xff]
    %v1966 = vsel %vm44, %v1958, 0
    %1968 = vmatprep.subr.mxu0 0.0
    %1969 = vmatpush1.msra.mxu0 %v1960
    %1970 = vmatprep.subr.mxu0 0.0
    %1971 = vmatpush1.msra.mxu0 %v1961
    %1972 = vmatprep.subr.mxu0 0.0
    %1973 = vmatpush1.msra.mxu0 %v1962
    %1974 = vmatprep.subr.mxu0 0.0
    %1975 = vmatpush1.msra.mxu0 %v1963
    %1976 = vmatprep.subr.mxu0 0.0
    %1977 = vmatpush1.msra.mxu0 %v1964
    %1978 = vmatprep.subr.mxu0 0.0
    %1979 = vmatpush1.msra.mxu0 0.0
    %1980 = vmatprep.subr.mxu0 0.0
    %1981 = vmatpush1.msra.mxu0 0.0
    %1982 = vmatprep.subr.mxu0 0.0
    %1983 = vmatpush1.msra.mxu0 0.0
    %1984 = vmatprep.subr.mxu0 0.0
    %1985 = vmatpush1.msra.mxu0 0.0
    %1986 = vmatprep.subr.mxu0 0.0
    %1987 = vmatpush1.msra.mxu0 0.0
    %1988 = vmatprep.subr.mxu0 0.0
    %1989 = vmatpush1.msra.mxu0 0.0
    %1990 = vmatprep.subr.mxu0 0.0
    %1991 = vmatpush1.msra.mxu0 0.0
    %1992 = vmatprep.subr.mxu0 0.0
    %1993 = vmatpush1.msra.mxu0 0.0
    %1994 = vmatprep.subr.mxu0 0.0
    %1995 = vmatpush1.msra.mxu0 0.0
    %1996 = vmatprep.subr.mxu0 0.0
    %1997 = vmatpush1.msra.mxu0 0.0
    %1998 = vmatprep.subr.mxu0 0.0
    %1999 = vmatpush1.msra.mxu0 0.0
    %2000 = vmatprep.subr.mxu0 0.0
    %2001 = vmatpush1.msra.mxu0 0.0
    %2002 = vmatprep.subr.mxu0 0.0
    %2003 = vmatpush1.msra.mxu0 0.0
    %2004 = vmatprep.subr.mxu0 0.0
    %2005 = vmatpush1.msra.mxu0 0.0
    %2006 = vmatprep.subr.mxu0 0.0
    %2007 = vmatpush1.msra.mxu0 0.0
    %2008 = vmatprep.subr.mxu0 0.0
    %2009 = vmatpush1.msra.mxu0 0.0
    %2010 = vmatprep.subr.mxu0 0.0
    %2011 = vmatpush1.msra.mxu0 0.0
    %2012 = vmatprep.subr.mxu0 0.0
    %2013 = vmatpush1.msra.mxu0 0.0
    %2014 = vmatprep.subr.mxu0 0.0
    %2015 = vmatpush1.msra.mxu0 0.0
    %2016 = vmatprep.subr.mxu0 0.0
    %2017 = vmatpush1.msra.mxu0 0.0
    %2018 = vmatprep.subr.mxu0 0.0
    %2019 = vmatpush1.msra.mxu0 0.0
    %2020 = vmatprep.subr.mxu0 0.0
    %2021 = vmatpush1.msra.mxu0 0.0
    %2022 = vmatprep.subr.mxu0 0.0
    %2023 = vmatpush1.msra.mxu0 0.0
    %2024 = vmatprep.subr.mxu0 0.0
    %2025 = vmatpush1.msra.mxu0 0.0
    %2026 = vmatprep.subr.mxu0 0.0
    %2027 = vmatpush1.msra.mxu0 0.0
    %2028 = vmatprep.subr.mxu0 0.0
    %2029 = vmatpush1.msra.mxu0 0.0
    %2030 = vmatprep.subr.mxu0 0.0
    %2031 = vmatpush1.msra.mxu0 0.0
    %2032 = vmatprep.mubr.f32.mxu0 0.0
    %2033 = vmatmul.mubr.f32.gmra.mrb[0].mxu0 %v1966
    %v2034 = vpop.f32.mrb[0].mxu0
    %v2035 = vadd.f32 0.0, %v2034
    %v2036 = vpop.f32.mrb[0].mxu0
    %2037 = vdwg.mxu0
    %v2038 = vmax.f32 %v2035, 0.0
    %s2039 = scalar_lea.vmem [#allocation5], 1000
    %v2040 = vld [vmem:[%s2039] sm:$0xff]
    %v2041 = vld [vmem:[%s2039 + $0x8] sm:$0xff]
    %v2042 = vld [vmem:[%s2039 + $0x10] sm:$0xff]
    %v2043 = vld [vmem:[%s2039 + $0x18] sm:$0xff]
    %v2044 = vld [vmem:[%s2039 + $0x20] sm:$0xff]
    %v2046 = vsel %vm44, %v2038, 0
    %2048 = vmatprep.subr.mxu0 0.0
    %2049 = vmatpush1.msra.mxu0 %v2040
    %2050 = vmatprep.subr.mxu0 0.0
    %2051 = vmatpush1.msra.mxu0 %v2041
    %2052 = vmatprep.subr.mxu0 0.0
    %2053 = vmatpush1.msra.mxu0 %v2042
    %2054 = vmatprep.subr.mxu0 0.0
    %2055 = vmatpush1.msra.mxu0 %v2043
    %2056 = vmatprep.subr.mxu0 0.0
    %2057 = vmatpush1.msra.mxu0 %v2044
    %2058 = vmatprep.subr.mxu0 0.0
    %2059 = vmatpush1.msra.mxu0 0.0
    %2060 = vmatprep.subr.mxu0 0.0
    %2061 = vmatpush1.msra.mxu0 0.0
    %2062 = vmatprep.subr.mxu0 0.0
    %2063 = vmatpush1.msra.mxu0 0.0
    %2064 = vmatprep.subr.mxu0 0.0
    %2065 = vmatpush1.msra.mxu0 0.0
    %2066 = vmatprep.subr.mxu0 0.0
    %2067 = vmatpush1.msra.mxu0 0.0
    %2068 = vmatprep.subr.mxu0 0.0
    %2069 = vmatpush1.msra.mxu0 0.0
    %2070 = vmatprep.subr.mxu0 0.0
    %2071 = vmatpush1.msra.mxu0 0.0
    %2072 = vmatprep.subr.mxu0 0.0
    %2073 = vmatpush1.msra.mxu0 0.0
    %2074 = vmatprep.subr.mxu0 0.0
    %2075 = vmatpush1.msra.mxu0 0.0
    %2076 = vmatprep.subr.mxu0 0.0
    %2077 = vmatpush1.msra.mxu0 0.0
    %2078 = vmatprep.subr.mxu0 0.0
    %2079 = vmatpush1.msra.mxu0 0.0
    %2080 = vmatprep.subr.mxu0 0.0
    %2081 = vmatpush1.msra.mxu0 0.0
    %2082 = vmatprep.subr.mxu0 0.0
    %2083 = vmatpush1.msra.mxu0 0.0
    %2084 = vmatprep.subr.mxu0 0.0
    %2085 = vmatpush1.msra.mxu0 0.0
    %2086 = vmatprep.subr.mxu0 0.0
    %2087 = vmatpush1.msra.mxu0 0.0
    %2088 = vmatprep.subr.mxu0 0.0
    %2089 = vmatpush1.msra.mxu0 0.0
    %2090 = vmatprep.subr.mxu0 0.0
    %2091 = vmatpush1.msra.mxu0 0.0
    %2092 = vmatprep.subr.mxu0 0.0
    %2093 = vmatpush1.msra.mxu0 0.0
    %2094 = vmatprep.subr.mxu0 0.0
    %2095 = vmatpush1.msra.mxu0 0.0
    %2096 = vmatprep.subr.mxu0 0.0
    %2097 = vmatpush1.msra.mxu0 0.0
    %2098 = vmatprep.subr.mxu0 0.0
    %2099 = vmatpush1.msra.mxu0 0.0
    %2100 = vmatprep.subr.mxu0 0.0
    %2101 = vmatpush1.msra.mxu0 0.0
    %2102 = vmatprep.subr.mxu0 0.0
    %2103 = vmatpush1.msra.mxu0 0.0
    %2104 = vmatprep.subr.mxu0 0.0
    %2105 = vmatpush1.msra.mxu0 0.0
    %2106 = vmatprep.subr.mxu0 0.0
    %2107 = vmatpush1.msra.mxu0 0.0
    %2108 = vmatprep.subr.mxu0 0.0
    %2109 = vmatpush1.msra.mxu0 0.0
    %2110 = vmatprep.subr.mxu0 0.0
    %2111 = vmatpush1.msra.mxu0 0.0
    %2112 = vmatprep.mubr.f32.mxu0 0.0
    %2113 = vmatmul.mubr.f32.gmra.mrb[0].mxu0 %v2046
    %v2114 = vpop.f32.mrb[0].mxu0
    %v2115 = vadd.f32 0.0, %v2114
    %v2116 = vpop.f32.mrb[0].mxu0
    %2117 = vdwg.mxu0
    %v2118 = vmax.f32 %v2115, 0.0
    %s2119 = scalar_lea.vmem [#allocation5], 1040
    %v2120 = vld [vmem:[%s2119] sm:$0xff]
    %v2121 = vld [vmem:[%s2119 + $0x8] sm:$0xff]
    %v2122 = vld [vmem:[%s2119 + $0x10] sm:$0xff]
    %v2123 = vld [vmem:[%s2119 + $0x18] sm:$0xff]
    %v2124 = vld [vmem:[%s2119 + $0x20] sm:$0xff]
    %v2126 = vsel %vm44, %v2118, 0
    %2128 = vmatprep.subr.mxu0 0.0
    %2129 = vmatpush1.msra.mxu0 %v2120
    %2130 = vmatprep.subr.mxu0 0.0
    %2131 = vmatpush1.msra.mxu0 %v2121
    %2132 = vmatprep.subr.mxu0 0.0
    %2133 = vmatpush1.msra.mxu0 %v2122
    %2134 = vmatprep.subr.mxu0 0.0
    %2135 = vmatpush1.msra.mxu0 %v2123
    %2136 = vmatprep.subr.mxu0 0.0
    %2137 = vmatpush1.msra.mxu0 %v2124
    %2138 = vmatprep.subr.mxu0 0.0
    %2139 = vmatpush1.msra.mxu0 0.0
    %2140 = vmatprep.subr.mxu0 0.0
    %2141 = vmatpush1.msra.mxu0 0.0
    %2142 = vmatprep.subr.mxu0 0.0
    %2143 = vmatpush1.msra.mxu0 0.0
    %2144 = vmatprep.subr.mxu0 0.0
    %2145 = vmatpush1.msra.mxu0 0.0
    %2146 = vmatprep.subr.mxu0 0.0
    %2147 = vmatpush1.msra.mxu0 0.0
    %2148 = vmatprep.subr.mxu0 0.0
    %2149 = vmatpush1.msra.mxu0 0.0
    %2150 = vmatprep.subr.mxu0 0.0
    %2151 = vmatpush1.msra.mxu0 0.0
    %2152 = vmatprep.subr.mxu0 0.0
    %2153 = vmatpush1.msra.mxu0 0.0
    %2154 = vmatprep.subr.mxu0 0.0
    %2155 = vmatpush1.msra.mxu0 0.0
    %2156 = vmatprep.subr.mxu0 0.0
    %2157 = vmatpush1.msra.mxu0 0.0
    %2158 = vmatprep.subr.mxu0 0.0
    %2159 = vmatpush1.msra.mxu0 0.0
    %2160 = vmatprep.subr.mxu0 0.0
    %2161 = vmatpush1.msra.mxu0 0.0
    %2162 = vmatprep.subr.mxu0 0.0
    %2163 = vmatpush1.msra.mxu0 0.0
    %2164 = vmatprep.subr.mxu0 0.0
    %2165 = vmatpush1.msra.mxu0 0.0
    %2166 = vmatprep.subr.mxu0 0.0
    %2167 = vmatpush1.msra.mxu0 0.0
    %2168 = vmatprep.subr.mxu0 0.0
    %2169 = vmatpush1.msra.mxu0 0.0
    %2170 = vmatprep.subr.mxu0 0.0
    %2171 = vmatpush1.msra.mxu0 0.0
    %2172 = vmatprep.subr.mxu0 0.0
    %2173 = vmatpush1.msra.mxu0 0.0
    %2174 = vmatprep.subr.mxu0 0.0
    %2175 = vmatpush1.msra.mxu0 0.0
    %2176 = vmatprep.subr.mxu0 0.0
    %2177 = vmatpush1.msra.mxu0 0.0
    %2178 = vmatprep.subr.mxu0 0.0
    %2179 = vmatpush1.msra.mxu0 0.0
    %2180 = vmatprep.subr.mxu0 0.0
    %2181 = vmatpush1.msra.mxu0 0.0
    %2182 = vmatprep.subr.mxu0 0.0
    %2183 = vmatpush1.msra.mxu0 0.0
    %2184 = vmatprep.subr.mxu0 0.0
    %2185 = vmatpush1.msra.mxu0 0.0
    %2186 = vmatprep.subr.mxu0 0.0
    %2187 = vmatpush1.msra.mxu0 0.0
    %2188 = vmatprep.subr.mxu0 0.0
    %2189 = vmatpush1.msra.mxu0 0.0
    %2190 = vmatprep.subr.mxu0 0.0
    %2191 = vmatpush1.msra.mxu0 0.0
    %2192 = vmatprep.mubr.f32.mxu0 0.0
    %2193 = vmatmul.mubr.f32.gmra.mrb[0].mxu0 %v2126
    %v2194 = vpop.f32.mrb[0].mxu0
    %v2195 = vadd.f32 0.0, %v2194
    %v2196 = vpop.f32.mrb[0].mxu0
    %2197 = vdwg.mxu0
    %v2198 = vmax.f32 %v2195, 0.0
    %s2199 = scalar_lea.vmem [#allocation5], 1080
    %v2200 = vld [vmem:[%s2199] sm:$0xff]
    %v2201 = vld [vmem:[%s2199 + $0x8] sm:$0xff]
    %v2202 = vld [vmem:[%s2199 + $0x10] sm:$0xff]
    %v2203 = vld [vmem:[%s2199 + $0x18] sm:$0xff]
    %v2204 = vld [vmem:[%s2199 + $0x20] sm:$0xff]
    %v2206 = vsel %vm44, %v2198, 0
    %2208 = vmatprep.subr.mxu0 0.0
    %2209 = vmatpush1.msra.mxu0 %v2200
    %2210 = vmatprep.subr.mxu0 0.0
    %2211 = vmatpush1.msra.mxu0 %v2201
    %2212 = vmatprep.subr.mxu0 0.0
    %2213 = vmatpush1.msra.mxu0 %v2202
    %2214 = vmatprep.subr.mxu0 0.0
    %2215 = vmatpush1.msra.mxu0 %v2203
    %2216 = vmatprep.subr.mxu0 0.0
    %2217 = vmatpush1.msra.mxu0 %v2204
    %2218 = vmatprep.subr.mxu0 0.0
    %2219 = vmatpush1.msra.mxu0 0.0
    %2220 = vmatprep.subr.mxu0 0.0
    %2221 = vmatpush1.msra.mxu0 0.0
    %2222 = vmatprep.subr.mxu0 0.0
    %2223 = vmatpush1.msra.mxu0 0.0
    %2224 = vmatprep.subr.mxu0 0.0
    %2225 = vmatpush1.msra.mxu0 0.0
    %2226 = vmatprep.subr.mxu0 0.0
    %2227 = vmatpush1.msra.mxu0 0.0
    %2228 = vmatprep.subr.mxu0 0.0
    %2229 = vmatpush1.msra.mxu0 0.0
    %2230 = vmatprep.subr.mxu0 0.0
    %2231 = vmatpush1.msra.mxu0 0.0
    %2232 = vmatprep.subr.mxu0 0.0
    %2233 = vmatpush1.msra.mxu0 0.0
    %2234 = vmatprep.subr.mxu0 0.0
    %2235 = vmatpush1.msra.mxu0 0.0
    %2236 = vmatprep.subr.mxu0 0.0
    %2237 = vmatpush1.msra.mxu0 0.0
    %2238 = vmatprep.subr.mxu0 0.0
    %2239 = vmatpush1.msra.mxu0 0.0
    %2240 = vmatprep.subr.mxu0 0.0
    %2241 = vmatpush1.msra.mxu0 0.0
    %2242 = vmatprep.subr.mxu0 0.0
    %2243 = vmatpush1.msra.mxu0 0.0
    %2244 = vmatprep.subr.mxu0 0.0
    %2245 = vmatpush1.msra.mxu0 0.0
    %2246 = vmatprep.subr.mxu0 0.0
    %2247 = vmatpush1.msra.mxu0 0.0
    %2248 = vmatprep.subr.mxu0 0.0
    %2249 = vmatpush1.msra.mxu0 0.0
    %2250 = vmatprep.subr.mxu0 0.0
    %2251 = vmatpush1.msra.mxu0 0.0
    %2252 = vmatprep.subr.mxu0 0.0
    %2253 = vmatpush1.msra.mxu0 0.0
    %2254 = vmatprep.subr.mxu0 0.0
    %2255 = vmatpush1.msra.mxu0 0.0
    %2256 = vmatprep.subr.mxu0 0.0
    %2257 = vmatpush1.msra.mxu0 0.0
    %2258 = vmatprep.subr.mxu0 0.0
    %2259 = vmatpush1.msra.mxu0 0.0
    %2260 = vmatprep.subr.mxu0 0.0
    %2261 = vmatpush1.msra.mxu0 0.0
    %2262 = vmatprep.subr.mxu0 0.0
    %2263 = vmatpush1.msra.mxu0 0.0
    %2264 = vmatprep.subr.mxu0 0.0
    %2265 = vmatpush1.msra.mxu0 0.0
    %2266 = vmatprep.subr.mxu0 0.0
    %2267 = vmatpush1.msra.mxu0 0.0
    %2268 = vmatprep.subr.mxu0 0.0
    %2269 = vmatpush1.msra.mxu0 0.0
    %2270 = vmatprep.subr.mxu0 0.0
    %2271 = vmatpush1.msra.mxu0 0.0
    %2272 = vmatprep.mubr.f32.mxu0 0.0
    %2273 = vmatmul.mubr.f32.gmra.mrb[0].mxu0 %v2206
    %v2274 = vpop.f32.mrb[0].mxu0
    %v2275 = vadd.f32 0.0, %v2274
    %v2276 = vpop.f32.mrb[0].mxu0
    %2277 = vdwg.mxu0
    %v2278 = vadd.f32 %v1958, %v2275
    %s2279 = scalar_lea.vmem [#allocation5], 1120
    %v2280 = vld [vmem:[%s2279] sm:$0xff]
    %v2281 = vld [vmem:[%s2279 + $0x8] sm:$0xff]
    %v2282 = vld [vmem:[%s2279 + $0x10] sm:$0xff]
    %v2283 = vld [vmem:[%s2279 + $0x18] sm:$0xff]
    %v2284 = vld [vmem:[%s2279 + $0x20] sm:$0xff]
    %v2286 = vsel %vm44, %v2278, 0
    %2288 = vmatprep.subr.mxu0 0.0
    %2289 = vmatpush1.msra.mxu0 %v2280
    %2290 = vmatprep.subr.mxu0 0.0
    %2291 = vmatpush1.msra.mxu0 %v2281
    %2292 = vmatprep.subr.mxu0 0.0
    %2293 = vmatpush1.msra.mxu0 %v2282
    %2294 = vmatprep.subr.mxu0 0.0
    %2295 = vmatpush1.msra.mxu0 %v2283
    %2296 = vmatprep.subr.mxu0 0.0
    %2297 = vmatpush1.msra.mxu0 %v2284
    %2298 = vmatprep.subr.mxu0 0.0
    %2299 = vmatpush1.msra.mxu0 0.0
    %2300 = vmatprep.subr.mxu0 0.0
    %2301 = vmatpush1.msra.mxu0 0.0
    %2302 = vmatprep.subr.mxu0 0.0
    %2303 = vmatpush1.msra.mxu0 0.0
    %2304 = vmatprep.subr.mxu0 0.0
    %2305 = vmatpush1.msra.mxu0 0.0
    %2306 = vmatprep.subr.mxu0 0.0
    %2307 = vmatpush1.msra.mxu0 0.0
    %2308 = vmatprep.subr.mxu0 0.0
    %2309 = vmatpush1.msra.mxu0 0.0
    %2310 = vmatprep.subr.mxu0 0.0
    %2311 = vmatpush1.msra.mxu0 0.0
    %2312 = vmatprep.subr.mxu0 0.0
    %2313 = vmatpush1.msra.mxu0 0.0
    %2314 = vmatprep.subr.mxu0 0.0
    %2315 = vmatpush1.msra.mxu0 0.0
    %2316 = vmatprep.subr.mxu0 0.0
    %2317 = vmatpush1.msra.mxu0 0.0
    %2318 = vmatprep.subr.mxu0 0.0
    %2319 = vmatpush1.msra.mxu0 0.0
    %2320 = vmatprep.subr.mxu0 0.0
    %2321 = vmatpush1.msra.mxu0 0.0
    %2322 = vmatprep.subr.mxu0 0.0
    %2323 = vmatpush1.msra.mxu0 0.0
    %2324 = vmatprep.subr.mxu0 0.0
    %2325 = vmatpush1.msra.mxu0 0.0
    %2326 = vmatprep.subr.mxu0 0.0
    %2327 = vmatpush1.msra.mxu0 0.0
    %2328 = vmatprep.subr.mxu0 0.0
    %2329 = vmatpush1.msra.mxu0 0.0
    %2330 = vmatprep.subr.mxu0 0.0
    %2331 = vmatpush1.msra.mxu0 0.0
    %2332 = vmatprep.subr.mxu0 0.0
    %2333 = vmatpush1.msra.mxu0 0.0
    %2334 = vmatprep.subr.mxu0 0.0
    %2335 = vmatpush1.msra.mxu0 0.0
    %2336 = vmatprep.subr.mxu0 0.0
    %2337 = vmatpush1.msra.mxu0 0.0
    %2338 = vmatprep.subr.mxu0 0.0
    %2339 = vmatpush1.msra.mxu0 0.0
    %2340 = vmatprep.subr.mxu0 0.0
    %2341 = vmatpush1.msra.mxu0 0.0
    %2342 = vmatprep.subr.mxu0 0.0
    %2343 = vmatpush1.msra.mxu0 0.0
    %2344 = vmatprep.subr.mxu0 0.0
    %2345 = vmatpush1.msra.mxu0 0.0
    %2346 = vmatprep.subr.mxu0 0.0
    %2347 = vmatpush1.msra.mxu0 0.0
    %2348 = vmatprep.subr.mxu0 0.0
    %2349 = vmatpush1.msra.mxu0 0.0
    %2350 = vmatprep.subr.mxu0 0.0
    %2351 = vmatpush1.msra.mxu0 0.0
    %2352 = vmatprep.mubr.f32.mxu0 0.0
    %2353 = vmatmul.mubr.f32.gmra.mrb[0].mxu0 %v2286
    %v2354 = vpop.f32.mrb[0].mxu0
    %v2355 = vadd.f32 0.0, %v2354
    %v2356 = vpop.f32.mrb[0].mxu0
    %2357 = vdwg.mxu0
    %v2358 = vmax.f32 %v2355, 0.0
    %s2359 = scalar_lea.vmem [#allocation5], 1160
    %v2360 = vld [vmem:[%s2359] sm:$0xff]
    %v2361 = vld [vmem:[%s2359 + $0x8] sm:$0xff]
    %v2362 = vld [vmem:[%s2359 + $0x10] sm:$0xff]
    %v2363 = vld [vmem:[%s2359 + $0x18] sm:$0xff]
    %v2364 = vld [vmem:[%s2359 + $0x20] sm:$0xff]
    %v2366 = vsel %vm44, %v2358, 0
    %2368 = vmatprep.subr.mxu0 0.0
    %2369 = vmatpush1.msra.mxu0 %v2360
    %2370 = vmatprep.subr.mxu0 0.0
    %2371 = vmatpush1.msra.mxu0 %v2361
    %2372 = vmatprep.subr.mxu0 0.0
    %2373 = vmatpush1.msra.mxu0 %v2362
    %2374 = vmatprep.subr.mxu0 0.0
    %2375 = vmatpush1.msra.mxu0 %v2363
    %2376 = vmatprep.subr.mxu0 0.0
    %2377 = vmatpush1.msra.mxu0 %v2364
    %2378 = vmatprep.subr.mxu0 0.0
    %2379 = vmatpush1.msra.mxu0 0.0
    %2380 = vmatprep.subr.mxu0 0.0
    %2381 = vmatpush1.msra.mxu0 0.0
    %2382 = vmatprep.subr.mxu0 0.0
    %2383 = vmatpush1.msra.mxu0 0.0
    %2384 = vmatprep.subr.mxu0 0.0
    %2385 = vmatpush1.msra.mxu0 0.0
    %2386 = vmatprep.subr.mxu0 0.0
    %2387 = vmatpush1.msra.mxu0 0.0
    %2388 = vmatprep.subr.mxu0 0.0
    %2389 = vmatpush1.msra.mxu0 0.0
    %2390 = vmatprep.subr.mxu0 0.0
    %2391 = vmatpush1.msra.mxu0 0.0
    %2392 = vmatprep.subr.mxu0 0.0
    %2393 = vmatpush1.msra.mxu0 0.0
    %2394 = vmatprep.subr.mxu0 0.0
    %2395 = vmatpush1.msra.mxu0 0.0
    %2396 = vmatprep.subr.mxu0 0.0
    %2397 = vmatpush1.msra.mxu0 0.0
    %2398 = vmatprep.subr.mxu0 0.0
    %2399 = vmatpush1.msra.mxu0 0.0
    %2400 = vmatprep.subr.mxu0 0.0
    %2401 = vmatpush1.msra.mxu0 0.0
    %2402 = vmatprep.subr.mxu0 0.0
    %2403 = vmatpush1.msra.mxu0 0.0
    %2404 = vmatprep.subr.mxu0 0.0
    %2405 = vmatpush1.msra.mxu0 0.0
    %2406 = vmatprep.subr.mxu0 0.0
    %2407 = vmatpush1.msra.mxu0 0.0
    %2408 = vmatprep.subr.mxu0 0.0
    %2409 = vmatpush1.msra.mxu0 0.0
    %2410 = vmatprep.subr.mxu0 0.0
    %2411 = vmatpush1.msra.mxu0 0.0
    %2412 = vmatprep.subr.mxu0 0.0
    %2413 = vmatpush1.msra.mxu0 0.0
    %2414 = vmatprep.subr.mxu0 0.0
    %2415 = vmatpush1.msra.mxu0 0.0
    %2416 = vmatprep.subr.mxu0 0.0
    %2417 = vmatpush1.msra.mxu0 0.0
    %2418 = vmatprep.subr.mxu0 0.0
    %2419 = vmatpush1.msra.mxu0 0.0
    %2420 = vmatprep.subr.mxu0 0.0
    %2421 = vmatpush1.msra.mxu0 0.0
    %2422 = vmatprep.subr.mxu0 0.0
    %2423 = vmatpush1.msra.mxu0 0.0
    %2424 = vmatprep.subr.mxu0 0.0
    %2425 = vmatpush1.msra.mxu0 0.0
    %2426 = vmatprep.subr.mxu0 0.0
    %2427 = vmatpush1.msra.mxu0 0.0
    %2428 = vmatprep.subr.mxu0 0.0
    %2429 = vmatpush1.msra.mxu0 0.0
    %2430 = vmatprep.subr.mxu0 0.0
    %2431 = vmatpush1.msra.mxu0 0.0
    %2432 = vmatprep.mubr.f32.mxu0 0.0
    %2433 = vmatmul.mubr.f32.gmra.mrb[0].mxu0 %v2366
    %v2434 = vpop.f32.mrb[0].mxu0
    %v2435 = vadd.f32 0.0, %v2434
    %v2436 = vpop.f32.mrb[0].mxu0
    %2437 = vdwg.mxu0
    %v2438 = vmax.f32 %v2435, 0.0
    %s2439 = scalar_lea.vmem [#allocation5], 1200
    %v2440 = vld [vmem:[%s2439] sm:$0xff]
    %v2441 = vld [vmem:[%s2439 + $0x8] sm:$0xff]
    %v2442 = vld [vmem:[%s2439 + $0x10] sm:$0xff]
    %v2443 = vld [vmem:[%s2439 + $0x18] sm:$0xff]
    %v2444 = vld [vmem:[%s2439 + $0x20] sm:$0xff]
    %v2446 = vsel %vm44, %v2438, 0
    %2448 = vmatprep.subr.mxu0 0.0
    %2449 = vmatpush1.msra.mxu0 %v2440
    %2450 = vmatprep.subr.mxu0 0.0
    %2451 = vmatpush1.msra.mxu0 %v2441
    %2452 = vmatprep.subr.mxu0 0.0
    %2453 = vmatpush1.msra.mxu0 %v2442
    %2454 = vmatprep.subr.mxu0 0.0
    %2455 = vmatpush1.msra.mxu0 %v2443
    %2456 = vmatprep.subr.mxu0 0.0
    %2457 = vmatpush1.msra.mxu0 %v2444
    %2458 = vmatprep.subr.mxu0 0.0
    %2459 = vmatpush1.msra.mxu0 0.0
    %2460 = vmatprep.subr.mxu0 0.0
    %2461 = vmatpush1.msra.mxu0 0.0
    %2462 = vmatprep.subr.mxu0 0.0
    %2463 = vmatpush1.msra.mxu0 0.0
    %2464 = vmatprep.subr.mxu0 0.0
    %2465 = vmatpush1.msra.mxu0 0.0
    %2466 = vmatprep.subr.mxu0 0.0
    %2467 = vmatpush1.msra.mxu0 0.0
    %2468 = vmatprep.subr.mxu0 0.0
    %2469 = vmatpush1.msra.mxu0 0.0
    %2470 = vmatprep.subr.mxu0 0.0
    %2471 = vmatpush1.msra.mxu0 0.0
    %2472 = vmatprep.subr.mxu0 0.0
    %2473 = vmatpush1.msra.mxu0 0.0
    %2474 = vmatprep.subr.mxu0 0.0
    %2475 = vmatpush1.msra.mxu0 0.0
    %2476 = vmatprep.subr.mxu0 0.0
    %2477 = vmatpush1.msra.mxu0 0.0
    %2478 = vmatprep.subr.mxu0 0.0
    %2479 = vmatpush1.msra.mxu0 0.0
    %2480 = vmatprep.subr.mxu0 0.0
    %2481 = vmatpush1.msra.mxu0 0.0
    %2482 = vmatprep.subr.mxu0 0.0
    %2483 = vmatpush1.msra.mxu0 0.0
    %2484 = vmatprep.subr.mxu0 0.0
    %2485 = vmatpush1.msra.mxu0 0.0
    %2486 = vmatprep.subr.mxu0 0.0
    %2487 = vmatpush1.msra.mxu0 0.0
    %2488 = vmatprep.subr.mxu0 0.0
    %2489 = vmatpush1.msra.mxu0 0.0
    %2490 = vmatprep.subr.mxu0 0.0
    %2491 = vmatpush1.msra.mxu0 0.0
    %2492 = vmatprep.subr.mxu0 0.0
    %2493 = vmatpush1.msra.mxu0 0.0
    %2494 = vmatprep.subr.mxu0 0.0
    %2495 = vmatpush1.msra.mxu0 0.0
    %2496 = vmatprep.subr.mxu0 0.0
    %2497 = vmatpush1.msra.mxu0 0.0
    %2498 = vmatprep.subr.mxu0 0.0
    %2499 = vmatpush1.msra.mxu0 0.0
    %2500 = vmatprep.subr.mxu0 0.0
    %2501 = vmatpush1.msra.mxu0 0.0
    %2502 = vmatprep.subr.mxu0 0.0
    %2503 = vmatpush1.msra.mxu0 0.0
    %2504 = vmatprep.subr.mxu0 0.0
    %2505 = vmatpush1.msra.mxu0 0.0
    %2506 = vmatprep.subr.mxu0 0.0
    %2507 = vmatpush1.msra.mxu0 0.0
    %2508 = vmatprep.subr.mxu0 0.0
    %2509 = vmatpush1.msra.mxu0 0.0
    %2510 = vmatprep.subr.mxu0 0.0
    %2511 = vmatpush1.msra.mxu0 0.0
    %2512 = vmatprep.mubr.f32.mxu0 0.0
    %2513 = vmatmul.mubr.f32.gmra.mrb[0].mxu0 %v2446
    %v2514 = vpop.f32.mrb[0].mxu0
    %v2515 = vadd.f32 0.0, %v2514
    %v2516 = vpop.f32.mrb[0].mxu0
    %2517 = vdwg.mxu0
    %v2518 = vmax.f32 %v2515, 0.0
    %s2519 = scalar_lea.vmem [#allocation5], 1240
    %v2520 = vld [vmem:[%s2519] sm:$0xff]
    %v2521 = vld [vmem:[%s2519 + $0x8] sm:$0xff]
    %v2522 = vld [vmem:[%s2519 + $0x10] sm:$0xff]
    %v2523 = vld [vmem:[%s2519 + $0x18] sm:$0xff]
    %v2524 = vld [vmem:[%s2519 + $0x20] sm:$0xff]
    %v2526 = vsel %vm44, %v2518, 0
    %2528 = vmatprep.subr.mxu0 0.0
    %2529 = vmatpush1.msra.mxu0 %v2520
    %2530 = vmatprep.subr.mxu0 0.0
    %2531 = vmatpush1.msra.mxu0 %v2521
    %2532 = vmatprep.subr.mxu0 0.0
    %2533 = vmatpush1.msra.mxu0 %v2522
    %2534 = vmatprep.subr.mxu0 0.0
    %2535 = vmatpush1.msra.mxu0 %v2523
    %2536 = vmatprep.subr.mxu0 0.0
    %2537 = vmatpush1.msra.mxu0 %v2524
    %2538 = vmatprep.subr.mxu0 0.0
    %2539 = vmatpush1.msra.mxu0 0.0
    %2540 = vmatprep.subr.mxu0 0.0
    %2541 = vmatpush1.msra.mxu0 0.0
    %2542 = vmatprep.subr.mxu0 0.0
    %2543 = vmatpush1.msra.mxu0 0.0
    %2544 = vmatprep.subr.mxu0 0.0
    %2545 = vmatpush1.msra.mxu0 0.0
    %2546 = vmatprep.subr.mxu0 0.0
    %2547 = vmatpush1.msra.mxu0 0.0
    %2548 = vmatprep.subr.mxu0 0.0
    %2549 = vmatpush1.msra.mxu0 0.0
    %2550 = vmatprep.subr.mxu0 0.0
    %2551 = vmatpush1.msra.mxu0 0.0
    %2552 = vmatprep.subr.mxu0 0.0
    %2553 = vmatpush1.msra.mxu0 0.0
    %2554 = vmatprep.subr.mxu0 0.0
    %2555 = vmatpush1.msra.mxu0 0.0
    %2556 = vmatprep.subr.mxu0 0.0
    %2557 = vmatpush1.msra.mxu0 0.0
    %2558 = vmatprep.subr.mxu0 0.0
    %2559 = vmatpush1.msra.mxu0 0.0
    %2560 = vmatprep.subr.mxu0 0.0
    %2561 = vmatpush1.msra.mxu0 0.0
    %2562 = vmatprep.subr.mxu0 0.0
    %2563 = vmatpush1.msra.mxu0 0.0
    %2564 = vmatprep.subr.mxu0 0.0
    %2565 = vmatpush1.msra.mxu0 0.0
    %2566 = vmatprep.subr.mxu0 0.0
    %2567 = vmatpush1.msra.mxu0 0.0
    %2568 = vmatprep.subr.mxu0 0.0
    %2569 = vmatpush1.msra.mxu0 0.0
    %2570 = vmatprep.subr.mxu0 0.0
    %2571 = vmatpush1.msra.mxu0 0.0
    %2572 = vmatprep.subr.mxu0 0.0
    %2573 = vmatpush1.msra.mxu0 0.0
    %2574 = vmatprep.subr.mxu0 0.0
    %2575 = vmatpush1.msra.mxu0 0.0
    %2576 = vmatprep.subr.mxu0 0.0
    %2577 = vmatpush1.msra.mxu0 0.0
    %2578 = vmatprep.subr.mxu0 0.0
    %2579 = vmatpush1.msra.mxu0 0.0
    %2580 = vmatprep.subr.mxu0 0.0
    %2581 = vmatpush1.msra.mxu0 0.0
    %2582 = vmatprep.subr.mxu0 0.0
    %2583 = vmatpush1.msra.mxu0 0.0
    %2584 = vmatprep.subr.mxu0 0.0
    %2585 = vmatpush1.msra.mxu0 0.0
    %2586 = vmatprep.subr.mxu0 0.0
    %2587 = vmatpush1.msra.mxu0 0.0
    %2588 = vmatprep.subr.mxu0 0.0
    %2589 = vmatpush1.msra.mxu0 0.0
    %2590 = vmatprep.subr.mxu0 0.0
    %2591 = vmatpush1.msra.mxu0 0.0
    %2592 = vmatprep.mubr.f32.mxu0 0.0
    %2593 = vmatmul.mubr.f32.gmra.mrb[0].mxu0 %v2526
    %v2594 = vpop.f32.mrb[0].mxu0
    %v2595 = vadd.f32 0.0, %v2594
    %v2596 = vpop.f32.mrb[0].mxu0
    %2597 = vdwg.mxu0
    %v2598 = vadd.f32 %v2278, %v2595
    %s2599 = scalar_lea.vmem [#allocation5], 1280
    %v2600 = vld [vmem:[%s2599] sm:$0xff]
    %v2601 = vld [vmem:[%s2599 + $0x8] sm:$0xff]
    %v2602 = vld [vmem:[%s2599 + $0x10] sm:$0xff]
    %v2603 = vld [vmem:[%s2599 + $0x18] sm:$0xff]
    %v2604 = vld [vmem:[%s2599 + $0x20] sm:$0xff]
    %v2606 = vsel %vm44, %v2598, 0
    %2608 = vmatprep.subr.mxu0 0.0
    %2609 = vmatpush1.msra.mxu0 %v2600
    %2610 = vmatprep.subr.mxu0 0.0
    %2611 = vmatpush1.msra.mxu0 %v2601
    %2612 = vmatprep.subr.mxu0 0.0
    %2613 = vmatpush1.msra.mxu0 %v2602
    %2614 = vmatprep.subr.mxu0 0.0
    %2615 = vmatpush1.msra.mxu0 %v2603
    %2616 = vmatprep.subr.mxu0 0.0
    %2617 = vmatpush1.msra.mxu0 %v2604
    %2618 = vmatprep.subr.mxu0 0.0
    %2619 = vmatpush1.msra.mxu0 0.0
    %2620 = vmatprep.subr.mxu0 0.0
    %2621 = vmatpush1.msra.mxu0 0.0
    %2622 = vmatprep.subr.mxu0 0.0
    %2623 = vmatpush1.msra.mxu0 0.0
    %2624 = vmatprep.subr.mxu0 0.0
    %2625 = vmatpush1.msra.mxu0 0.0
    %2626 = vmatprep.subr.mxu0 0.0
    %2627 = vmatpush1.msra.mxu0 0.0
    %2628 = vmatprep.subr.mxu0 0.0
    %2629 = vmatpush1.msra.mxu0 0.0
    %2630 = vmatprep.subr.mxu0 0.0
    %2631 = vmatpush1.msra.mxu0 0.0
    %2632 = vmatprep.subr.mxu0 0.0
    %2633 = vmatpush1.msra.mxu0 0.0
    %2634 = vmatprep.subr.mxu0 0.0
    %2635 = vmatpush1.msra.mxu0 0.0
    %2636 = vmatprep.subr.mxu0 0.0
    %2637 = vmatpush1.msra.mxu0 0.0
    %2638 = vmatprep.subr.mxu0 0.0
    %2639 = vmatpush1.msra.mxu0 0.0
    %2640 = vmatprep.subr.mxu0 0.0
    %2641 = vmatpush1.msra.mxu0 0.0
    %2642 = vmatprep.subr.mxu0 0.0
    %2643 = vmatpush1.msra.mxu0 0.0
    %2644 = vmatprep.subr.mxu0 0.0
    %2645 = vmatpush1.msra.mxu0 0.0
    %2646 = vmatprep.subr.mxu0 0.0
    %2647 = vmatpush1.msra.mxu0 0.0
    %2648 = vmatprep.subr.mxu0 0.0
    %2649 = vmatpush1.msra.mxu0 0.0
    %2650 = vmatprep.subr.mxu0 0.0
    %2651 = vmatpush1.msra.mxu0 0.0
    %2652 = vmatprep.subr.mxu0 0.0
    %2653 = vmatpush1.msra.mxu0 0.0
    %2654 = vmatprep.subr.mxu0 0.0
    %2655 = vmatpush1.msra.mxu0 0.0
    %2656 = vmatprep.subr.mxu0 0.0
    %2657 = vmatpush1.msra.mxu0 0.0
    %2658 = vmatprep.subr.mxu0 0.0
    %2659 = vmatpush1.msra.mxu0 0.0
    %2660 = vmatprep.subr.mxu0 0.0
    %2661 = vmatpush1.msra.mxu0 0.0
    %2662 = vmatprep.subr.mxu0 0.0
    %2663 = vmatpush1.msra.mxu0 0.0
    %2664 = vmatprep.subr.mxu0 0.0
    %2665 = vmatpush1.msra.mxu0 0.0
    %2666 = vmatprep.subr.mxu0 0.0
    %2667 = vmatpush1.msra.mxu0 0.0
    %2668 = vmatprep.subr.mxu0 0.0
    %2669 = vmatpush1.msra.mxu0 0.0
    %2670 = vmatprep.subr.mxu0 0.0
    %2671 = vmatpush1.msra.mxu0 0.0
    %2672 = vmatprep.mubr.f32.mxu0 0.0
    %2673 = vmatmul.mubr.f32.gmra.mrb[0].mxu0 %v2606
    %v2674 = vpop.f32.mrb[0].mxu0
    %v2675 = vadd.f32 0.0, %v2674
    %v2676 = vpop.f32.mrb[0].mxu0
    %2677 = vdwg.mxu0
    %v2678 = vmax.f32 %v2675, 0.0
    %s2679 = scalar_lea.vmem [#allocation5], 1320
    %v2680 = vld [vmem:[%s2679] sm:$0xff]
    %v2681 = vld [vmem:[%s2679 + $0x8] sm:$0xff]
    %v2682 = vld [vmem:[%s2679 + $0x10] sm:$0xff]
    %v2683 = vld [vmem:[%s2679 + $0x18] sm:$0xff]
    %v2684 = vld [vmem:[%s2679 + $0x20] sm:$0xff]
    %v2686 = vsel %vm44, %v2678, 0
    %2688 = vmatprep.subr.mxu0 0.0
    %2689 = vmatpush1.msra.mxu0 %v2680
    %2690 = vmatprep.subr.mxu0 0.0
    %2691 = vmatpush1.msra.mxu0 %v2681
    %2692 = vmatprep.subr.mxu0 0.0
    %2693 = vmatpush1.msra.mxu0 %v2682
    %2694 = vmatprep.subr.mxu0 0.0
    %2695 = vmatpush1.msra.mxu0 %v2683
    %2696 = vmatprep.subr.mxu0 0.0
    %2697 = vmatpush1.msra.mxu0 %v2684
    %2698 = vmatprep.subr.mxu0 0.0
    %2699 = vmatpush1.msra.mxu0 0.0
    %2700 = vmatprep.subr.mxu0 0.0
    %2701 = vmatpush1.msra.mxu0 0.0
    %2702 = vmatprep.subr.mxu0 0.0
    %2703 = vmatpush1.msra.mxu0 0.0
    %2704 = vmatprep.subr.mxu0 0.0
    %2705 = vmatpush1.msra.mxu0 0.0
    %2706 = vmatprep.subr.mxu0 0.0
    %2707 = vmatpush1.msra.mxu0 0.0
    %2708 = vmatprep.subr.mxu0 0.0
    %2709 = vmatpush1.msra.mxu0 0.0
    %2710 = vmatprep.subr.mxu0 0.0
    %2711 = vmatpush1.msra.mxu0 0.0
    %2712 = vmatprep.subr.mxu0 0.0
    %2713 = vmatpush1.msra.mxu0 0.0
    %2714 = vmatprep.subr.mxu0 0.0
    %2715 = vmatpush1.msra.mxu0 0.0
    %2716 = vmatprep.subr.mxu0 0.0
    %2717 = vmatpush1.msra.mxu0 0.0
    %2718 = vmatprep.subr.mxu0 0.0
    %2719 = vmatpush1.msra.mxu0 0.0
    %2720 = vmatprep.subr.mxu0 0.0
    %2721 = vmatpush1.msra.mxu0 0.0
    %2722 = vmatprep.subr.mxu0 0.0
    %2723 = vmatpush1.msra.mxu0 0.0
    %2724 = vmatprep.subr.mxu0 0.0
    %2725 = vmatpush1.msra.mxu0 0.0
    %2726 = vmatprep.subr.mxu0 0.0
    %2727 = vmatpush1.msra.mxu0 0.0
    %2728 = vmatprep.subr.mxu0 0.0
    %2729 = vmatpush1.msra.mxu0 0.0
    %2730 = vmatprep.subr.mxu0 0.0
    %2731 = vmatpush1.msra.mxu0 0.0
    %2732 = vmatprep.subr.mxu0 0.0
    %2733 = vmatpush1.msra.mxu0 0.0
    %2734 = vmatprep.subr.mxu0 0.0
    %2735 = vmatpush1.msra.mxu0 0.0
    %2736 = vmatprep.subr.mxu0 0.0
    %2737 = vmatpush1.msra.mxu0 0.0
    %2738 = vmatprep.subr.mxu0 0.0
    %2739 = vmatpush1.msra.mxu0 0.0
    %2740 = vmatprep.subr.mxu0 0.0
    %2741 = vmatpush1.msra.mxu0 0.0
    %2742 = vmatprep.subr.mxu0 0.0
    %2743 = vmatpush1.msra.mxu0 0.0
    %2744 = vmatprep.subr.mxu0 0.0
    %2745 = vmatpush1.msra.mxu0 0.0
    %2746 = vmatprep.subr.mxu0 0.0
    %2747 = vmatpush1.msra.mxu0 0.0
    %2748 = vmatprep.subr.mxu0 0.0
    %2749 = vmatpush1.msra.mxu0 0.0
    %2750 = vmatprep.subr.mxu0 0.0
    %2751 = vmatpush1.msra.mxu0 0.0
    %2752 = vmatprep.mubr.f32.mxu0 0.0
    %2753 = vmatmul.mubr.f32.gmra.mrb[0].mxu0 %v2686
    %v2754 = vpop.f32.mrb[0].mxu0
    %v2755 = vadd.f32 0.0, %v2754
    %v2756 = vpop.f32.mrb[0].mxu0
    %2757 = vdwg.mxu0
    %v2758 = vmax.f32 %v2755, 0.0
    %s2759 = scalar_lea.vmem [#allocation5], 1360
    %v2760 = vld [vmem:[%s2759] sm:$0xff]
    %v2761 = vld [vmem:[%s2759 + $0x8] sm:$0xff]
    %v2762 = vld [vmem:[%s2759 + $0x10] sm:$0xff]
    %v2763 = vld [vmem:[%s2759 + $0x18] sm:$0xff]
    %v2764 = vld [vmem:[%s2759 + $0x20] sm:$0xff]
    %v2766 = vsel %vm44, %v2758, 0
    %2768 = vmatprep.subr.mxu0 0.0
    %2769 = vmatpush1.msra.mxu0 %v2760
    %2770 = vmatprep.subr.mxu0 0.0
    %2771 = vmatpush1.msra.mxu0 %v2761
    %2772 = vmatprep.subr.mxu0 0.0
    %2773 = vmatpush1.msra.mxu0 %v2762
    %2774 = vmatprep.subr.mxu0 0.0
    %2775 = vmatpush1.msra.mxu0 %v2763
    %2776 = vmatprep.subr.mxu0 0.0
    %2777 = vmatpush1.msra.mxu0 %v2764
    %2778 = vmatprep.subr.mxu0 0.0
    %2779 = vmatpush1.msra.mxu0 0.0
    %2780 = vmatprep.subr.mxu0 0.0
    %2781 = vmatpush1.msra.mxu0 0.0
    %2782 = vmatprep.subr.mxu0 0.0
    %2783 = vmatpush1.msra.mxu0 0.0
    %2784 = vmatprep.subr.mxu0 0.0
    %2785 = vmatpush1.msra.mxu0 0.0
    %2786 = vmatprep.subr.mxu0 0.0
    %2787 = vmatpush1.msra.mxu0 0.0
    %2788 = vmatprep.subr.mxu0 0.0
    %2789 = vmatpush1.msra.mxu0 0.0
    %2790 = vmatprep.subr.mxu0 0.0
    %2791 = vmatpush1.msra.mxu0 0.0
    %2792 = vmatprep.subr.mxu0 0.0
    %2793 = vmatpush1.msra.mxu0 0.0
    %2794 = vmatprep.subr.mxu0 0.0
    %2795 = vmatpush1.msra.mxu0 0.0
    %2796 = vmatprep.subr.mxu0 0.0
    %2797 = vmatpush1.msra.mxu0 0.0
    %2798 = vmatprep.subr.mxu0 0.0
    %2799 = vmatpush1.msra.mxu0 0.0
    %2800 = vmatprep.subr.mxu0 0.0
    %2801 = vmatpush1.msra.mxu0 0.0
    %2802 = vmatprep.subr.mxu0 0.0
    %2803 = vmatpush1.msra.mxu0 0.0
    %2804 = vmatprep.subr.mxu0 0.0
    %2805 = vmatpush1.msra.mxu0 0.0
    %2806 = vmatprep.subr.mxu0 0.0
    %2807 = vmatpush1.msra.mxu0 0.0
    %2808 = vmatprep.subr.mxu0 0.0
    %2809 = vmatpush1.msra.mxu0 0.0
    %2810 = vmatprep.subr.mxu0 0.0
    %2811 = vmatpush1.msra.mxu0 0.0
    %2812 = vmatprep.subr.mxu0 0.0
    %2813 = vmatpush1.msra.mxu0 0.0
    %2814 = vmatprep.subr.mxu0 0.0
    %2815 = vmatpush1.msra.mxu0 0.0
    %2816 = vmatprep.subr.mxu0 0.0
    %2817 = vmatpush1.msra.mxu0 0.0
    %2818 = vmatprep.subr.mxu0 0.0
    %2819 = vmatpush1.msra.mxu0 0.0
    %2820 = vmatprep.subr.mxu0 0.0
    %2821 = vmatpush1.msra.mxu0 0.0
    %2822 = vmatprep.subr.mxu0 0.0
    %2823 = vmatpush1.msra.mxu0 0.0
    %2824 = vmatprep.subr.mxu0 0.0
    %2825 = vmatpush1.msra.mxu0 0.0
    %2826 = vmatprep.subr.mxu0 0.0
    %2827 = vmatpush1.msra.mxu0 0.0
    %2828 = vmatprep.subr.mxu0 0.0
    %2829 = vmatpush1.msra.mxu0 0.0
    %2830 = vmatprep.subr.mxu0 0.0
    %2831 = vmatpush1.msra.mxu0 0.0
    %2832 = vmatprep.mubr.f32.mxu0 0.0
    %2833 = vmatmul.mubr.f32.gmra.mrb[0].mxu0 %v2766
    %v2834 = vpop.f32.mrb[0].mxu0
    %v2835 = vadd.f32 0.0, %v2834
    %v2836 = vpop.f32.mrb[0].mxu0
    %2837 = vdwg.mxu0
    %v2838 = vmax.f32 %v2835, 0.0
    %s2839 = scalar_lea.vmem [#allocation5], 1400
    %v2840 = vld [vmem:[%s2839] sm:$0xff]
    %v2841 = vld [vmem:[%s2839 + $0x8] sm:$0xff]
    %v2842 = vld [vmem:[%s2839 + $0x10] sm:$0xff]
    %v2843 = vld [vmem:[%s2839 + $0x18] sm:$0xff]
    %v2844 = vld [vmem:[%s2839 + $0x20] sm:$0xff]
    %v2846 = vsel %vm44, %v2838, 0
    %2848 = vmatprep.subr.mxu0 0.0
    %2849 = vmatpush1.msra.mxu0 %v2840
    %2850 = vmatprep.subr.mxu0 0.0
    %2851 = vmatpush1.msra.mxu0 %v2841
    %2852 = vmatprep.subr.mxu0 0.0
    %2853 = vmatpush1.msra.mxu0 %v2842
    %2854 = vmatprep.subr.mxu0 0.0
    %2855 = vmatpush1.msra.mxu0 %v2843
    %2856 = vmatprep.subr.mxu0 0.0
    %2857 = vmatpush1.msra.mxu0 %v2844
    %2858 = vmatprep.subr.mxu0 0.0
    %2859 = vmatpush1.msra.mxu0 0.0
    %2860 = vmatprep.subr.mxu0 0.0
    %2861 = vmatpush1.msra.mxu0 0.0
    %2862 = vmatprep.subr.mxu0 0.0
    %2863 = vmatpush1.msra.mxu0 0.0
    %2864 = vmatprep.subr.mxu0 0.0
    %2865 = vmatpush1.msra.mxu0 0.0
    %2866 = vmatprep.subr.mxu0 0.0
    %2867 = vmatpush1.msra.mxu0 0.0
    %2868 = vmatprep.subr.mxu0 0.0
    %2869 = vmatpush1.msra.mxu0 0.0
    %2870 = vmatprep.subr.mxu0 0.0
    %2871 = vmatpush1.msra.mxu0 0.0
    %2872 = vmatprep.subr.mxu0 0.0
    %2873 = vmatpush1.msra.mxu0 0.0
    %2874 = vmatprep.subr.mxu0 0.0
    %2875 = vmatpush1.msra.mxu0 0.0
    %2876 = vmatprep.subr.mxu0 0.0
    %2877 = vmatpush1.msra.mxu0 0.0
    %2878 = vmatprep.subr.mxu0 0.0
    %2879 = vmatpush1.msra.mxu0 0.0
    %2880 = vmatprep.subr.mxu0 0.0
    %2881 = vmatpush1.msra.mxu0 0.0
    %2882 = vmatprep.subr.mxu0 0.0
    %2883 = vmatpush1.msra.mxu0 0.0
    %2884 = vmatprep.subr.mxu0 0.0
    %2885 = vmatpush1.msra.mxu0 0.0
    %2886 = vmatprep.subr.mxu0 0.0
    %2887 = vmatpush1.msra.mxu0 0.0
    %2888 = vmatprep.subr.mxu0 0.0
    %2889 = vmatpush1.msra.mxu0 0.0
    %2890 = vmatprep.subr.mxu0 0.0
    %2891 = vmatpush1.msra.mxu0 0.0
    %2892 = vmatprep.subr.mxu0 0.0
    %2893 = vmatpush1.msra.mxu0 0.0
    %2894 = vmatprep.subr.mxu0 0.0
    %2895 = vmatpush1.msra.mxu0 0.0
    %2896 = vmatprep.subr.mxu0 0.0
    %2897 = vmatpush1.msra.mxu0 0.0
    %2898 = vmatprep.subr.mxu0 0.0
    %2899 = vmatpush1.msra.mxu0 0.0
    %2900 = vmatprep.subr.mxu0 0.0
    %2901 = vmatpush1.msra.mxu0 0.0
    %2902 = vmatprep.subr.mxu0 0.0
    %2903 = vmatpush1.msra.mxu0 0.0
    %2904 = vmatprep.subr.mxu0 0.0
    %2905 = vmatpush1.msra.mxu0 0.0
    %2906 = vmatprep.subr.mxu0 0.0
    %2907 = vmatpush1.msra.mxu0 0.0
    %2908 = vmatprep.subr.mxu0 0.0
    %2909 = vmatpush1.msra.mxu0 0.0
    %2910 = vmatprep.subr.mxu0 0.0
    %2911 = vmatpush1.msra.mxu0 0.0
    %2912 = vmatprep.mubr.f32.mxu0 0.0
    %2913 = vmatmul.mubr.f32.gmra.mrb[0].mxu0 %v2846
    %v2914 = vpop.f32.mrb[0].mxu0
    %v2915 = vadd.f32 0.0, %v2914
    %v2916 = vpop.f32.mrb[0].mxu0
    %2917 = vdwg.mxu0
    %v2918 = vadd.f32 %v2598, %v2915
    %2919 = vst.msk [vmem:[#allocation7] sm:$0xff] %vm44, %v2918
    // Predicated region
    $region18: #{tpu_custom_call.1} parent=1 // pred_check
      _
    $region19: #{tpu_custom_call.1} parent=1 // pred_check_branch
      %2921 = sbr.rel (0) target = $region21
    $region20: #{tpu_custom_call.1} parent=1 // pred_region
      %s2923 = ssub.s32 128, 128
      %2924 = vsyncadd [#allocation4], %s2923
      %s2926 = sshll.u32 [#allocation7], 4
      %s2927 = int_to_ptr.vmem [resolvable:$true] %s2926
      %2929 = dma.vmem_to_hbm [thread:$0]  %s2927, 128, %s2, [#allocation4]
    $region21: #{tpu_custom_call.1} parent=1 // pred_fallthru
      _
    // Predicated region
    $region22: #{tpu_custom_call.1} parent=1 // pred_check
      _
    $region23: #{tpu_custom_call.1} parent=1 // pred_check_branch
      %2931 = sbr.rel (0) target = $region25
    $region24: #{tpu_custom_call.1} parent=1 // pred_region
      %2932 = dma.done [#allocation4], 128
    $region25: #{tpu_custom_call.1} parent=1 // pred_fallthru
      _
    %2933 = vsyncpa [#allocation3], 1
    %2934 = vsyncpa [#allocation6], 1
    %2935 = vsyncpa [#allocation4], 1

</llo_original>
